<compile_context>
chip_gen: v5e
topology: v5e:2x2
jax: 0.10.0
libtpu: 0.0.40
codegen_flags: <defaults>
</compile_context>

<pallas_src>
import jax
import jax.numpy as jnp
from jax.experimental import pallas as pl
from jax.experimental.pallas import tpu as pltpu


_NFC = 128          # lane-padded feature width (conv lanes and FC hidden)
_MAX_BLOCK_B = 128  # max samples per grid step


def _round_up(x, m):
    return ((x + m - 1) // m) * m


# ---------------------------------------------------------------------------
# Fused Pallas kernel
# ---------------------------------------------------------------------------

def _fused_kernel(xe_ref, xo_ref, b1m_ref, b1b_ref, b2m_ref, b2b_ref,
                  w1_ref, wmid_ref, w9_ref, bfc_ref, o_ref):
    f32 = jnp.float32
    bt = xe_ref.shape[0]
    xpar = (xe_ref[...], xo_ref[...])                    # 2 x (bt, 18, 28)

    # ---- conv1 + bias + relu + 2x2 max-pool --------------------------------
    # Banded matmuls: for each pooled-row phase dh, sum over kernel row kh of
    # (row slab) x (banded weight).  The two W-pool phases dw are packed into
    # the 256-lane RHS (lanes [0:128) = dw0, [128:256) = dw1); the split at
    # 128 is tile-aligned so the max is a cheap lane slice + VPU max.
    # Output lanes pack (co, pw) = co*12 + pw; lanes 120..127 stay zero.
    p1 = None
    for dh in range(2):
        acc = None
        for kh in range(5):
            t = dh + kh
            lhs = xpar[t % 2][:, t // 2:t // 2 + 16, :].reshape(bt * 16, 28)
            part = jnp.dot(lhs, b1m_ref[kh], preferred_element_type=f32)
            acc = part if acc is None else acc + part
        z = jnp.maximum(acc + b1b_ref[...], 0.0)          # (bt*16, 256)
        ph = jnp.maximum(z[:, :_NFC], z[:, _NFC:])        # W-pool
        p1 = ph if p1 is None else jnp.maximum(p1, ph)    # H-pool
    p1 = p1.reshape(bt, 16, _NFC)                         # rows 12..15 = pad

    # ---- conv2 + bias + relu + 2x2 max-pool --------------------------------
    # Contraction dim is the lane-padded 128 (padded rows of b2m are zero).
    # Output lanes pack (co, v2) = co*4 + v2 per dw half; lanes 80..127 zero.
    acc2 = None
    for kh in range(5):
        lhs2 = p1[:, kh:kh + 8, :].reshape(bt * 8, _NFC)
        part = jnp.dot(lhs2, b2m_ref[kh], preferred_element_type=f32)
        acc2 = part if acc2 is None else acc2 + part
    z2 = jnp.maximum(acc2 + b2b_ref[...], 0.0)            # (bt*8, 256)
    mw2 = jnp.maximum(z2[:, :_NFC], z2[:, _NFC:]).reshape(bt, 8, _NFC)

    # H-pool + flatten: v[:, u*128 + co*4 + w] = pooled feature (h=u, co, w).
    rows = [jnp.maximum(mw2[:, 2 * u, :], mw2[:, 2 * u + 1, :]) for u in range(4)]
    v = jnp.concatenate(rows, axis=1)                     # (bt, 512)

    # ---- 9-layer FC stack (tanh * 1.6) + masked log_softmax ---------------
    h = jnp.tanh(jnp.dot(v, w1_ref[...], preferred_element_type=f32)
                 + bfc_ref[0:1, :]) * 1.6
    for i in range(7):
        h = jnp.tanh(jnp.dot(h, wmid_ref[i], preferred_element_type=f32)
                     + bfc_ref[i + 1:i + 2, :]) * 1.6
    logits = jnp.dot(h, w9_ref[...], preferred_element_type=f32) + bfc_ref[8:9, :]

    lane = jax.lax.broadcasted_iota(jnp.int32, logits.shape, 1)
    logits = jnp.where(lane < 10, logits, -1e30)          # mask padded classes
    m = jnp.max(logits, axis=-1, keepdims=True)
    sh = logits - m
    lse = jnp.log(jnp.sum(jnp.exp(sh), axis=-1, keepdims=True))
    o_ref[...] = sh - lse


# ---------------------------------------------------------------------------
# XLA-side operand preparation (tiny, one-time per call)
# ---------------------------------------------------------------------------

def _prepare_operands(params):
    f32 = jnp.float32
    iw = jnp.arange(28)
    pw = jnp.arange(12)
    dw = jnp.arange(2)

    # conv1 banded weights:
    #   B1[kh, iw, dw*128 + co*12 + pw] = w1[co, kh, iw - 2*pw - dw] (valid taps)
    w1 = params["conv1_w"].astype(f32).reshape(10, 5, 5)              # (co,kh,kw)
    kwi = iw[None, :, None] - 2 * pw[None, None, :] - dw[:, None, None]  # (2,28,12)
    valid = (kwi >= 0) & (kwi <= 4)
    g = w1[:, :, jnp.clip(kwi, 0, 4)]                                 # (co,kh,2,28,12)
    g = jnp.where(valid[None, None], g, 0.0)
    b1 = jnp.transpose(g, (1, 3, 2, 0, 4)).reshape(5, 28, 2, 120)     # (kh,iw,dw,co*pw)
    b1m = jnp.pad(b1, ((0, 0), (0, 0), (0, 0), (0, 8))).reshape(5, 28, 2 * _NFC)
    b1b = jnp.pad(jnp.repeat(params["conv1_b"].astype(f32), 12), (0, 8))
    b1b = jnp.tile(b1b, 2).reshape(1, 2 * _NFC)

    # conv2 banded weights:
    #   B2[kh, cin*12 + pw, dw*128 + co*4 + v2] = w2[co, cin, kh, pw - 2*v2 - dw]
    w2 = params["conv2_w"].astype(f32)                                # (co,cin,kh,kw)
    v2 = jnp.arange(4)
    kwi2 = pw[None, :, None] - 2 * v2[None, None, :] - dw[:, None, None]  # (2,12,4)
    valid2 = (kwi2 >= 0) & (kwi2 <= 4)
    g2 = w2[:, :, :, jnp.clip(kwi2, 0, 4)]                            # (co,cin,kh,2,12,4)
    g2 = jnp.where(valid2[None, None, None], g2, 0.0)
    b2 = jnp.transpose(g2, (2, 1, 4, 3, 0, 5)).reshape(5, 120, 2, 80)
    b2m = jnp.pad(b2, ((0, 0), (0, 8), (0, 0), (0, 48))).reshape(5, _NFC, 2 * _NFC)
    b2b = jnp.pad(jnp.repeat(params["conv2_b"].astype(f32), 4), (0, 48))
    b2b = jnp.tile(b2b, 2).reshape(1, 2 * _NFC)

    # fc1: permute rows from PyTorch flatten order (co*16 + h*4 + w) to the
    # kernel flatten order (h*128 + co*4 + w), zero-pad the unused lanes and
    # lane-pad the 50-wide output to 128.
    w_fc1 = params["fc1_w"].astype(f32).reshape(20, 4, 4, 50)         # (co,h,w,j)
    w_fc1 = jnp.transpose(w_fc1, (1, 0, 2, 3)).reshape(4, 80, 50)     # (h, co*w, j)
    w1p = jnp.pad(w_fc1, ((0, 0), (0, 48), (0, _NFC - 50))).reshape(4 * _NFC, _NFC)

    wmid = jnp.stack([params[f"fc{i}_w"].astype(f32) for i in range(2, 9)])
    wmid = jnp.pad(wmid, ((0, 0), (0, _NFC - 50), (0, _NFC - 50)))    # (7,128,128)
    w9 = jnp.pad(params["fc9_w"].astype(f32), ((0, _NFC - 50), (0, _NFC - 10)))

    bfc = jnp.stack(
        [jnp.pad(params[f"fc{i}_b"].astype(f32), (0, _NFC - 50)) for i in range(1, 9)]
        + [jnp.pad(params["fc9_b"].astype(f32), (0, _NFC - 10))])     # (9,128)
    return b1m, b1b, b2m, b2b, w1p, wmid, w9, bfc


# ---------------------------------------------------------------------------
# Forward pass
# ---------------------------------------------------------------------------

@jax.jit
def deep_sn_tanh_net_forward(x_nchw, params):
    bsz = x_nchw.shape[0]
    x = x_nchw.astype(jnp.float32).reshape(bsz, 28, 28)

    # Adaptive batch block: multiple of 8, at most 128 samples per grid step.
    blk = min(_MAX_BLOCK_B, _round_up(bsz, 8))
    bp = _round_up(bsz, blk)
    if bp != bsz:
        x = jnp.pad(x, ((0, bp - bsz), (0, 0), (0, 0)))
    # Split input rows by parity so the 2x2-pool phases become unit-stride row
    # slabs in the kernel; pad H 14 -> 18 so every slab is exactly 16 rows.
    xe = jnp.pad(x[:, 0::2, :], ((0, 0), (0, 4), (0, 0)))   # (bp, 18, 28)
    xo = jnp.pad(x[:, 1::2, :], ((0, 0), (0, 4), (0, 0)))

    b1m, b1b, b2m, b2b, w1p, wmid, w9, bfc = _prepare_operands(params)

    grid = (bp // blk,)
    in_specs = [
        pl.BlockSpec((blk, 18, 28), lambda i: (i, 0, 0)),
        pl.BlockSpec((blk, 18, 28), lambda i: (i, 0, 0)),
        # Weights: constant index_maps -> DMA'd once, resident across the grid.
        pl.BlockSpec((5, 28, 2 * _NFC), lambda i: (0, 0, 0)),
        pl.BlockSpec((1, 2 * _NFC), lambda i: (0, 0)),
        pl.BlockSpec((5, _NFC, 2 * _NFC), lambda i: (0, 0, 0)),
        pl.BlockSpec((1, 2 * _NFC), lambda i: (0, 0)),
        pl.BlockSpec((4 * _NFC, _NFC), lambda i: (0, 0)),
        pl.BlockSpec((7, _NFC, _NFC), lambda i: (0, 0, 0)),
        pl.BlockSpec((_NFC, _NFC), lambda i: (0, 0)),
        pl.BlockSpec((9, _NFC), lambda i: (0, 0)),
    ]
    out = pl.pallas_call(
        _fused_kernel,
        out_shape=jax.ShapeDtypeStruct((bp, _NFC), jnp.float32),
        grid=grid,
        in_specs=in_specs,
        out_specs=pl.BlockSpec((blk, _NFC), lambda i: (i, 0)),
        compiler_params=pltpu.CompilerParams(
            dimension_semantics=("parallel",),
            vmem_limit_bytes=32 * 1024 * 1024,
        ),
    )(xe, xo, b1m, b1b, b2m, b2b, w1p, wmid, w9, bfc)
    return out[:bsz, :10]


# ---------------------------------------------------------------------------
# Pure-JAX reference (XLA), parameter init, self-test
# ---------------------------------------------------------------------------

@jax.jit
def _reference_forward(x_nchw, params):
    x = x_nchw.astype(jnp.float32)
    dn = ("NCHW", "OIHW", "NCHW")
    y = jax.lax.conv_general_dilated(x, params["conv1_w"], (1, 1), "VALID",
                                     dimension_numbers=dn)
    y = y + params["conv1_b"][None, :, None, None]
    y = y.reshape(y.shape[0], 10, 12, 2, 12, 2).max(axis=(3, 5))
    y = jnp.maximum(y, 0.0)
    y = jax.lax.conv_general_dilated(y, params["conv2_w"], (1, 1), "VALID",
                                     dimension_numbers=dn)
    y = y + params["conv2_b"][None, :, None, None]
    y = y.reshape(y.shape[0], 20, 4, 2, 4, 2).max(axis=(3, 5))
    y = jnp.maximum(y, 0.0)
    h = y.reshape(y.shape[0], 320)
    for i in range(1, 9):
        h = jnp.tanh(h @ params[f"fc{i}_w"] + params[f"fc{i}_b"]) * 1.6
    logits = h @ params["fc9_w"] + params["fc9_b"]
    return jax.nn.log_softmax(logits, axis=-1)


def _uniform(key, shape, fan_in):
    bound = 1.0 / jnp.sqrt(float(fan_in))
    return jax.random.uniform(key, shape, jnp.float32, -bound, bound)


def init_params(key):
    params = {}
    keys = jax.random.split(key, 22)
    params["conv1_w"] = _uniform(keys[0], (10, 1, 5, 5), 1 * 5 * 5)
    params["conv1_b"] = _uniform(keys[1], (10,), 1 * 5 * 5)
    params["conv2_w"] = _uniform(keys[2], (20, 10, 5, 5), 10 * 5 * 5)
    params["conv2_b"] = _uniform(keys[3], (20,), 10 * 5 * 5)
    fc_dims = [(320, 50)] + [(50, 50)] * 7 + [(50, 10)]
    for i, (din, dout) in enumerate(fc_dims):
        params[f"fc{i + 1}_w"] = _uniform(keys[4 + 2 * i], (din, dout), din)
        params[f"fc{i + 1}_b"] = _uniform(keys[5 + 2 * i], (dout,), din)
    return params


if __name__ == "__main__":
    key = jax.random.PRNGKey(0)
    k_x, k_p = jax.random.split(key)
    # MNIST-shaped input: the 320-dim flatten requires 1x28x28 spatial input.
    x = jax.random.normal(k_x, (2, 1, 28, 28), dtype=jnp.float32)
    params = init_params(k_p)

    out = deep_sn_tanh_net_forward(x, params)
    out = jax.block_until_ready(out)

    assert out.shape == (2, 10)
    assert bool(jnp.all(jnp.isfinite(out)))
    # log_softmax rows must sum (in prob space) to ~1.
    assert bool(jnp.allclose(jnp.sum(jnp.exp(out), axis=-1), 1.0, atol=1e-4))

    ref = jax.block_until_ready(_reference_forward(x, params))
    max_err = float(jnp.max(jnp.abs(out - ref)))
    assert max_err < 1e-2, f"kernel vs reference mismatch: {max_err}"

    print("KERNEL_OK")
</pallas_src>

<mosaic_0001>
module attributes {stable_mosaic.version = 11 : i64} {
  func.func @_fused_kernel(%arg0: i32, %arg1: memref<8x18x28xf32, #tpu.memory_space<vmem>>, %arg2: memref<8x18x28xf32, #tpu.memory_space<vmem>>, %arg3: memref<5x28x256xf32, #tpu.memory_space<vmem>>, %arg4: memref<1x256xf32, #tpu.memory_space<vmem>>, %arg5: memref<5x128x256xf32, #tpu.memory_space<vmem>>, %arg6: memref<1x256xf32, #tpu.memory_space<vmem>>, %arg7: memref<512x128xf32, #tpu.memory_space<vmem>>, %arg8: memref<7x128x128xf32, #tpu.memory_space<vmem>>, %arg9: memref<128x128xf32, #tpu.memory_space<vmem>>, %arg10: memref<9x128xf32, #tpu.memory_space<vmem>>, %arg11: memref<8x128xf32, #tpu.memory_space<vmem>>) attributes {dimension_semantics = [#tpu.dimension_semantics<parallel>], iteration_bounds = array<i64: 1>, scalar_prefetch = 0 : i64, scratch_operands = 0 : i64, tpu.core_type = #tpu.core_type<tc>, window_params = [{transform_indices = @transform_0, window_bounds = array<i64: 8, 18, 28>}, {transform_indices = @transform_1, window_bounds = array<i64: 8, 18, 28>}, {pipeline_mode = #tpu.pipeline_mode<synchronous>, transform_indices = @transform_2, window_bounds = array<i64: 5, 28, 256>}, {pipeline_mode = #tpu.pipeline_mode<synchronous>, transform_indices = @transform_3, window_bounds = array<i64: 1, 256>}, {pipeline_mode = #tpu.pipeline_mode<synchronous>, transform_indices = @transform_4, window_bounds = array<i64: 5, 128, 256>}, {pipeline_mode = #tpu.pipeline_mode<synchronous>, transform_indices = @transform_5, window_bounds = array<i64: 1, 256>}, {pipeline_mode = #tpu.pipeline_mode<synchronous>, transform_indices = @transform_6, window_bounds = array<i64: 512, 128>}, {pipeline_mode = #tpu.pipeline_mode<synchronous>, transform_indices = @transform_7, window_bounds = array<i64: 7, 128, 128>}, {pipeline_mode = #tpu.pipeline_mode<synchronous>, transform_indices = @transform_8, window_bounds = array<i64: 128, 128>}, {pipeline_mode = #tpu.pipeline_mode<synchronous>, transform_indices = @transform_9, window_bounds = array<i64: 9, 128>}, {transform_indices = @transform_10, window_bounds = array<i64: 8, 128>}]} {
    %c0 = arith.constant 0 : index
    %c0_0 = arith.constant 0 : index
    %c0_1 = arith.constant 0 : index
    %0 = vector.load %arg1[%c0, %c0_0, %c0_1] : memref<8x18x28xf32, #tpu.memory_space<vmem>>, vector<8x18x28xf32>
    %c0_2 = arith.constant 0 : index
    %c0_3 = arith.constant 0 : index
    %c0_4 = arith.constant 0 : index
    %1 = vector.load %arg2[%c0_2, %c0_3, %c0_4] : memref<8x18x28xf32, #tpu.memory_space<vmem>>, vector<8x18x28xf32>
    %2 = vector.extract_strided_slice %0 {offsets = [0, 0, 0], sizes = [8, 16, 28], strides = [1, 1, 1]} : vector<8x18x28xf32> to vector<8x16x28xf32>
    %3 = vector.shape_cast %2 : vector<8x16x28xf32> to vector<128x28xf32>
    %c0_5 = arith.constant 0 : index
    %c0_6 = arith.constant 0 : index
    %c0_7 = arith.constant 0 : index
    %4 = vector.load %arg3[%c0_5, %c0_6, %c0_7] : memref<5x28x256xf32, #tpu.memory_space<vmem>>, vector<1x28x256xf32>
    %5 = vector.shape_cast %4 : vector<1x28x256xf32> to vector<28x256xf32>
    %cst = arith.constant dense<0.000000e+00> : vector<128x256xf32>
    %6 = tpu.matmul %3, %5, %cst {dimension_numbers = #tpu.dot_dimension_numbers<[1], [0], [0], [1], [0, 0, 1, 1], [], []>} : vector<128x28xf32>, vector<28x256xf32>, vector<128x256xf32> -> vector<128x256xf32>
    %7 = vector.extract_strided_slice %1 {offsets = [0, 0, 0], sizes = [8, 16, 28], strides = [1, 1, 1]} : vector<8x18x28xf32> to vector<8x16x28xf32>
    %8 = vector.shape_cast %7 : vector<8x16x28xf32> to vector<128x28xf32>
    %c1 = arith.constant 1 : index
    %c0_8 = arith.constant 0 : index
    %c0_9 = arith.constant 0 : index
    %9 = vector.load %arg3[%c1, %c0_8, %c0_9] : memref<5x28x256xf32, #tpu.memory_space<vmem>>, vector<1x28x256xf32>
    %10 = vector.shape_cast %9 : vector<1x28x256xf32> to vector<28x256xf32>
    %cst_10 = arith.constant dense<0.000000e+00> : vector<128x256xf32>
    %11 = tpu.matmul %8, %10, %cst_10 {dimension_numbers = #tpu.dot_dimension_numbers<[1], [0], [0], [1], [0, 0, 1, 1], [], []>} : vector<128x28xf32>, vector<28x256xf32>, vector<128x256xf32> -> vector<128x256xf32>
    %12 = arith.addf %6, %11 : vector<128x256xf32>
    %13 = vector.extract_strided_slice %0 {offsets = [0, 1, 0], sizes = [8, 16, 28], strides = [1, 1, 1]} : vector<8x18x28xf32> to vector<8x16x28xf32>
    %14 = vector.shape_cast %13 : vector<8x16x28xf32> to vector<128x28xf32>
    %c2 = arith.constant 2 : index
    %c0_11 = arith.constant 0 : index
    %c0_12 = arith.constant 0 : index
    %15 = vector.load %arg3[%c2, %c0_11, %c0_12] : memref<5x28x256xf32, #tpu.memory_space<vmem>>, vector<1x28x256xf32>
    %16 = vector.shape_cast %15 : vector<1x28x256xf32> to vector<28x256xf32>
    %cst_13 = arith.constant dense<0.000000e+00> : vector<128x256xf32>
    %17 = tpu.matmul %14, %16, %cst_13 {dimension_numbers = #tpu.dot_dimension_numbers<[1], [0], [0], [1], [0, 0, 1, 1], [], []>} : vector<128x28xf32>, vector<28x256xf32>, vector<128x256xf32> -> vector<128x256xf32>
    %18 = arith.addf %12, %17 : vector<128x256xf32>
    %19 = vector.extract_strided_slice %1 {offsets = [0, 1, 0], sizes = [8, 16, 28], strides = [1, 1, 1]} : vector<8x18x28xf32> to vector<8x16x28xf32>
    %20 = vector.shape_cast %19 : vector<8x16x28xf32> to vector<128x28xf32>
    %c3 = arith.constant 3 : index
    %c0_14 = arith.constant 0 : index
    %c0_15 = arith.constant 0 : index
    %21 = vector.load %arg3[%c3, %c0_14, %c0_15] : memref<5x28x256xf32, #tpu.memory_space<vmem>>, vector<1x28x256xf32>
    %22 = vector.shape_cast %21 : vector<1x28x256xf32> to vector<28x256xf32>
    %cst_16 = arith.constant dense<0.000000e+00> : vector<128x256xf32>
    %23 = tpu.matmul %20, %22, %cst_16 {dimension_numbers = #tpu.dot_dimension_numbers<[1], [0], [0], [1], [0, 0, 1, 1], [], []>} : vector<128x28xf32>, vector<28x256xf32>, vector<128x256xf32> -> vector<128x256xf32>
    %24 = arith.addf %18, %23 : vector<128x256xf32>
    %25 = vector.extract_strided_slice %0 {offsets = [0, 2, 0], sizes = [8, 16, 28], strides = [1, 1, 1]} : vector<8x18x28xf32> to vector<8x16x28xf32>
    %26 = vector.shape_cast %25 : vector<8x16x28xf32> to vector<128x28xf32>
    %c4 = arith.constant 4 : index
    %c0_17 = arith.constant 0 : index
    %c0_18 = arith.constant 0 : index
    %27 = vector.load %arg3[%c4, %c0_17, %c0_18] : memref<5x28x256xf32, #tpu.memory_space<vmem>>, vector<1x28x256xf32>
    %28 = vector.shape_cast %27 : vector<1x28x256xf32> to vector<28x256xf32>
    %cst_19 = arith.constant dense<0.000000e+00> : vector<128x256xf32>
    %29 = tpu.matmul %26, %28, %cst_19 {dimension_numbers = #tpu.dot_dimension_numbers<[1], [0], [0], [1], [0, 0, 1, 1], [], []>} : vector<128x28xf32>, vector<28x256xf32>, vector<128x256xf32> -> vector<128x256xf32>
    %30 = arith.addf %24, %29 : vector<128x256xf32>
    %c0_20 = arith.constant 0 : index
    %c0_21 = arith.constant 0 : index
    %31 = vector.load %arg4[%c0_20, %c0_21] : memref<1x256xf32, #tpu.memory_space<vmem>>, vector<1x256xf32>
    %32 = vector.broadcast %31 : vector<1x256xf32> to vector<128x256xf32>
    %33 = arith.addf %30, %32 : vector<128x256xf32>
    %cst_22 = arith.constant 0.000000e+00 : f32
    %34 = vector.broadcast %cst_22 : f32 to vector<128x256xf32>
    %35 = arith.maximumf %33, %34 : vector<128x256xf32>
    %36 = vector.extract_strided_slice %35 {offsets = [0, 0], sizes = [128, 128], strides = [1, 1]} : vector<128x256xf32> to vector<128x128xf32>
    %37 = vector.extract_strided_slice %35 {offsets = [0, 128], sizes = [128, 128], strides = [1, 1]} : vector<128x256xf32> to vector<128x128xf32>
    %38 = arith.maximumf %36, %37 : vector<128x128xf32>
    %39 = vector.extract_strided_slice %1 {offsets = [0, 0, 0], sizes = [8, 16, 28], strides = [1, 1, 1]} : vector<8x18x28xf32> to vector<8x16x28xf32>
    %40 = vector.shape_cast %39 : vector<8x16x28xf32> to vector<128x28xf32>
    %c0_23 = arith.constant 0 : index
    %c0_24 = arith.constant 0 : index
    %c0_25 = arith.constant 0 : index
    %41 = vector.load %arg3[%c0_23, %c0_24, %c0_25] : memref<5x28x256xf32, #tpu.memory_space<vmem>>, vector<1x28x256xf32>
    %42 = vector.shape_cast %41 : vector<1x28x256xf32> to vector<28x256xf32>
    %cst_26 = arith.constant dense<0.000000e+00> : vector<128x256xf32>
    %43 = tpu.matmul %40, %42, %cst_26 {dimension_numbers = #tpu.dot_dimension_numbers<[1], [0], [0], [1], [0, 0, 1, 1], [], []>} : vector<128x28xf32>, vector<28x256xf32>, vector<128x256xf32> -> vector<128x256xf32>
    %44 = vector.extract_strided_slice %0 {offsets = [0, 1, 0], sizes = [8, 16, 28], strides = [1, 1, 1]} : vector<8x18x28xf32> to vector<8x16x28xf32>
    %45 = vector.shape_cast %44 : vector<8x16x28xf32> to vector<128x28xf32>
    %c1_27 = arith.constant 1 : index
    %c0_28 = arith.constant 0 : index
    %c0_29 = arith.constant 0 : index
    %46 = vector.load %arg3[%c1_27, %c0_28, %c0_29] : memref<5x28x256xf32, #tpu.memory_space<vmem>>, vector<1x28x256xf32>
    %47 = vector.shape_cast %46 : vector<1x28x256xf32> to vector<28x256xf32>
    %cst_30 = arith.constant dense<0.000000e+00> : vector<128x256xf32>
    %48 = tpu.matmul %45, %47, %cst_30 {dimension_numbers = #tpu.dot_dimension_numbers<[1], [0], [0], [1], [0, 0, 1, 1], [], []>} : vector<128x28xf32>, vector<28x256xf32>, vector<128x256xf32> -> vector<128x256xf32>
    %49 = arith.addf %43, %48 : vector<128x256xf32>
    %50 = vector.extract_strided_slice %1 {offsets = [0, 1, 0], sizes = [8, 16, 28], strides = [1, 1, 1]} : vector<8x18x28xf32> to vector<8x16x28xf32>
    %51 = vector.shape_cast %50 : vector<8x16x28xf32> to vector<128x28xf32>
    %c2_31 = arith.constant 2 : index
    %c0_32 = arith.constant 0 : index
    %c0_33 = arith.constant 0 : index
    %52 = vector.load %arg3[%c2_31, %c0_32, %c0_33] : memref<5x28x256xf32, #tpu.memory_space<vmem>>, vector<1x28x256xf32>
    %53 = vector.shape_cast %52 : vector<1x28x256xf32> to vector<28x256xf32>
    %cst_34 = arith.constant dense<0.000000e+00> : vector<128x256xf32>
    %54 = tpu.matmul %51, %53, %cst_34 {dimension_numbers = #tpu.dot_dimension_numbers<[1], [0], [0], [1], [0, 0, 1, 1], [], []>} : vector<128x28xf32>, vector<28x256xf32>, vector<128x256xf32> -> vector<128x256xf32>
    %55 = arith.addf %49, %54 : vector<128x256xf32>
    %56 = vector.extract_strided_slice %0 {offsets = [0, 2, 0], sizes = [8, 16, 28], strides = [1, 1, 1]} : vector<8x18x28xf32> to vector<8x16x28xf32>
    %57 = vector.shape_cast %56 : vector<8x16x28xf32> to vector<128x28xf32>
    %c3_35 = arith.constant 3 : index
    %c0_36 = arith.constant 0 : index
    %c0_37 = arith.constant 0 : index
    %58 = vector.load %arg3[%c3_35, %c0_36, %c0_37] : memref<5x28x256xf32, #tpu.memory_space<vmem>>, vector<1x28x256xf32>
    %59 = vector.shape_cast %58 : vector<1x28x256xf32> to vector<28x256xf32>
    %cst_38 = arith.constant dense<0.000000e+00> : vector<128x256xf32>
    %60 = tpu.matmul %57, %59, %cst_38 {dimension_numbers = #tpu.dot_dimension_numbers<[1], [0], [0], [1], [0, 0, 1, 1], [], []>} : vector<128x28xf32>, vector<28x256xf32>, vector<128x256xf32> -> vector<128x256xf32>
    %61 = arith.addf %55, %60 : vector<128x256xf32>
    %62 = vector.extract_strided_slice %1 {offsets = [0, 2, 0], sizes = [8, 16, 28], strides = [1, 1, 1]} : vector<8x18x28xf32> to vector<8x16x28xf32>
    %63 = vector.shape_cast %62 : vector<8x16x28xf32> to vector<128x28xf32>
    %c4_39 = arith.constant 4 : index
    %c0_40 = arith.constant 0 : index
    %c0_41 = arith.constant 0 : index
    %64 = vector.load %arg3[%c4_39, %c0_40, %c0_41] : memref<5x28x256xf32, #tpu.memory_space<vmem>>, vector<1x28x256xf32>
    %65 = vector.shape_cast %64 : vector<1x28x256xf32> to vector<28x256xf32>
    %cst_42 = arith.constant dense<0.000000e+00> : vector<128x256xf32>
    %66 = tpu.matmul %63, %65, %cst_42 {dimension_numbers = #tpu.dot_dimension_numbers<[1], [0], [0], [1], [0, 0, 1, 1], [], []>} : vector<128x28xf32>, vector<28x256xf32>, vector<128x256xf32> -> vector<128x256xf32>
    %67 = arith.addf %61, %66 : vector<128x256xf32>
    %c0_43 = arith.constant 0 : index
    %c0_44 = arith.constant 0 : index
    %68 = vector.load %arg4[%c0_43, %c0_44] : memref<1x256xf32, #tpu.memory_space<vmem>>, vector<1x256xf32>
    %69 = vector.broadcast %68 : vector<1x256xf32> to vector<128x256xf32>
    %70 = arith.addf %67, %69 : vector<128x256xf32>
    %cst_45 = arith.constant 0.000000e+00 : f32
    %71 = vector.broadcast %cst_45 : f32 to vector<128x256xf32>
    %72 = arith.maximumf %70, %71 : vector<128x256xf32>
    %73 = vector.extract_strided_slice %72 {offsets = [0, 0], sizes = [128, 128], strides = [1, 1]} : vector<128x256xf32> to vector<128x128xf32>
    %74 = vector.extract_strided_slice %72 {offsets = [0, 128], sizes = [128, 128], strides = [1, 1]} : vector<128x256xf32> to vector<128x128xf32>
    %75 = arith.maximumf %73, %74 : vector<128x128xf32>
    %76 = arith.maximumf %38, %75 : vector<128x128xf32>
    %77 = vector.shape_cast %76 : vector<128x128xf32> to vector<8x16x128xf32>
    %78 = vector.extract_strided_slice %77 {offsets = [0, 0, 0], sizes = [8, 8, 128], strides = [1, 1, 1]} : vector<8x16x128xf32> to vector<8x8x128xf32>
    %79 = vector.shape_cast %78 : vector<8x8x128xf32> to vector<64x128xf32>
    %c0_46 = arith.constant 0 : index
    %c0_47 = arith.constant 0 : index
    %c0_48 = arith.constant 0 : index
    %80 = vector.load %arg5[%c0_46, %c0_47, %c0_48] : memref<5x128x256xf32, #tpu.memory_space<vmem>>, vector<1x128x256xf32>
    %81 = vector.shape_cast %80 : vector<1x128x256xf32> to vector<128x256xf32>
    %cst_49 = arith.constant dense<0.000000e+00> : vector<64x256xf32>
    %82 = tpu.matmul %79, %81, %cst_49 {dimension_numbers = #tpu.dot_dimension_numbers<[1], [0], [0], [1], [0, 0, 1, 1], [], []>} : vector<64x128xf32>, vector<128x256xf32>, vector<64x256xf32> -> vector<64x256xf32>
    %83 = vector.extract_strided_slice %77 {offsets = [0, 1, 0], sizes = [8, 8, 128], strides = [1, 1, 1]} : vector<8x16x128xf32> to vector<8x8x128xf32>
    %84 = vector.shape_cast %83 : vector<8x8x128xf32> to vector<64x128xf32>
    %c1_50 = arith.constant 1 : index
    %c0_51 = arith.constant 0 : index
    %c0_52 = arith.constant 0 : index
    %85 = vector.load %arg5[%c1_50, %c0_51, %c0_52] : memref<5x128x256xf32, #tpu.memory_space<vmem>>, vector<1x128x256xf32>
    %86 = vector.shape_cast %85 : vector<1x128x256xf32> to vector<128x256xf32>
    %cst_53 = arith.constant dense<0.000000e+00> : vector<64x256xf32>
    %87 = tpu.matmul %84, %86, %cst_53 {dimension_numbers = #tpu.dot_dimension_numbers<[1], [0], [0], [1], [0, 0, 1, 1], [], []>} : vector<64x128xf32>, vector<128x256xf32>, vector<64x256xf32> -> vector<64x256xf32>
    %88 = arith.addf %82, %87 : vector<64x256xf32>
    %89 = vector.extract_strided_slice %77 {offsets = [0, 2, 0], sizes = [8, 8, 128], strides = [1, 1, 1]} : vector<8x16x128xf32> to vector<8x8x128xf32>
    %90 = vector.shape_cast %89 : vector<8x8x128xf32> to vector<64x128xf32>
    %c2_54 = arith.constant 2 : index
    %c0_55 = arith.constant 0 : index
    %c0_56 = arith.constant 0 : index
    %91 = vector.load %arg5[%c2_54, %c0_55, %c0_56] : memref<5x128x256xf32, #tpu.memory_space<vmem>>, vector<1x128x256xf32>
    %92 = vector.shape_cast %91 : vector<1x128x256xf32> to vector<128x256xf32>
    %cst_57 = arith.constant dense<0.000000e+00> : vector<64x256xf32>
    %93 = tpu.matmul %90, %92, %cst_57 {dimension_numbers = #tpu.dot_dimension_numbers<[1], [0], [0], [1], [0, 0, 1, 1], [], []>} : vector<64x128xf32>, vector<128x256xf32>, vector<64x256xf32> -> vector<64x256xf32>
    %94 = arith.addf %88, %93 : vector<64x256xf32>
    %95 = vector.extract_strided_slice %77 {offsets = [0, 3, 0], sizes = [8, 8, 128], strides = [1, 1, 1]} : vector<8x16x128xf32> to vector<8x8x128xf32>
    %96 = vector.shape_cast %95 : vector<8x8x128xf32> to vector<64x128xf32>
    %c3_58 = arith.constant 3 : index
    %c0_59 = arith.constant 0 : index
    %c0_60 = arith.constant 0 : index
    %97 = vector.load %arg5[%c3_58, %c0_59, %c0_60] : memref<5x128x256xf32, #tpu.memory_space<vmem>>, vector<1x128x256xf32>
    %98 = vector.shape_cast %97 : vector<1x128x256xf32> to vector<128x256xf32>
    %cst_61 = arith.constant dense<0.000000e+00> : vector<64x256xf32>
    %99 = tpu.matmul %96, %98, %cst_61 {dimension_numbers = #tpu.dot_dimension_numbers<[1], [0], [0], [1], [0, 0, 1, 1], [], []>} : vector<64x128xf32>, vector<128x256xf32>, vector<64x256xf32> -> vector<64x256xf32>
    %100 = arith.addf %94, %99 : vector<64x256xf32>
    %101 = vector.extract_strided_slice %77 {offsets = [0, 4, 0], sizes = [8, 8, 128], strides = [1, 1, 1]} : vector<8x16x128xf32> to vector<8x8x128xf32>
    %102 = vector.shape_cast %101 : vector<8x8x128xf32> to vector<64x128xf32>
    %c4_62 = arith.constant 4 : index
    %c0_63 = arith.constant 0 : index
    %c0_64 = arith.constant 0 : index
    %103 = vector.load %arg5[%c4_62, %c0_63, %c0_64] : memref<5x128x256xf32, #tpu.memory_space<vmem>>, vector<1x128x256xf32>
    %104 = vector.shape_cast %103 : vector<1x128x256xf32> to vector<128x256xf32>
    %cst_65 = arith.constant dense<0.000000e+00> : vector<64x256xf32>
    %105 = tpu.matmul %102, %104, %cst_65 {dimension_numbers = #tpu.dot_dimension_numbers<[1], [0], [0], [1], [0, 0, 1, 1], [], []>} : vector<64x128xf32>, vector<128x256xf32>, vector<64x256xf32> -> vector<64x256xf32>
    %106 = arith.addf %100, %105 : vector<64x256xf32>
    %c0_66 = arith.constant 0 : index
    %c0_67 = arith.constant 0 : index
    %107 = vector.load %arg6[%c0_66, %c0_67] : memref<1x256xf32, #tpu.memory_space<vmem>>, vector<1x256xf32>
    %108 = vector.broadcast %107 : vector<1x256xf32> to vector<64x256xf32>
    %109 = arith.addf %106, %108 : vector<64x256xf32>
    %cst_68 = arith.constant 0.000000e+00 : f32
    %110 = vector.broadcast %cst_68 : f32 to vector<64x256xf32>
    %111 = arith.maximumf %109, %110 : vector<64x256xf32>
    %112 = vector.extract_strided_slice %111 {offsets = [0, 0], sizes = [64, 128], strides = [1, 1]} : vector<64x256xf32> to vector<64x128xf32>
    %113 = vector.extract_strided_slice %111 {offsets = [0, 128], sizes = [64, 128], strides = [1, 1]} : vector<64x256xf32> to vector<64x128xf32>
    %114 = arith.maximumf %112, %113 : vector<64x128xf32>
    %115 = vector.shape_cast %114 : vector<64x128xf32> to vector<8x8x128xf32>
    %116 = vector.extract_strided_slice %115 {offsets = [0, 0, 0], sizes = [8, 1, 128], strides = [1, 1, 1]} : vector<8x8x128xf32> to vector<8x1x128xf32>
    %117 = vector.shape_cast %116 : vector<8x1x128xf32> to vector<8x128xf32>
    %118 = vector.extract_strided_slice %115 {offsets = [0, 1, 0], sizes = [8, 1, 128], strides = [1, 1, 1]} : vector<8x8x128xf32> to vector<8x1x128xf32>
    %119 = vector.shape_cast %118 : vector<8x1x128xf32> to vector<8x128xf32>
    %120 = arith.maximumf %117, %119 : vector<8x128xf32>
    %121 = vector.extract_strided_slice %115 {offsets = [0, 2, 0], sizes = [8, 1, 128], strides = [1, 1, 1]} : vector<8x8x128xf32> to vector<8x1x128xf32>
    %122 = vector.shape_cast %121 : vector<8x1x128xf32> to vector<8x128xf32>
    %123 = vector.extract_strided_slice %115 {offsets = [0, 3, 0], sizes = [8, 1, 128], strides = [1, 1, 1]} : vector<8x8x128xf32> to vector<8x1x128xf32>
    %124 = vector.shape_cast %123 : vector<8x1x128xf32> to vector<8x128xf32>
    %125 = arith.maximumf %122, %124 : vector<8x128xf32>
    %126 = vector.extract_strided_slice %115 {offsets = [0, 4, 0], sizes = [8, 1, 128], strides = [1, 1, 1]} : vector<8x8x128xf32> to vector<8x1x128xf32>
    %127 = vector.shape_cast %126 : vector<8x1x128xf32> to vector<8x128xf32>
    %128 = vector.extract_strided_slice %115 {offsets = [0, 5, 0], sizes = [8, 1, 128], strides = [1, 1, 1]} : vector<8x8x128xf32> to vector<8x1x128xf32>
    %129 = vector.shape_cast %128 : vector<8x1x128xf32> to vector<8x128xf32>
    %130 = arith.maximumf %127, %129 : vector<8x128xf32>
    %131 = vector.extract_strided_slice %115 {offsets = [0, 6, 0], sizes = [8, 1, 128], strides = [1, 1, 1]} : vector<8x8x128xf32> to vector<8x1x128xf32>
    %132 = vector.shape_cast %131 : vector<8x1x128xf32> to vector<8x128xf32>
    %133 = vector.extract_strided_slice %115 {offsets = [0, 7, 0], sizes = [8, 1, 128], strides = [1, 1, 1]} : vector<8x8x128xf32> to vector<8x1x128xf32>
    %134 = vector.shape_cast %133 : vector<8x1x128xf32> to vector<8x128xf32>
    %135 = arith.maximumf %132, %134 : vector<8x128xf32>
    %136 = tpu.concatenate %120, %125, %130, %135 in 1 : vector<8x128xf32>, vector<8x128xf32>, vector<8x128xf32>, vector<8x128xf32> -> vector<8x512xf32>
    %c0_69 = arith.constant 0 : index
    %c0_70 = arith.constant 0 : index
    %137 = vector.load %arg7[%c0_69, %c0_70] : memref<512x128xf32, #tpu.memory_space<vmem>>, vector<512x128xf32>
    %cst_71 = arith.constant dense<0.000000e+00> : vector<8x128xf32>
    %138 = tpu.matmul %136, %137, %cst_71 {dimension_numbers = #tpu.dot_dimension_numbers<[1], [0], [0], [1], [0, 0, 1, 1], [], []>} : vector<8x512xf32>, vector<512x128xf32>, vector<8x128xf32> -> vector<8x128xf32>
    %c0_72 = arith.constant 0 : index
    %c0_73 = arith.constant 0 : index
    %139 = vector.load %arg10[%c0_72, %c0_73] : memref<9x128xf32, #tpu.memory_space<vmem>>, vector<1x128xf32>
    %140 = vector.broadcast %139 : vector<1x128xf32> to vector<8x128xf32>
    %141 = arith.addf %138, %140 : vector<8x128xf32>
    %142 = math.tanh %141 : vector<8x128xf32>
    %cst_74 = arith.constant 1.600000e+00 : f32
    %143 = vector.broadcast %cst_74 : f32 to vector<8x128xf32>
    %144 = arith.mulf %142, %143 : vector<8x128xf32>
    %c0_75 = arith.constant 0 : index
    %c0_76 = arith.constant 0 : index
    %c0_77 = arith.constant 0 : index
    %145 = vector.load %arg8[%c0_75, %c0_76, %c0_77] : memref<7x128x128xf32, #tpu.memory_space<vmem>>, vector<1x128x128xf32>
    %146 = vector.shape_cast %145 : vector<1x128x128xf32> to vector<128x128xf32>
    %cst_78 = arith.constant dense<0.000000e+00> : vector<8x128xf32>
    %147 = tpu.matmul %144, %146, %cst_78 {dimension_numbers = #tpu.dot_dimension_numbers<[1], [0], [0], [1], [0, 0, 1, 1], [], []>} : vector<8x128xf32>, vector<128x128xf32>, vector<8x128xf32> -> vector<8x128xf32>
    %c1_79 = arith.constant 1 : index
    %c0_80 = arith.constant 0 : index
    %148 = vector.load %arg10[%c1_79, %c0_80] : memref<9x128xf32, #tpu.memory_space<vmem>>, vector<1x128xf32>
    %149 = vector.broadcast %148 : vector<1x128xf32> to vector<8x128xf32>
    %150 = arith.addf %147, %149 : vector<8x128xf32>
    %151 = math.tanh %150 : vector<8x128xf32>
    %cst_81 = arith.constant 1.600000e+00 : f32
    %152 = vector.broadcast %cst_81 : f32 to vector<8x128xf32>
    %153 = arith.mulf %151, %152 : vector<8x128xf32>
    %c1_82 = arith.constant 1 : index
    %c0_83 = arith.constant 0 : index
    %c0_84 = arith.constant 0 : index
    %154 = vector.load %arg8[%c1_82, %c0_83, %c0_84] : memref<7x128x128xf32, #tpu.memory_space<vmem>>, vector<1x128x128xf32>
    %155 = vector.shape_cast %154 : vector<1x128x128xf32> to vector<128x128xf32>
    %cst_85 = arith.constant dense<0.000000e+00> : vector<8x128xf32>
    %156 = tpu.matmul %153, %155, %cst_85 {dimension_numbers = #tpu.dot_dimension_numbers<[1], [0], [0], [1], [0, 0, 1, 1], [], []>} : vector<8x128xf32>, vector<128x128xf32>, vector<8x128xf32> -> vector<8x128xf32>
    %c2_86 = arith.constant 2 : index
    %c0_87 = arith.constant 0 : index
    %157 = vector.load %arg10[%c2_86, %c0_87] : memref<9x128xf32, #tpu.memory_space<vmem>>, vector<1x128xf32>
    %158 = vector.broadcast %157 : vector<1x128xf32> to vector<8x128xf32>
    %159 = arith.addf %156, %158 : vector<8x128xf32>
    %160 = math.tanh %159 : vector<8x128xf32>
    %cst_88 = arith.constant 1.600000e+00 : f32
    %161 = vector.broadcast %cst_88 : f32 to vector<8x128xf32>
    %162 = arith.mulf %160, %161 : vector<8x128xf32>
    %c2_89 = arith.constant 2 : index
    %c0_90 = arith.constant 0 : index
    %c0_91 = arith.constant 0 : index
    %163 = vector.load %arg8[%c2_89, %c0_90, %c0_91] : memref<7x128x128xf32, #tpu.memory_space<vmem>>, vector<1x128x128xf32>
    %164 = vector.shape_cast %163 : vector<1x128x128xf32> to vector<128x128xf32>
    %cst_92 = arith.constant dense<0.000000e+00> : vector<8x128xf32>
    %165 = tpu.matmul %162, %164, %cst_92 {dimension_numbers = #tpu.dot_dimension_numbers<[1], [0], [0], [1], [0, 0, 1, 1], [], []>} : vector<8x128xf32>, vector<128x128xf32>, vector<8x128xf32> -> vector<8x128xf32>
    %c3_93 = arith.constant 3 : index
    %c0_94 = arith.constant 0 : index
    %166 = vector.load %arg10[%c3_93, %c0_94] : memref<9x128xf32, #tpu.memory_space<vmem>>, vector<1x128xf32>
    %167 = vector.broadcast %166 : vector<1x128xf32> to vector<8x128xf32>
    %168 = arith.addf %165, %167 : vector<8x128xf32>
    %169 = math.tanh %168 : vector<8x128xf32>
    %cst_95 = arith.constant 1.600000e+00 : f32
    %170 = vector.broadcast %cst_95 : f32 to vector<8x128xf32>
    %171 = arith.mulf %169, %170 : vector<8x128xf32>
    %c3_96 = arith.constant 3 : index
    %c0_97 = arith.constant 0 : index
    %c0_98 = arith.constant 0 : index
    %172 = vector.load %arg8[%c3_96, %c0_97, %c0_98] : memref<7x128x128xf32, #tpu.memory_space<vmem>>, vector<1x128x128xf32>
    %173 = vector.shape_cast %172 : vector<1x128x128xf32> to vector<128x128xf32>
    %cst_99 = arith.constant dense<0.000000e+00> : vector<8x128xf32>
    %174 = tpu.matmul %171, %173, %cst_99 {dimension_numbers = #tpu.dot_dimension_numbers<[1], [0], [0], [1], [0, 0, 1, 1], [], []>} : vector<8x128xf32>, vector<128x128xf32>, vector<8x128xf32> -> vector<8x128xf32>
    %c4_100 = arith.constant 4 : index
    %c0_101 = arith.constant 0 : index
    %175 = vector.load %arg10[%c4_100, %c0_101] : memref<9x128xf32, #tpu.memory_space<vmem>>, vector<1x128xf32>
    %176 = vector.broadcast %175 : vector<1x128xf32> to vector<8x128xf32>
    %177 = arith.addf %174, %176 : vector<8x128xf32>
    %178 = math.tanh %177 : vector<8x128xf32>
    %cst_102 = arith.constant 1.600000e+00 : f32
    %179 = vector.broadcast %cst_102 : f32 to vector<8x128xf32>
    %180 = arith.mulf %178, %179 : vector<8x128xf32>
    %c4_103 = arith.constant 4 : index
    %c0_104 = arith.constant 0 : index
    %c0_105 = arith.constant 0 : index
    %181 = vector.load %arg8[%c4_103, %c0_104, %c0_105] : memref<7x128x128xf32, #tpu.memory_space<vmem>>, vector<1x128x128xf32>
    %182 = vector.shape_cast %181 : vector<1x128x128xf32> to vector<128x128xf32>
    %cst_106 = arith.constant dense<0.000000e+00> : vector<8x128xf32>
    %183 = tpu.matmul %180, %182, %cst_106 {dimension_numbers = #tpu.dot_dimension_numbers<[1], [0], [0], [1], [0, 0, 1, 1], [], []>} : vector<8x128xf32>, vector<128x128xf32>, vector<8x128xf32> -> vector<8x128xf32>
    %c5 = arith.constant 5 : index
    %c0_107 = arith.constant 0 : index
    %184 = vector.load %arg10[%c5, %c0_107] : memref<9x128xf32, #tpu.memory_space<vmem>>, vector<1x128xf32>
    %185 = vector.broadcast %184 : vector<1x128xf32> to vector<8x128xf32>
    %186 = arith.addf %183, %185 : vector<8x128xf32>
    %187 = math.tanh %186 : vector<8x128xf32>
    %cst_108 = arith.constant 1.600000e+00 : f32
    %188 = vector.broadcast %cst_108 : f32 to vector<8x128xf32>
    %189 = arith.mulf %187, %188 : vector<8x128xf32>
    %c5_109 = arith.constant 5 : index
    %c0_110 = arith.constant 0 : index
    %c0_111 = arith.constant 0 : index
    %190 = vector.load %arg8[%c5_109, %c0_110, %c0_111] : memref<7x128x128xf32, #tpu.memory_space<vmem>>, vector<1x128x128xf32>
    %191 = vector.shape_cast %190 : vector<1x128x128xf32> to vector<128x128xf32>
    %cst_112 = arith.constant dense<0.000000e+00> : vector<8x128xf32>
    %192 = tpu.matmul %189, %191, %cst_112 {dimension_numbers = #tpu.dot_dimension_numbers<[1], [0], [0], [1], [0, 0, 1, 1], [], []>} : vector<8x128xf32>, vector<128x128xf32>, vector<8x128xf32> -> vector<8x128xf32>
    %c6 = arith.constant 6 : index
    %c0_113 = arith.constant 0 : index
    %193 = vector.load %arg10[%c6, %c0_113] : memref<9x128xf32, #tpu.memory_space<vmem>>, vector<1x128xf32>
    %194 = vector.broadcast %193 : vector<1x128xf32> to vector<8x128xf32>
    %195 = arith.addf %192, %194 : vector<8x128xf32>
    %196 = math.tanh %195 : vector<8x128xf32>
    %cst_114 = arith.constant 1.600000e+00 : f32
    %197 = vector.broadcast %cst_114 : f32 to vector<8x128xf32>
    %198 = arith.mulf %196, %197 : vector<8x128xf32>
    %c6_115 = arith.constant 6 : index
    %c0_116 = arith.constant 0 : index
    %c0_117 = arith.constant 0 : index
    %199 = vector.load %arg8[%c6_115, %c0_116, %c0_117] : memref<7x128x128xf32, #tpu.memory_space<vmem>>, vector<1x128x128xf32>
    %200 = vector.shape_cast %199 : vector<1x128x128xf32> to vector<128x128xf32>
    %cst_118 = arith.constant dense<0.000000e+00> : vector<8x128xf32>
    %201 = tpu.matmul %198, %200, %cst_118 {dimension_numbers = #tpu.dot_dimension_numbers<[1], [0], [0], [1], [0, 0, 1, 1], [], []>} : vector<8x128xf32>, vector<128x128xf32>, vector<8x128xf32> -> vector<8x128xf32>
    %c7 = arith.constant 7 : index
    %c0_119 = arith.constant 0 : index
    %202 = vector.load %arg10[%c7, %c0_119] : memref<9x128xf32, #tpu.memory_space<vmem>>, vector<1x128xf32>
    %203 = vector.broadcast %202 : vector<1x128xf32> to vector<8x128xf32>
    %204 = arith.addf %201, %203 : vector<8x128xf32>
    %205 = math.tanh %204 : vector<8x128xf32>
    %cst_120 = arith.constant 1.600000e+00 : f32
    %206 = vector.broadcast %cst_120 : f32 to vector<8x128xf32>
    %207 = arith.mulf %205, %206 : vector<8x128xf32>
    %c0_121 = arith.constant 0 : index
    %c0_122 = arith.constant 0 : index
    %208 = vector.load %arg9[%c0_121, %c0_122] : memref<128x128xf32, #tpu.memory_space<vmem>>, vector<128x128xf32>
    %cst_123 = arith.constant dense<0.000000e+00> : vector<8x128xf32>
    %209 = tpu.matmul %207, %208, %cst_123 {dimension_numbers = #tpu.dot_dimension_numbers<[1], [0], [0], [1], [0, 0, 1, 1], [], []>} : vector<8x128xf32>, vector<128x128xf32>, vector<8x128xf32> -> vector<8x128xf32>
    %c8 = arith.constant 8 : index
    %c0_124 = arith.constant 0 : index
    %210 = vector.load %arg10[%c8, %c0_124] : memref<9x128xf32, #tpu.memory_space<vmem>>, vector<1x128xf32>
    %211 = vector.broadcast %210 : vector<1x128xf32> to vector<8x128xf32>
    %212 = arith.addf %209, %211 : vector<8x128xf32>
    %213 = tpu.iota {dimensions = array<i32: 1>} : vector<8x128xi32>
    %c10_i32 = arith.constant 10 : i32
    %214 = vector.broadcast %c10_i32 : i32 to vector<8x128xi32>
    %215 = arith.cmpi slt, %213, %214 : vector<8x128xi32>
    %cst_125 = arith.constant -1.000000e+30 : f32
    %216 = vector.broadcast %cst_125 : f32 to vector<8x128xf32>
    %217 = arith.select %215, %212, %216 : vector<8x128xi1>, vector<8x128xf32>
    %cst_126 = arith.constant dense<0xFF800000> : vector<8xf32>
    %218 = vector.multi_reduction <maximumf>, %217, %cst_126 [1] : vector<8x128xf32> to vector<8xf32>
    %219 = vector.shape_cast %218 : vector<8xf32> to vector<8x1xf32>
    %220 = vector.broadcast %219 : vector<8x1xf32> to vector<8x128xf32>
    %221 = arith.subf %217, %220 : vector<8x128xf32>
    %222 = math.exp %221 : vector<8x128xf32>
    %cst_127 = arith.constant dense<0.000000e+00> : vector<8xf32>
    %223 = vector.multi_reduction <add>, %222, %cst_127 [1] : vector<8x128xf32> to vector<8xf32>
    %224 = vector.shape_cast %223 : vector<8xf32> to vector<8x1xf32>
    %225 = math.log %224 : vector<8x1xf32>
    %226 = vector.broadcast %225 : vector<8x1xf32> to vector<8x128xf32>
    %227 = arith.subf %221, %226 : vector<8x128xf32>
    %c0_128 = arith.constant 0 : index
    %c0_129 = arith.constant 0 : index
    %228 = vector.load %arg11[%c0_128, %c0_129] : memref<8x128xf32, #tpu.memory_space<vmem>>, vector<8x128xf32>
    tpu.vector_store %arg11[%c0_128, %c0_129], %227 {strides = array<i32>} : memref<8x128xf32, #tpu.memory_space<vmem>>, vector<8x128xf32>,
    return
  }
  func.func @transform_0(%arg0: i32) -> (i32, i32, i32) {
    %c0_i32 = arith.constant 0 : i32
    %c0_i32_0 = arith.constant 0 : i32
    %c0_i32_1 = arith.constant 0 : i32
    return %arg0, %c0_i32, %c0_i32_0 : i32, i32, i32
  }
  func.func @transform_1(%arg0: i32) -> (i32, i32, i32) {
    %c0_i32 = arith.constant 0 : i32
    %c0_i32_0 = arith.constant 0 : i32
    %c0_i32_1 = arith.constant 0 : i32
    return %arg0, %c0_i32, %c0_i32_0 : i32, i32, i32
  }
  func.func @transform_2(%arg0: i32) -> (i32, i32, i32) {
    %c0_i32 = arith.constant 0 : i32
    %c0_i32_0 = arith.constant 0 : i32
    %c0_i32_1 = arith.constant 0 : i32
    %c0_i32_2 = arith.constant 0 : i32
    return %c0_i32, %c0_i32_0, %c0_i32_1 : i32, i32, i32
  }
  func.func @transform_3(%arg0: i32) -> (i32, i32) {
    %c0_i32 = arith.constant 0 : i32
    %c0_i32_0 = arith.constant 0 : i32
    %c0_i32_1 = arith.constant 0 : i32
    return %c0_i32, %c0_i32_0 : i32, i32
  }
  func.func @transform_4(%arg0: i32) -> (i32, i32, i32) {
    %c0_i32 = arith.constant 0 : i32
    %c0_i32_0 = arith.constant 0 : i32
    %c0_i32_1 = arith.constant 0 : i32
    %c0_i32_2 = arith.constant 0 : i32
    return %c0_i32, %c0_i32_0, %c0_i32_1 : i32, i32, i32
  }
  func.func @transform_5(%arg0: i32) -> (i32, i32) {
    %c0_i32 = arith.constant 0 : i32
    %c0_i32_0 = arith.constant 0 : i32
    %c0_i32_1 = arith.constant 0 : i32
    return %c0_i32, %c0_i32_0 : i32, i32
  }
  func.func @transform_6(%arg0: i32) -> (i32, i32) {
    %c0_i32 = arith.constant 0 : i32
    %c0_i32_0 = arith.constant 0 : i32
    %c0_i32_1 = arith.constant 0 : i32
    return %c0_i32, %c0_i32_0 : i32, i32
  }
  func.func @transform_7(%arg0: i32) -> (i32, i32, i32) {
    %c0_i32 = arith.constant 0 : i32
    %c0_i32_0 = arith.constant 0 : i32
    %c0_i32_1 = arith.constant 0 : i32
    %c0_i32_2 = arith.constant 0 : i32
    return %c0_i32, %c0_i32_0, %c0_i32_1 : i32, i32, i32
  }
  func.func @transform_8(%arg0: i32) -> (i32, i32) {
    %c0_i32 = arith.constant 0 : i32
    %c0_i32_0 = arith.constant 0 : i32
    %c0_i32_1 = arith.constant 0 : i32
    return %c0_i32, %c0_i32_0 : i32, i32
  }
  func.func @transform_9(%arg0: i32) -> (i32, i32) {
    %c0_i32 = arith.constant 0 : i32
    %c0_i32_0 = arith.constant 0 : i32
    %c0_i32_1 = arith.constant 0 : i32
    return %c0_i32, %c0_i32_0 : i32, i32
  }
  func.func @transform_10(%arg0: i32) -> (i32, i32) {
    %c0_i32 = arith.constant 0 : i32
    %c0_i32_0 = arith.constant 0 : i32
    return %arg0, %c0_i32 : i32, i32
  }
}

</mosaic_0001>

<llo_original>
// kernel: tile.18
$region0: #{tile.18}
  #allocation0 [shape = 's32[1]{0}', space=sflag, size = 0x4, scoped, tag = 'scoped memory for tile.18']
  %s0 = inlined_call_operand.vmem [shape: f32[128], index: 0, kind: input, shape index: {}]
  %s1 = inlined_call_operand.vmem [shape: f32[2,128], index: 1, kind: output, shape index: {}]
  // Predicated region
  $region2: #{tile.18} parent=0 // pred_check
    _
  $region3: #{tile.18} parent=0 // pred_check_branch
    %3 = sbr.rel (0) target = $region5
  $region4: #{tile.18} parent=0 // pred_region
    _
  $region5: #{tile.18} parent=0 // pred_fallthru
    _
  %v4 = vld [vmem:[%s0] ss:$0 sm:$0xff]
  %5 = vst [vmem:[%s1] sm:$0x3] %v4

// kernel: deep_sn_tanh_net_forward.1
$region0: #{deep_sn_tanh_net_forward.1}
  #allocation0 [shape = 'u32[]', space=smem, size = 0x4, offset = 0x4, fixed_abs, tag = 'smem constant byte address 0x4 - core index']
  #allocation1 [shape = 'u32[72,128]{1,0:T(1,128)}', space=vmem, size = 0x9000, scoped, tag = 'internal scratch']
  %s0 = inlined_call_operand.vmem [shape: f32[8,18,28], index: 0, kind: input, shape index: {}]
  %s1 = inlined_call_operand.vmem [shape: f32[8,18,28], index: 1, kind: input, shape index: {}]
  %s2 = inlined_call_operand.vmem [shape: f32[5,28,256], index: 2, kind: input, shape index: {}]
  %s3 = inlined_call_operand.vmem [shape: f32[1,256], index: 3, kind: input, shape index: {}]
  %s4 = inlined_call_operand.vmem [shape: f32[5,128,256], index: 4, kind: input, shape index: {}]
  %s5 = inlined_call_operand.vmem [shape: f32[1,256], index: 5, kind: input, shape index: {}]
  %s6 = inlined_call_operand.vmem [shape: f32[512,128], index: 6, kind: input, shape index: {}]
  %s7 = inlined_call_operand.vmem [shape: f32[7,128,128], index: 7, kind: input, shape index: {}]
  %s8 = inlined_call_operand.vmem [shape: f32[128,128], index: 8, kind: input, shape index: {}]
  %s9 = inlined_call_operand.vmem [shape: f32[9,128], index: 9, kind: input, shape index: {}]
  %s10 = inlined_call_operand.vmem [shape: f32[8,128], index: 10, kind: output, shape index: {}]
  %s11 = sld [smem:[#allocation0]]
  $region50: #{deep_sn_tanh_net_forward.1} parent=0
    _
  %s13 = ssub.s32 1, %s11
  %s14 = scalar_select 0, %s13, %s11
  // Predicated region
  $region2: #{deep_sn_tanh_net_forward.1} parent=0 // pred_check
    _
  $region3: #{deep_sn_tanh_net_forward.1} parent=0 // pred_check_branch
    %16 = sbr.rel (0) target = $region5
  $region4: #{deep_sn_tanh_net_forward.1} parent=0 // pred_region
    _
  $region5: #{deep_sn_tanh_net_forward.1} parent=0 // pred_fallthru
    _
  // Predicated region
  $region6: #{deep_sn_tanh_net_forward.1} parent=0 // pred_check
    _
  $region7: #{deep_sn_tanh_net_forward.1} parent=0 // pred_check_branch
    %18 = sbr.rel (0) target = $region9
  $region8: #{deep_sn_tanh_net_forward.1} parent=0 // pred_region
    _
  $region9: #{deep_sn_tanh_net_forward.1} parent=0 // pred_fallthru
    _
  // Predicated region
  $region10: #{deep_sn_tanh_net_forward.1} parent=0 // pred_check
    _
  $region11: #{deep_sn_tanh_net_forward.1} parent=0 // pred_check_branch
    %20 = sbr.rel (0) target = $region13
  $region12: #{deep_sn_tanh_net_forward.1} parent=0 // pred_region
    _
  $region13: #{deep_sn_tanh_net_forward.1} parent=0 // pred_fallthru
    _
  // Predicated region
  $region14: #{deep_sn_tanh_net_forward.1} parent=0 // pred_check
    _
  $region15: #{deep_sn_tanh_net_forward.1} parent=0 // pred_check_branch
    %22 = sbr.rel (0) target = $region17
  $region16: #{deep_sn_tanh_net_forward.1} parent=0 // pred_region
    _
  $region17: #{deep_sn_tanh_net_forward.1} parent=0 // pred_fallthru
    _
  // Predicated region
  $region18: #{deep_sn_tanh_net_forward.1} parent=0 // pred_check
    _
  $region19: #{deep_sn_tanh_net_forward.1} parent=0 // pred_check_branch
    %24 = sbr.rel (0) target = $region21
  $region20: #{deep_sn_tanh_net_forward.1} parent=0 // pred_region
    _
  $region21: #{deep_sn_tanh_net_forward.1} parent=0 // pred_fallthru
    _
  // Predicated region
  $region22: #{deep_sn_tanh_net_forward.1} parent=0 // pred_check
    _
  $region23: #{deep_sn_tanh_net_forward.1} parent=0 // pred_check_branch
    %26 = sbr.rel (0) target = $region25
  $region24: #{deep_sn_tanh_net_forward.1} parent=0 // pred_region
    _
  $region25: #{deep_sn_tanh_net_forward.1} parent=0 // pred_fallthru
    _
  // Predicated region
  $region26: #{deep_sn_tanh_net_forward.1} parent=0 // pred_check
    _
  $region27: #{deep_sn_tanh_net_forward.1} parent=0 // pred_check_branch
    %28 = sbr.rel (0) target = $region29
  $region28: #{deep_sn_tanh_net_forward.1} parent=0 // pred_region
    _
  $region29: #{deep_sn_tanh_net_forward.1} parent=0 // pred_fallthru
    _
  // Predicated region
  $region30: #{deep_sn_tanh_net_forward.1} parent=0 // pred_check
    _
  $region31: #{deep_sn_tanh_net_forward.1} parent=0 // pred_check_branch
    %30 = sbr.rel (0) target = $region33
  $region32: #{deep_sn_tanh_net_forward.1} parent=0 // pred_region
    _
  $region33: #{deep_sn_tanh_net_forward.1} parent=0 // pred_fallthru
    _
  // Predicated region
  $region34: #{deep_sn_tanh_net_forward.1} parent=0 // pred_check
    _
  $region35: #{deep_sn_tanh_net_forward.1} parent=0 // pred_check_branch
    %32 = sbr.rel (0) target = $region37
  $region36: #{deep_sn_tanh_net_forward.1} parent=0 // pred_region
    _
  $region37: #{deep_sn_tanh_net_forward.1} parent=0 // pred_fallthru
    _
  // Predicated region
  $region38: #{deep_sn_tanh_net_forward.1} parent=0 // pred_check
    _
  $region39: #{deep_sn_tanh_net_forward.1} parent=0 // pred_check_branch
    %34 = sbr.rel (0) target = $region41
  $region40: #{deep_sn_tanh_net_forward.1} parent=0 // pred_region
    _
  $region41: #{deep_sn_tanh_net_forward.1} parent=0 // pred_fallthru
    _
  %v35 = vld [vmem:[%s0] sm:$0xff]
  %v36 = vld [vmem:[%s0 + $0x8] sm:$0xff]
  %v37 = vld [vmem:[%s0 + $0x10] sm:$0x3]
  %v38 = vld [vmem:[%s0 + $0x18] sm:$0xff]
  %v39 = vld [vmem:[%s0 + $0x20] sm:$0xff]
  %v40 = vld [vmem:[%s0 + $0x28] sm:$0x3]
  %v41 = vld [vmem:[%s0 + $0x30] sm:$0xff]
  %v42 = vld [vmem:[%s0 + $0x38] sm:$0xff]
  %v43 = vld [vmem:[%s0 + $0x40] sm:$0x3]
  %v44 = vld [vmem:[%s0 + $0x48] sm:$0xff]
  %v45 = vld [vmem:[%s0 + $0x50] sm:$0xff]
  %v46 = vld [vmem:[%s0 + $0x58] sm:$0x3]
  %v47 = vld [vmem:[%s0 + $0x60] sm:$0xff]
  %v48 = vld [vmem:[%s0 + $0x68] sm:$0xff]
  %v49 = vld [vmem:[%s0 + $0x70] sm:$0x3]
  %v50 = vld [vmem:[%s0 + $0x78] sm:$0xff]
  %v51 = vld [vmem:[%s0 + $0x80] sm:$0xff]
  %v52 = vld [vmem:[%s0 + $0x88] sm:$0x3]
  %v53 = vld [vmem:[%s0 + $0x90] sm:$0xff]
  %v54 = vld [vmem:[%s0 + $0x98] sm:$0xff]
  %v55 = vld [vmem:[%s0 + $0xa0] sm:$0x3]
  %v56 = vld [vmem:[%s0 + $0xa8] sm:$0xff]
  %v57 = vld [vmem:[%s0 + $0xb0] sm:$0xff]
  %v58 = vld [vmem:[%s0 + $0xb8] sm:$0x3]
  %v59 = vld [vmem:[%s1] sm:$0xff]
  %v60 = vld [vmem:[%s1 + $0x8] sm:$0xff]
  %v61 = vld [vmem:[%s1 + $0x10] sm:$0x3]
  %v62 = vld [vmem:[%s1 + $0x18] sm:$0xff]
  %v63 = vld [vmem:[%s1 + $0x20] sm:$0xff]
  %v64 = vld [vmem:[%s1 + $0x28] sm:$0x3]
  %v65 = vld [vmem:[%s1 + $0x30] sm:$0xff]
  %v66 = vld [vmem:[%s1 + $0x38] sm:$0xff]
  %v67 = vld [vmem:[%s1 + $0x40] sm:$0x3]
  %v68 = vld [vmem:[%s1 + $0x48] sm:$0xff]
  %v69 = vld [vmem:[%s1 + $0x50] sm:$0xff]
  %v70 = vld [vmem:[%s1 + $0x58] sm:$0x3]
  %v71 = vld [vmem:[%s1 + $0x60] sm:$0xff]
  %v72 = vld [vmem:[%s1 + $0x68] sm:$0xff]
  %v73 = vld [vmem:[%s1 + $0x70] sm:$0x3]
  %v74 = vld [vmem:[%s1 + $0x78] sm:$0xff]
  %v75 = vld [vmem:[%s1 + $0x80] sm:$0xff]
  %v76 = vld [vmem:[%s1 + $0x88] sm:$0x3]
  %v77 = vld [vmem:[%s1 + $0x90] sm:$0xff]
  %v78 = vld [vmem:[%s1 + $0x98] sm:$0xff]
  %v79 = vld [vmem:[%s1 + $0xa0] sm:$0x3]
  %v80 = vld [vmem:[%s1 + $0xa8] sm:$0xff]
  %v81 = vld [vmem:[%s1 + $0xb0] sm:$0xff]
  %v82 = vld [vmem:[%s1 + $0xb8] sm:$0x3]
  %v83 = vld [vmem:[%s2] sm:$0xff]
  %v84 = vld [vmem:[%s2 + $0x8] sm:$0xff]
  %v85 = vld [vmem:[%s2 + $0x10] sm:$0xff]
  %v86 = vld [vmem:[%s2 + $0x18] sm:$0xff]
  %v87 = vld [vmem:[%s2 + $0x20] sm:$0xff]
  %v88 = vld [vmem:[%s2 + $0x28] sm:$0xff]
  %v89 = vld [vmem:[%s2 + $0x30] sm:$0xf]
  %v90 = vld [vmem:[%s2 + $0x38] sm:$0xf]
  %s91 = scalar_lea.vmem %s2, 64
  %v92 = vld [vmem:[%s91] sm:$0xff]
  %v93 = vld [vmem:[%s91 + $0x8] sm:$0xff]
  %v94 = vld [vmem:[%s91 + $0x10] sm:$0xff]
  %v95 = vld [vmem:[%s91 + $0x18] sm:$0xff]
  %v96 = vld [vmem:[%s91 + $0x20] sm:$0xff]
  %v97 = vld [vmem:[%s91 + $0x28] sm:$0xff]
  %v98 = vld [vmem:[%s91 + $0x30] sm:$0xf]
  %v99 = vld [vmem:[%s91 + $0x38] sm:$0xf]
  %vm100 = vcmask 228352
  %v102 = vsel %vm100, %v59, 0
  %v105 = vsel %vm100, %v60, 0
  %v108 = vsel %vm100, %v62, 0
  %v111 = vsel %vm100, %v63, 0
  %v114 = vsel %vm100, %v65, 0
  %v117 = vsel %vm100, %v66, 0
  %v120 = vsel %vm100, %v68, 0
  %v123 = vsel %vm100, %v69, 0
  %v126 = vsel %vm100, %v71, 0
  %v129 = vsel %vm100, %v72, 0
  %v132 = vsel %vm100, %v74, 0
  %v135 = vsel %vm100, %v75, 0
  %v138 = vsel %vm100, %v77, 0
  %v141 = vsel %vm100, %v78, 0
  %v144 = vsel %vm100, %v80, 0
  %v147 = vsel %vm100, %v81, 0
  %vm149 = vcmask 1043456
  %v151 = vsel %vm149, %v98, 0
  %v154 = vsel %vm149, %v99, 0
  %156 = vmatpush.msra.mxu0 0.0
  %157 = vmatpush.msra.mxu0 0.0
  %158 = vmatpush.msra.mxu0 0.0
  %159 = vmatpush.msra.mxu0 0.0
  %160 = vmatpush.msra.mxu0 0.0
  %161 = vmatpush.msra.mxu0 0.0
  %162 = vmatpush.msra.mxu0 0.0
  %163 = vmatpush.msra.mxu0 0.0
  %164 = vmatpush.msra.mxu0 0.0
  %165 = vmatpush.msra.mxu0 0.0
  %166 = vmatpush.msra.mxu0 0.0
  %167 = vmatpush.msra.mxu0 0.0
  %168 = vmatpush.msra.mxu0 %v151
  %169 = vmatpush.msra.mxu0 %v96
  %170 = vmatpush.msra.mxu0 %v94
  %171 = vmatpush.msra.mxu0 %v92
  %172 = vmatmul.f32.gmra.mxu0 %v102
  %v173 = vpop.f32.mrf.mxu0
  %v174 = vadd.f32 0.0, %v173
  %175 = vmatmul.f32.gmra.mxu0 %v105
  %v176 = vpop.f32.mrf.mxu0
  %v177 = vadd.f32 0.0, %v176
  %178 = vmatmul.f32.gmra.mxu0 %v108
  %v179 = vpop.f32.mrf.mxu0
  %v180 = vadd.f32 0.0, %v179
  %181 = vmatmul.f32.gmra.mxu0 %v111
  %v182 = vpop.f32.mrf.mxu0
  %v183 = vadd.f32 0.0, %v182
  %184 = vmatmul.f32.gmra.mxu0 %v114
  %v185 = vpop.f32.mrf.mxu0
  %v186 = vadd.f32 0.0, %v185
  %187 = vmatmul.f32.gmra.mxu0 %v117
  %v188 = vpop.f32.mrf.mxu0
  %v189 = vadd.f32 0.0, %v188
  %190 = vmatmul.f32.gmra.mxu0 %v120
  %v191 = vpop.f32.mrf.mxu0
  %v192 = vadd.f32 0.0, %v191
  %193 = vmatmul.f32.gmra.mxu0 %v123
  %v194 = vpop.f32.mrf.mxu0
  %v195 = vadd.f32 0.0, %v194
  %196 = vmatmul.f32.gmra.mxu0 %v126
  %v197 = vpop.f32.mrf.mxu0
  %v198 = vadd.f32 0.0, %v197
  %199 = vmatmul.f32.gmra.mxu0 %v129
  %v200 = vpop.f32.mrf.mxu0
  %v201 = vadd.f32 0.0, %v200
  %202 = vmatmul.f32.gmra.mxu0 %v132
  %v203 = vpop.f32.mrf.mxu0
  %v204 = vadd.f32 0.0, %v203
  %205 = vmatmul.f32.gmra.mxu0 %v135
  %v206 = vpop.f32.mrf.mxu0
  %v207 = vadd.f32 0.0, %v206
  %208 = vmatmul.f32.gmra.mxu0 %v138
  %v209 = vpop.f32.mrf.mxu0
  %v210 = vadd.f32 0.0, %v209
  %211 = vmatmul.f32.gmra.mxu0 %v141
  %v212 = vpop.f32.mrf.mxu0
  %v213 = vadd.f32 0.0, %v212
  %214 = vmatmul.f32.gmra.mxu0 %v144
  %v215 = vpop.f32.mrf.mxu0
  %v216 = vadd.f32 0.0, %v215
  %217 = vmatmul.f32.gmra.mxu0 %v147
  %v218 = vpop.f32.mrf.mxu0
  %v219 = vadd.f32 0.0, %v218
  %220 = vdwg.mxu0
  %221 = vmatpush.msra.mxu0 0.0
  %222 = vmatpush.msra.mxu0 0.0
  %223 = vmatpush.msra.mxu0 0.0
  %224 = vmatpush.msra.mxu0 0.0
  %225 = vmatpush.msra.mxu0 0.0
  %226 = vmatpush.msra.mxu0 0.0
  %227 = vmatpush.msra.mxu0 0.0
  %228 = vmatpush.msra.mxu0 0.0
  %229 = vmatpush.msra.mxu0 0.0
  %230 = vmatpush.msra.mxu0 0.0
  %231 = vmatpush.msra.mxu0 0.0
  %232 = vmatpush.msra.mxu0 0.0
  %233 = vmatpush.msra.mxu0 %v154
  %234 = vmatpush.msra.mxu0 %v97
  %235 = vmatpush.msra.mxu0 %v95
  %236 = vmatpush.msra.mxu0 %v93
  %237 = vmatmul.f32.gmra.mxu0 %v102
  %v238 = vpop.f32.mrf.mxu0
  %v239 = vadd.f32 0.0, %v238
  %240 = vmatmul.f32.gmra.mxu0 %v105
  %v241 = vpop.f32.mrf.mxu0
  %v242 = vadd.f32 0.0, %v241
  %243 = vmatmul.f32.gmra.mxu0 %v108
  %v244 = vpop.f32.mrf.mxu0
  %v245 = vadd.f32 0.0, %v244
  %246 = vmatmul.f32.gmra.mxu0 %v111
  %v247 = vpop.f32.mrf.mxu0
  %v248 = vadd.f32 0.0, %v247
  %249 = vmatmul.f32.gmra.mxu0 %v114
  %v250 = vpop.f32.mrf.mxu0
  %v251 = vadd.f32 0.0, %v250
  %252 = vmatmul.f32.gmra.mxu0 %v117
  %v253 = vpop.f32.mrf.mxu0
  %v254 = vadd.f32 0.0, %v253
  %255 = vmatmul.f32.gmra.mxu0 %v120
  %v256 = vpop.f32.mrf.mxu0
  %v257 = vadd.f32 0.0, %v256
  %258 = vmatmul.f32.gmra.mxu0 %v123
  %v259 = vpop.f32.mrf.mxu0
  %v260 = vadd.f32 0.0, %v259
  %261 = vmatmul.f32.gmra.mxu0 %v126
  %v262 = vpop.f32.mrf.mxu0
  %v263 = vadd.f32 0.0, %v262
  %264 = vmatmul.f32.gmra.mxu0 %v129
  %v265 = vpop.f32.mrf.mxu0
  %v266 = vadd.f32 0.0, %v265
  %267 = vmatmul.f32.gmra.mxu0 %v132
  %v268 = vpop.f32.mrf.mxu0
  %v269 = vadd.f32 0.0, %v268
  %270 = vmatmul.f32.gmra.mxu0 %v135
  %v271 = vpop.f32.mrf.mxu0
  %v272 = vadd.f32 0.0, %v271
  %273 = vmatmul.f32.gmra.mxu0 %v138
  %v274 = vpop.f32.mrf.mxu0
  %v275 = vadd.f32 0.0, %v274
  %276 = vmatmul.f32.gmra.mxu0 %v141
  %v277 = vpop.f32.mrf.mxu0
  %v278 = vadd.f32 0.0, %v277
  %279 = vmatmul.f32.gmra.mxu0 %v144
  %v280 = vpop.f32.mrf.mxu0
  %v281 = vadd.f32 0.0, %v280
  %282 = vmatmul.f32.gmra.mxu0 %v147
  %v283 = vpop.f32.mrf.mxu0
  %v284 = vadd.f32 0.0, %v283
  %285 = vdwg.mxu0
  %v287 = vsel %vm100, %v35, 0
  %v290 = vsel %vm100, %v36, 0
  %v293 = vsel %vm100, %v38, 0
  %v296 = vsel %vm100, %v39, 0
  %v299 = vsel %vm100, %v41, 0
  %v302 = vsel %vm100, %v42, 0
  %v305 = vsel %vm100, %v44, 0
  %v308 = vsel %vm100, %v45, 0
  %v311 = vsel %vm100, %v47, 0
  %v314 = vsel %vm100, %v48, 0
  %v317 = vsel %vm100, %v50, 0
  %v320 = vsel %vm100, %v51, 0
  %v323 = vsel %vm100, %v53, 0
  %v326 = vsel %vm100, %v54, 0
  %v329 = vsel %vm100, %v56, 0
  %v332 = vsel %vm100, %v57, 0
  %v335 = vsel %vm149, %v89, 0
  %v338 = vsel %vm149, %v90, 0
  %340 = vmatpush.msra.mxu0 0.0
  %341 = vmatpush.msra.mxu0 0.0
  %342 = vmatpush.msra.mxu0 0.0
  %343 = vmatpush.msra.mxu0 0.0
  %344 = vmatpush.msra.mxu0 0.0
  %345 = vmatpush.msra.mxu0 0.0
  %346 = vmatpush.msra.mxu0 0.0
  %347 = vmatpush.msra.mxu0 0.0
  %348 = vmatpush.msra.mxu0 0.0
  %349 = vmatpush.msra.mxu0 0.0
  %350 = vmatpush.msra.mxu0 0.0
  %351 = vmatpush.msra.mxu0 0.0
  %352 = vmatpush.msra.mxu0 %v335
  %353 = vmatpush.msra.mxu0 %v87
  %354 = vmatpush.msra.mxu0 %v85
  %355 = vmatpush.msra.mxu0 %v83
  %356 = vmatmul.f32.gmra.mxu0 %v287
  %v357 = vpop.f32.mrf.mxu0
  %v358 = vadd.f32 %v174, %v357
  %359 = vmatmul.f32.gmra.mxu0 %v290
  %v360 = vpop.f32.mrf.mxu0
  %v361 = vadd.f32 %v177, %v360
  %362 = vmatmul.f32.gmra.mxu0 %v293
  %v363 = vpop.f32.mrf.mxu0
  %v364 = vadd.f32 %v180, %v363
  %365 = vmatmul.f32.gmra.mxu0 %v296
  %v366 = vpop.f32.mrf.mxu0
  %v367 = vadd.f32 %v183, %v366
  %368 = vmatmul.f32.gmra.mxu0 %v299
  %v369 = vpop.f32.mrf.mxu0
  %v370 = vadd.f32 %v186, %v369
  %371 = vmatmul.f32.gmra.mxu0 %v302
  %v372 = vpop.f32.mrf.mxu0
  %v373 = vadd.f32 %v189, %v372
  %374 = vmatmul.f32.gmra.mxu0 %v305
  %v375 = vpop.f32.mrf.mxu0
  %v376 = vadd.f32 %v192, %v375
  %377 = vmatmul.f32.gmra.mxu0 %v308
  %v378 = vpop.f32.mrf.mxu0
  %v379 = vadd.f32 %v195, %v378
  %380 = vmatmul.f32.gmra.mxu0 %v311
  %v381 = vpop.f32.mrf.mxu0
  %v382 = vadd.f32 %v198, %v381
  %383 = vmatmul.f32.gmra.mxu0 %v314
  %v384 = vpop.f32.mrf.mxu0
  %v385 = vadd.f32 %v201, %v384
  %386 = vmatmul.f32.gmra.mxu0 %v317
  %v387 = vpop.f32.mrf.mxu0
  %v388 = vadd.f32 %v204, %v387
  %389 = vmatmul.f32.gmra.mxu0 %v320
  %v390 = vpop.f32.mrf.mxu0
  %v391 = vadd.f32 %v207, %v390
  %392 = vmatmul.f32.gmra.mxu0 %v323
  %v393 = vpop.f32.mrf.mxu0
  %v394 = vadd.f32 %v210, %v393
  %395 = vmatmul.f32.gmra.mxu0 %v326
  %v396 = vpop.f32.mrf.mxu0
  %v397 = vadd.f32 %v213, %v396
  %398 = vmatmul.f32.gmra.mxu0 %v329
  %v399 = vpop.f32.mrf.mxu0
  %v400 = vadd.f32 %v216, %v399
  %401 = vmatmul.f32.gmra.mxu0 %v332
  %v402 = vpop.f32.mrf.mxu0
  %v403 = vadd.f32 %v219, %v402
  %404 = vdwg.mxu0
  %405 = vmatpush.msra.mxu0 0.0
  %406 = vmatpush.msra.mxu0 0.0
  %407 = vmatpush.msra.mxu0 0.0
  %408 = vmatpush.msra.mxu0 0.0
  %409 = vmatpush.msra.mxu0 0.0
  %410 = vmatpush.msra.mxu0 0.0
  %411 = vmatpush.msra.mxu0 0.0
  %412 = vmatpush.msra.mxu0 0.0
  %413 = vmatpush.msra.mxu0 0.0
  %414 = vmatpush.msra.mxu0 0.0
  %415 = vmatpush.msra.mxu0 0.0
  %416 = vmatpush.msra.mxu0 0.0
  %417 = vmatpush.msra.mxu0 %v338
  %418 = vmatpush.msra.mxu0 %v88
  %419 = vmatpush.msra.mxu0 %v86
  %420 = vmatpush.msra.mxu0 %v84
  %421 = vmatmul.f32.gmra.mxu0 %v287
  %v422 = vpop.f32.mrf.mxu0
  %v423 = vadd.f32 %v239, %v422
  %424 = vmatmul.f32.gmra.mxu0 %v290
  %v425 = vpop.f32.mrf.mxu0
  %v426 = vadd.f32 %v242, %v425
  %427 = vmatmul.f32.gmra.mxu0 %v293
  %v428 = vpop.f32.mrf.mxu0
  %v429 = vadd.f32 %v245, %v428
  %430 = vmatmul.f32.gmra.mxu0 %v296
  %v431 = vpop.f32.mrf.mxu0
  %v432 = vadd.f32 %v248, %v431
  %433 = vmatmul.f32.gmra.mxu0 %v299
  %v434 = vpop.f32.mrf.mxu0
  %v435 = vadd.f32 %v251, %v434
  %436 = vmatmul.f32.gmra.mxu0 %v302
  %v437 = vpop.f32.mrf.mxu0
  %v438 = vadd.f32 %v254, %v437
  %439 = vmatmul.f32.gmra.mxu0 %v305
  %v440 = vpop.f32.mrf.mxu0
  %v441 = vadd.f32 %v257, %v440
  %442 = vmatmul.f32.gmra.mxu0 %v308
  %v443 = vpop.f32.mrf.mxu0
  %v444 = vadd.f32 %v260, %v443
  %445 = vmatmul.f32.gmra.mxu0 %v311
  %v446 = vpop.f32.mrf.mxu0
  %v447 = vadd.f32 %v263, %v446
  %448 = vmatmul.f32.gmra.mxu0 %v314
  %v449 = vpop.f32.mrf.mxu0
  %v450 = vadd.f32 %v266, %v449
  %451 = vmatmul.f32.gmra.mxu0 %v317
  %v452 = vpop.f32.mrf.mxu0
  %v453 = vadd.f32 %v269, %v452
  %454 = vmatmul.f32.gmra.mxu0 %v320
  %v455 = vpop.f32.mrf.mxu0
  %v456 = vadd.f32 %v272, %v455
  %457 = vmatmul.f32.gmra.mxu0 %v323
  %v458 = vpop.f32.mrf.mxu0
  %v459 = vadd.f32 %v275, %v458
  %460 = vmatmul.f32.gmra.mxu0 %v326
  %v461 = vpop.f32.mrf.mxu0
  %v462 = vadd.f32 %v278, %v461
  %463 = vmatmul.f32.gmra.mxu0 %v329
  %v464 = vpop.f32.mrf.mxu0
  %v465 = vadd.f32 %v281, %v464
  %466 = vmatmul.f32.gmra.mxu0 %v332
  %v467 = vpop.f32.mrf.mxu0
  %v468 = vadd.f32 %v284, %v467
  %469 = vdwg.mxu0
  %vm478 = vcmask 1046528
  %v479 = vrot.slane %v35, 1
  %v480 = vrot.slane %v36, 1
  %v481 = vsel %vm478, %v479, %v480
  %v482 = vrot.slane %v37, 1
  %v483 = vsel %vm478, %v480, %v482
  %v484 = vrot.slane %v38, 1
  %v485 = vrot.slane %v39, 1
  %v486 = vsel %vm478, %v484, %v485
  %v487 = vrot.slane %v40, 1
  %v488 = vsel %vm478, %v485, %v487
  %v489 = vrot.slane %v41, 1
  %v490 = vrot.slane %v42, 1
  %v491 = vsel %vm478, %v489, %v490
  %v492 = vrot.slane %v43, 1
  %v493 = vsel %vm478, %v490, %v492
  %v494 = vrot.slane %v44, 1
  %v495 = vrot.slane %v45, 1
  %v496 = vsel %vm478, %v494, %v495
  %v497 = vrot.slane %v46, 1
  %v498 = vsel %vm478, %v495, %v497
  %v499 = vrot.slane %v47, 1
  %v500 = vrot.slane %v48, 1
  %v501 = vsel %vm478, %v499, %v500
  %v502 = vrot.slane %v49, 1
  %v503 = vsel %vm478, %v500, %v502
  %v504 = vrot.slane %v50, 1
  %v505 = vrot.slane %v51, 1
  %v506 = vsel %vm478, %v504, %v505
  %v507 = vrot.slane %v52, 1
  %v508 = vsel %vm478, %v505, %v507
  %v509 = vrot.slane %v53, 1
  %v510 = vrot.slane %v54, 1
  %v511 = vsel %vm478, %v509, %v510
  %v512 = vrot.slane %v55, 1
  %v513 = vsel %vm478, %v510, %v512
  %v514 = vrot.slane %v56, 1
  %v515 = vrot.slane %v57, 1
  %v516 = vsel %vm478, %v514, %v515
  %v517 = vrot.slane %v58, 1
  %v518 = vsel %vm478, %v515, %v517
  %s519 = scalar_lea.vmem %s2, 128
  %v520 = vld [vmem:[%s519] sm:$0xff]
  %v521 = vld [vmem:[%s519 + $0x8] sm:$0xff]
  %v522 = vld [vmem:[%s519 + $0x10] sm:$0xff]
  %v523 = vld [vmem:[%s519 + $0x18] sm:$0xff]
  %v524 = vld [vmem:[%s519 + $0x20] sm:$0xff]
  %v525 = vld [vmem:[%s519 + $0x28] sm:$0xff]
  %v526 = vld [vmem:[%s519 + $0x30] sm:$0xf]
  %v527 = vld [vmem:[%s519 + $0x38] sm:$0xf]
  %v528 = vsel %vm100, %v481, 0
  %v530 = vsel %vm100, %v483, 0
  %v532 = vsel %vm100, %v486, 0
  %v534 = vsel %vm100, %v488, 0
  %v536 = vsel %vm100, %v491, 0
  %v538 = vsel %vm100, %v493, 0
  %v540 = vsel %vm100, %v496, 0
  %v542 = vsel %vm100, %v498, 0
  %v544 = vsel %vm100, %v501, 0
  %v546 = vsel %vm100, %v503, 0
  %v548 = vsel %vm100, %v506, 0
  %v550 = vsel %vm100, %v508, 0
  %v552 = vsel %vm100, %v511, 0
  %v554 = vsel %vm100, %v513, 0
  %v556 = vsel %vm100, %v516, 0
  %v558 = vsel %vm100, %v518, 0
  %v561 = vsel %vm149, %v526, 0
  %v564 = vsel %vm149, %v527, 0
  %566 = vmatpush.msra.mxu0 0.0
  %567 = vmatpush.msra.mxu0 0.0
  %568 = vmatpush.msra.mxu0 0.0
  %569 = vmatpush.msra.mxu0 0.0
  %570 = vmatpush.msra.mxu0 0.0
  %571 = vmatpush.msra.mxu0 0.0
  %572 = vmatpush.msra.mxu0 0.0
  %573 = vmatpush.msra.mxu0 0.0
  %574 = vmatpush.msra.mxu0 0.0
  %575 = vmatpush.msra.mxu0 0.0
  %576 = vmatpush.msra.mxu0 0.0
  %577 = vmatpush.msra.mxu0 0.0
  %578 = vmatpush.msra.mxu0 %v561
  %579 = vmatpush.msra.mxu0 %v524
  %580 = vmatpush.msra.mxu0 %v522
  %581 = vmatpush.msra.mxu0 %v520
  %582 = vmatmul.f32.gmra.mxu0 %v528
  %v583 = vpop.f32.mrf.mxu0
  %v584 = vadd.f32 0.0, %v583
  %585 = vmatmul.f32.gmra.mxu0 %v530
  %v586 = vpop.f32.mrf.mxu0
  %v587 = vadd.f32 0.0, %v586
  %588 = vmatmul.f32.gmra.mxu0 %v532
  %v589 = vpop.f32.mrf.mxu0
  %v590 = vadd.f32 0.0, %v589
  %591 = vmatmul.f32.gmra.mxu0 %v534
  %v592 = vpop.f32.mrf.mxu0
  %v593 = vadd.f32 0.0, %v592
  %594 = vmatmul.f32.gmra.mxu0 %v536
  %v595 = vpop.f32.mrf.mxu0
  %v596 = vadd.f32 0.0, %v595
  %597 = vmatmul.f32.gmra.mxu0 %v538
  %v598 = vpop.f32.mrf.mxu0
  %v599 = vadd.f32 0.0, %v598
  %600 = vmatmul.f32.gmra.mxu0 %v540
  %v601 = vpop.f32.mrf.mxu0
  %v602 = vadd.f32 0.0, %v601
  %603 = vmatmul.f32.gmra.mxu0 %v542
  %v604 = vpop.f32.mrf.mxu0
  %v605 = vadd.f32 0.0, %v604
  %606 = vmatmul.f32.gmra.mxu0 %v544
  %v607 = vpop.f32.mrf.mxu0
  %v608 = vadd.f32 0.0, %v607
  %609 = vmatmul.f32.gmra.mxu0 %v546
  %v610 = vpop.f32.mrf.mxu0
  %v611 = vadd.f32 0.0, %v610
  %612 = vmatmul.f32.gmra.mxu0 %v548
  %v613 = vpop.f32.mrf.mxu0
  %v614 = vadd.f32 0.0, %v613
  %615 = vmatmul.f32.gmra.mxu0 %v550
  %v616 = vpop.f32.mrf.mxu0
  %v617 = vadd.f32 0.0, %v616
  %618 = vmatmul.f32.gmra.mxu0 %v552
  %v619 = vpop.f32.mrf.mxu0
  %v620 = vadd.f32 0.0, %v619
  %621 = vmatmul.f32.gmra.mxu0 %v554
  %v622 = vpop.f32.mrf.mxu0
  %v623 = vadd.f32 0.0, %v622
  %624 = vmatmul.f32.gmra.mxu0 %v556
  %v625 = vpop.f32.mrf.mxu0
  %v626 = vadd.f32 0.0, %v625
  %627 = vmatmul.f32.gmra.mxu0 %v558
  %v628 = vpop.f32.mrf.mxu0
  %v629 = vadd.f32 0.0, %v628
  %630 = vdwg.mxu0
  %631 = vmatpush.msra.mxu0 0.0
  %632 = vmatpush.msra.mxu0 0.0
  %633 = vmatpush.msra.mxu0 0.0
  %634 = vmatpush.msra.mxu0 0.0
  %635 = vmatpush.msra.mxu0 0.0
  %636 = vmatpush.msra.mxu0 0.0
  %637 = vmatpush.msra.mxu0 0.0
  %638 = vmatpush.msra.mxu0 0.0
  %639 = vmatpush.msra.mxu0 0.0
  %640 = vmatpush.msra.mxu0 0.0
  %641 = vmatpush.msra.mxu0 0.0
  %642 = vmatpush.msra.mxu0 0.0
  %643 = vmatpush.msra.mxu0 %v564
  %644 = vmatpush.msra.mxu0 %v525
  %645 = vmatpush.msra.mxu0 %v523
  %646 = vmatpush.msra.mxu0 %v521
  %647 = vmatmul.f32.gmra.mxu0 %v528
  %v648 = vpop.f32.mrf.mxu0
  %v649 = vadd.f32 0.0, %v648
  %650 = vmatmul.f32.gmra.mxu0 %v530
  %v651 = vpop.f32.mrf.mxu0
  %v652 = vadd.f32 0.0, %v651
  %653 = vmatmul.f32.gmra.mxu0 %v532
  %v654 = vpop.f32.mrf.mxu0
  %v655 = vadd.f32 0.0, %v654
  %656 = vmatmul.f32.gmra.mxu0 %v534
  %v657 = vpop.f32.mrf.mxu0
  %v658 = vadd.f32 0.0, %v657
  %659 = vmatmul.f32.gmra.mxu0 %v536
  %v660 = vpop.f32.mrf.mxu0
  %v661 = vadd.f32 0.0, %v660
  %662 = vmatmul.f32.gmra.mxu0 %v538
  %v663 = vpop.f32.mrf.mxu0
  %v664 = vadd.f32 0.0, %v663
  %665 = vmatmul.f32.gmra.mxu0 %v540
  %v666 = vpop.f32.mrf.mxu0
  %v667 = vadd.f32 0.0, %v666
  %668 = vmatmul.f32.gmra.mxu0 %v542
  %v669 = vpop.f32.mrf.mxu0
  %v670 = vadd.f32 0.0, %v669
  %671 = vmatmul.f32.gmra.mxu0 %v544
  %v672 = vpop.f32.mrf.mxu0
  %v673 = vadd.f32 0.0, %v672
  %674 = vmatmul.f32.gmra.mxu0 %v546
  %v675 = vpop.f32.mrf.mxu0
  %v676 = vadd.f32 0.0, %v675
  %677 = vmatmul.f32.gmra.mxu0 %v548
  %v678 = vpop.f32.mrf.mxu0
  %v679 = vadd.f32 0.0, %v678
  %680 = vmatmul.f32.gmra.mxu0 %v550
  %v681 = vpop.f32.mrf.mxu0
  %v682 = vadd.f32 0.0, %v681
  %683 = vmatmul.f32.gmra.mxu0 %v552
  %v684 = vpop.f32.mrf.mxu0
  %v685 = vadd.f32 0.0, %v684
  %686 = vmatmul.f32.gmra.mxu0 %v554
  %v687 = vpop.f32.mrf.mxu0
  %v688 = vadd.f32 0.0, %v687
  %689 = vmatmul.f32.gmra.mxu0 %v556
  %v690 = vpop.f32.mrf.mxu0
  %v691 = vadd.f32 0.0, %v690
  %692 = vmatmul.f32.gmra.mxu0 %v558
  %v693 = vpop.f32.mrf.mxu0
  %v694 = vadd.f32 0.0, %v693
  %695 = vdwg.mxu0
  %v696 = vadd.f32 %v358, %v584
  %v697 = vadd.f32 %v423, %v649
  %v698 = vadd.f32 %v361, %v587
  %v699 = vadd.f32 %v426, %v652
  %v700 = vadd.f32 %v364, %v590
  %v701 = vadd.f32 %v429, %v655
  %v702 = vadd.f32 %v367, %v593
  %v703 = vadd.f32 %v432, %v658
  %v704 = vadd.f32 %v370, %v596
  %v705 = vadd.f32 %v435, %v661
  %v706 = vadd.f32 %v373, %v599
  %v707 = vadd.f32 %v438, %v664
  %v708 = vadd.f32 %v376, %v602
  %v709 = vadd.f32 %v441, %v667
  %v710 = vadd.f32 %v379, %v605
  %v711 = vadd.f32 %v444, %v670
  %v712 = vadd.f32 %v382, %v608
  %v713 = vadd.f32 %v447, %v673
  %v714 = vadd.f32 %v385, %v611
  %v715 = vadd.f32 %v450, %v676
  %v716 = vadd.f32 %v388, %v614
  %v717 = vadd.f32 %v453, %v679
  %v718 = vadd.f32 %v391, %v617
  %v719 = vadd.f32 %v456, %v682
  %v720 = vadd.f32 %v394, %v620
  %v721 = vadd.f32 %v459, %v685
  %v722 = vadd.f32 %v397, %v623
  %v723 = vadd.f32 %v462, %v688
  %v724 = vadd.f32 %v400, %v626
  %v725 = vadd.f32 %v465, %v691
  %v726 = vadd.f32 %v403, %v629
  %v727 = vadd.f32 %v468, %v694
  %v736 = vrot.slane %v59, 1
  %v737 = vrot.slane %v60, 1
  %v738 = vsel %vm478, %v736, %v737
  %v739 = vrot.slane %v61, 1
  %v740 = vsel %vm478, %v737, %v739
  %v741 = vrot.slane %v62, 1
  %v742 = vrot.slane %v63, 1
  %v743 = vsel %vm478, %v741, %v742
  %v744 = vrot.slane %v64, 1
  %v745 = vsel %vm478, %v742, %v744
  %v746 = vrot.slane %v65, 1
  %v747 = vrot.slane %v66, 1
  %v748 = vsel %vm478, %v746, %v747
  %v749 = vrot.slane %v67, 1
  %v750 = vsel %vm478, %v747, %v749
  %v751 = vrot.slane %v68, 1
  %v752 = vrot.slane %v69, 1
  %v753 = vsel %vm478, %v751, %v752
  %v754 = vrot.slane %v70, 1
  %v755 = vsel %vm478, %v752, %v754
  %v756 = vrot.slane %v71, 1
  %v757 = vrot.slane %v72, 1
  %v758 = vsel %vm478, %v756, %v757
  %v759 = vrot.slane %v73, 1
  %v760 = vsel %vm478, %v757, %v759
  %v761 = vrot.slane %v74, 1
  %v762 = vrot.slane %v75, 1
  %v763 = vsel %vm478, %v761, %v762
  %v764 = vrot.slane %v76, 1
  %v765 = vsel %vm478, %v762, %v764
  %v766 = vrot.slane %v77, 1
  %v767 = vrot.slane %v78, 1
  %v768 = vsel %vm478, %v766, %v767
  %v769 = vrot.slane %v79, 1
  %v770 = vsel %vm478, %v767, %v769
  %v771 = vrot.slane %v80, 1
  %v772 = vrot.slane %v81, 1
  %v773 = vsel %vm478, %v771, %v772
  %v774 = vrot.slane %v82, 1
  %v775 = vsel %vm478, %v772, %v774
  %s776 = scalar_lea.vmem %s2, 192
  %v777 = vld [vmem:[%s776] sm:$0xff]
  %v778 = vld [vmem:[%s776 + $0x8] sm:$0xff]
  %v779 = vld [vmem:[%s776 + $0x10] sm:$0xff]
  %v780 = vld [vmem:[%s776 + $0x18] sm:$0xff]
  %v781 = vld [vmem:[%s776 + $0x20] sm:$0xff]
  %v782 = vld [vmem:[%s776 + $0x28] sm:$0xff]
  %v783 = vld [vmem:[%s776 + $0x30] sm:$0xf]
  %v784 = vld [vmem:[%s776 + $0x38] sm:$0xf]
  %v785 = vsel %vm100, %v738, 0
  %v787 = vsel %vm100, %v740, 0
  %v789 = vsel %vm100, %v743, 0
  %v791 = vsel %vm100, %v745, 0
  %v793 = vsel %vm100, %v748, 0
  %v795 = vsel %vm100, %v750, 0
  %v797 = vsel %vm100, %v753, 0
  %v799 = vsel %vm100, %v755, 0
  %v801 = vsel %vm100, %v758, 0
  %v803 = vsel %vm100, %v760, 0
  %v805 = vsel %vm100, %v763, 0
  %v807 = vsel %vm100, %v765, 0
  %v809 = vsel %vm100, %v768, 0
  %v811 = vsel %vm100, %v770, 0
  %v813 = vsel %vm100, %v773, 0
  %v815 = vsel %vm100, %v775, 0
  %v818 = vsel %vm149, %v783, 0
  %v821 = vsel %vm149, %v784, 0
  %823 = vmatpush.msra.mxu0 0.0
  %824 = vmatpush.msra.mxu0 0.0
  %825 = vmatpush.msra.mxu0 0.0
  %826 = vmatpush.msra.mxu0 0.0
  %827 = vmatpush.msra.mxu0 0.0
  %828 = vmatpush.msra.mxu0 0.0
  %829 = vmatpush.msra.mxu0 0.0
  %830 = vmatpush.msra.mxu0 0.0
  %831 = vmatpush.msra.mxu0 0.0
  %832 = vmatpush.msra.mxu0 0.0
  %833 = vmatpush.msra.mxu0 0.0
  %834 = vmatpush.msra.mxu0 0.0
  %835 = vmatpush.msra.mxu0 %v818
  %836 = vmatpush.msra.mxu0 %v781
  %837 = vmatpush.msra.mxu0 %v779
  %838 = vmatpush.msra.mxu0 %v777
  %839 = vmatmul.f32.gmra.mxu0 %v785
  %v840 = vpop.f32.mrf.mxu0
  %v841 = vadd.f32 0.0, %v840
  %842 = vmatmul.f32.gmra.mxu0 %v787
  %v843 = vpop.f32.mrf.mxu0
  %v844 = vadd.f32 0.0, %v843
  %845 = vmatmul.f32.gmra.mxu0 %v789
  %v846 = vpop.f32.mrf.mxu0
  %v847 = vadd.f32 0.0, %v846
  %848 = vmatmul.f32.gmra.mxu0 %v791
  %v849 = vpop.f32.mrf.mxu0
  %v850 = vadd.f32 0.0, %v849
  %851 = vmatmul.f32.gmra.mxu0 %v793
  %v852 = vpop.f32.mrf.mxu0
  %v853 = vadd.f32 0.0, %v852
  %854 = vmatmul.f32.gmra.mxu0 %v795
  %v855 = vpop.f32.mrf.mxu0
  %v856 = vadd.f32 0.0, %v855
  %857 = vmatmul.f32.gmra.mxu0 %v797
  %v858 = vpop.f32.mrf.mxu0
  %v859 = vadd.f32 0.0, %v858
  %860 = vmatmul.f32.gmra.mxu0 %v799
  %v861 = vpop.f32.mrf.mxu0
  %v862 = vadd.f32 0.0, %v861
  %863 = vmatmul.f32.gmra.mxu0 %v801
  %v864 = vpop.f32.mrf.mxu0
  %v865 = vadd.f32 0.0, %v864
  %866 = vmatmul.f32.gmra.mxu0 %v803
  %v867 = vpop.f32.mrf.mxu0
  %v868 = vadd.f32 0.0, %v867
  %869 = vmatmul.f32.gmra.mxu0 %v805
  %v870 = vpop.f32.mrf.mxu0
  %v871 = vadd.f32 0.0, %v870
  %872 = vmatmul.f32.gmra.mxu0 %v807
  %v873 = vpop.f32.mrf.mxu0
  %v874 = vadd.f32 0.0, %v873
  %875 = vmatmul.f32.gmra.mxu0 %v809
  %v876 = vpop.f32.mrf.mxu0
  %v877 = vadd.f32 0.0, %v876
  %878 = vmatmul.f32.gmra.mxu0 %v811
  %v879 = vpop.f32.mrf.mxu0
  %v880 = vadd.f32 0.0, %v879
  %881 = vmatmul.f32.gmra.mxu0 %v813
  %v882 = vpop.f32.mrf.mxu0
  %v883 = vadd.f32 0.0, %v882
  %884 = vmatmul.f32.gmra.mxu0 %v815
  %v885 = vpop.f32.mrf.mxu0
  %v886 = vadd.f32 0.0, %v885
  %887 = vdwg.mxu0
  %888 = vmatpush.msra.mxu0 0.0
  %889 = vmatpush.msra.mxu0 0.0
  %890 = vmatpush.msra.mxu0 0.0
  %891 = vmatpush.msra.mxu0 0.0
  %892 = vmatpush.msra.mxu0 0.0
  %893 = vmatpush.msra.mxu0 0.0
  %894 = vmatpush.msra.mxu0 0.0
  %895 = vmatpush.msra.mxu0 0.0
  %896 = vmatpush.msra.mxu0 0.0
  %897 = vmatpush.msra.mxu0 0.0
  %898 = vmatpush.msra.mxu0 0.0
  %899 = vmatpush.msra.mxu0 0.0
  %900 = vmatpush.msra.mxu0 %v821
  %901 = vmatpush.msra.mxu0 %v782
  %902 = vmatpush.msra.mxu0 %v780
  %903 = vmatpush.msra.mxu0 %v778
  %904 = vmatmul.f32.gmra.mxu0 %v785
  %v905 = vpop.f32.mrf.mxu0
  %v906 = vadd.f32 0.0, %v905
  %907 = vmatmul.f32.gmra.mxu0 %v787
  %v908 = vpop.f32.mrf.mxu0
  %v909 = vadd.f32 0.0, %v908
  %910 = vmatmul.f32.gmra.mxu0 %v789
  %v911 = vpop.f32.mrf.mxu0
  %v912 = vadd.f32 0.0, %v911
  %913 = vmatmul.f32.gmra.mxu0 %v791
  %v914 = vpop.f32.mrf.mxu0
  %v915 = vadd.f32 0.0, %v914
  %916 = vmatmul.f32.gmra.mxu0 %v793
  %v917 = vpop.f32.mrf.mxu0
  %v918 = vadd.f32 0.0, %v917
  %919 = vmatmul.f32.gmra.mxu0 %v795
  %v920 = vpop.f32.mrf.mxu0
  %v921 = vadd.f32 0.0, %v920
  %922 = vmatmul.f32.gmra.mxu0 %v797
  %v923 = vpop.f32.mrf.mxu0
  %v924 = vadd.f32 0.0, %v923
  %925 = vmatmul.f32.gmra.mxu0 %v799
  %v926 = vpop.f32.mrf.mxu0
  %v927 = vadd.f32 0.0, %v926
  %928 = vmatmul.f32.gmra.mxu0 %v801
  %v929 = vpop.f32.mrf.mxu0
  %v930 = vadd.f32 0.0, %v929
  %931 = vmatmul.f32.gmra.mxu0 %v803
  %v932 = vpop.f32.mrf.mxu0
  %v933 = vadd.f32 0.0, %v932
  %934 = vmatmul.f32.gmra.mxu0 %v805
  %v935 = vpop.f32.mrf.mxu0
  %v936 = vadd.f32 0.0, %v935
  %937 = vmatmul.f32.gmra.mxu0 %v807
  %v938 = vpop.f32.mrf.mxu0
  %v939 = vadd.f32 0.0, %v938
  %940 = vmatmul.f32.gmra.mxu0 %v809
  %v941 = vpop.f32.mrf.mxu0
  %v942 = vadd.f32 0.0, %v941
  %943 = vmatmul.f32.gmra.mxu0 %v811
  %v944 = vpop.f32.mrf.mxu0
  %v945 = vadd.f32 0.0, %v944
  %946 = vmatmul.f32.gmra.mxu0 %v813
  %v947 = vpop.f32.mrf.mxu0
  %v948 = vadd.f32 0.0, %v947
  %949 = vmatmul.f32.gmra.mxu0 %v815
  %v950 = vpop.f32.mrf.mxu0
  %v951 = vadd.f32 0.0, %v950
  %952 = vdwg.mxu0
  %v953 = vadd.f32 %v696, %v841
  %v954 = vadd.f32 %v697, %v906
  %v955 = vadd.f32 %v698, %v844
  %v956 = vadd.f32 %v699, %v909
  %v957 = vadd.f32 %v700, %v847
  %v958 = vadd.f32 %v701, %v912
  %v959 = vadd.f32 %v702, %v850
  %v960 = vadd.f32 %v703, %v915
  %v961 = vadd.f32 %v704, %v853
  %v962 = vadd.f32 %v705, %v918
  %v963 = vadd.f32 %v706, %v856
  %v964 = vadd.f32 %v707, %v921
  %v965 = vadd.f32 %v708, %v859
  %v966 = vadd.f32 %v709, %v924
  %v967 = vadd.f32 %v710, %v862
  %v968 = vadd.f32 %v711, %v927
  %v969 = vadd.f32 %v712, %v865
  %v970 = vadd.f32 %v713, %v930
  %v971 = vadd.f32 %v714, %v868
  %v972 = vadd.f32 %v715, %v933
  %v973 = vadd.f32 %v716, %v871
  %v974 = vadd.f32 %v717, %v936
  %v975 = vadd.f32 %v718, %v874
  %v976 = vadd.f32 %v719, %v939
  %v977 = vadd.f32 %v720, %v877
  %v978 = vadd.f32 %v721, %v942
  %v979 = vadd.f32 %v722, %v880
  %v980 = vadd.f32 %v723, %v945
  %v981 = vadd.f32 %v724, %v883
  %v982 = vadd.f32 %v725, %v948
  %v983 = vadd.f32 %v726, %v886
  %v984 = vadd.f32 %v727, %v951
  %vm985 = vcmask 1045504
  %v986 = vrot.slane %v35, 2
  %v987 = vrot.slane %v36, 2
  %v988 = vsel %vm985, %v986, %v987
  %v989 = vrot.slane %v37, 2
  %v990 = vsel %vm985, %v987, %v989
  %v991 = vrot.slane %v38, 2
  %v992 = vrot.slane %v39, 2
  %v993 = vsel %vm985, %v991, %v992
  %v994 = vrot.slane %v40, 2
  %v995 = vsel %vm985, %v992, %v994
  %v996 = vrot.slane %v41, 2
  %v997 = vrot.slane %v42, 2
  %v998 = vsel %vm985, %v996, %v997
  %v999 = vrot.slane %v43, 2
  %v1000 = vsel %vm985, %v997, %v999
  %v1001 = vrot.slane %v44, 2
  %v1002 = vrot.slane %v45, 2
  %v1003 = vsel %vm985, %v1001, %v1002
  %v1004 = vrot.slane %v46, 2
  %v1005 = vsel %vm985, %v1002, %v1004
  %v1006 = vrot.slane %v47, 2
  %v1007 = vrot.slane %v48, 2
  %v1008 = vsel %vm985, %v1006, %v1007
  %v1009 = vrot.slane %v49, 2
  %v1010 = vsel %vm985, %v1007, %v1009
  %v1011 = vrot.slane %v50, 2
  %v1012 = vrot.slane %v51, 2
  %v1013 = vsel %vm985, %v1011, %v1012
  %v1014 = vrot.slane %v52, 2
  %v1015 = vsel %vm985, %v1012, %v1014
  %v1016 = vrot.slane %v53, 2
  %v1017 = vrot.slane %v54, 2
  %v1018 = vsel %vm985, %v1016, %v1017
  %v1019 = vrot.slane %v55, 2
  %v1020 = vsel %vm985, %v1017, %v1019
  %v1021 = vrot.slane %v56, 2
  %v1022 = vrot.slane %v57, 2
  %v1023 = vsel %vm985, %v1021, %v1022
  %v1024 = vrot.slane %v58, 2
  %v1025 = vsel %vm985, %v1022, %v1024
  %s1026 = scalar_lea.vmem %s2, 256
  %v1027 = vld [vmem:[%s1026] sm:$0xff]
  %v1028 = vld [vmem:[%s1026 + $0x8] sm:$0xff]
  %v1029 = vld [vmem:[%s1026 + $0x10] sm:$0xff]
  %v1030 = vld [vmem:[%s1026 + $0x18] sm:$0xff]
  %v1031 = vld [vmem:[%s1026 + $0x20] sm:$0xff]
  %v1032 = vld [vmem:[%s1026 + $0x28] sm:$0xff]
  %v1033 = vld [vmem:[%s1026 + $0x30] sm:$0xf]
  %v1034 = vld [vmem:[%s1026 + $0x38] sm:$0xf]
  %v1035 = vsel %vm100, %v988, 0
  %v1037 = vsel %vm100, %v990, 0
  %v1039 = vsel %vm100, %v993, 0
  %v1041 = vsel %vm100, %v995, 0
  %v1043 = vsel %vm100, %v998, 0
  %v1045 = vsel %vm100, %v1000, 0
  %v1047 = vsel %vm100, %v1003, 0
  %v1049 = vsel %vm100, %v1005, 0
  %v1051 = vsel %vm100, %v1008, 0
  %v1053 = vsel %vm100, %v1010, 0
  %v1055 = vsel %vm100, %v1013, 0
  %v1057 = vsel %vm100, %v1015, 0
  %v1059 = vsel %vm100, %v1018, 0
  %v1061 = vsel %vm100, %v1020, 0
  %v1063 = vsel %vm100, %v1023, 0
  %v1065 = vsel %vm100, %v1025, 0
  %v1068 = vsel %vm149, %v1033, 0
  %v1071 = vsel %vm149, %v1034, 0
  %1073 = vmatpush.msra.mxu0 0.0
  %1074 = vmatpush.msra.mxu0 0.0
  %1075 = vmatpush.msra.mxu0 0.0
  %1076 = vmatpush.msra.mxu0 0.0
  %1077 = vmatpush.msra.mxu0 0.0
  %1078 = vmatpush.msra.mxu0 0.0
  %1079 = vmatpush.msra.mxu0 0.0
  %1080 = vmatpush.msra.mxu0 0.0
  %1081 = vmatpush.msra.mxu0 0.0
  %1082 = vmatpush.msra.mxu0 0.0
  %1083 = vmatpush.msra.mxu0 0.0
  %1084 = vmatpush.msra.mxu0 0.0
  %1085 = vmatpush.msra.mxu0 %v1068
  %1086 = vmatpush.msra.mxu0 %v1031
  %1087 = vmatpush.msra.mxu0 %v1029
  %1088 = vmatpush.msra.mxu0 %v1027
  %1089 = vmatmul.f32.gmra.mxu0 %v1035
  %v1090 = vpop.f32.mrf.mxu0
  %v1091 = vadd.f32 0.0, %v1090
  %1092 = vmatmul.f32.gmra.mxu0 %v1037
  %v1093 = vpop.f32.mrf.mxu0
  %v1094 = vadd.f32 0.0, %v1093
  %1095 = vmatmul.f32.gmra.mxu0 %v1039
  %v1096 = vpop.f32.mrf.mxu0
  %v1097 = vadd.f32 0.0, %v1096
  %1098 = vmatmul.f32.gmra.mxu0 %v1041
  %v1099 = vpop.f32.mrf.mxu0
  %v1100 = vadd.f32 0.0, %v1099
  %1101 = vmatmul.f32.gmra.mxu0 %v1043
  %v1102 = vpop.f32.mrf.mxu0
  %v1103 = vadd.f32 0.0, %v1102
  %1104 = vmatmul.f32.gmra.mxu0 %v1045
  %v1105 = vpop.f32.mrf.mxu0
  %v1106 = vadd.f32 0.0, %v1105
  %1107 = vmatmul.f32.gmra.mxu0 %v1047
  %v1108 = vpop.f32.mrf.mxu0
  %v1109 = vadd.f32 0.0, %v1108
  %1110 = vmatmul.f32.gmra.mxu0 %v1049
  %v1111 = vpop.f32.mrf.mxu0
  %v1112 = vadd.f32 0.0, %v1111
  %1113 = vmatmul.f32.gmra.mxu0 %v1051
  %v1114 = vpop.f32.mrf.mxu0
  %v1115 = vadd.f32 0.0, %v1114
  %1116 = vmatmul.f32.gmra.mxu0 %v1053
  %v1117 = vpop.f32.mrf.mxu0
  %v1118 = vadd.f32 0.0, %v1117
  %1119 = vmatmul.f32.gmra.mxu0 %v1055
  %v1120 = vpop.f32.mrf.mxu0
  %v1121 = vadd.f32 0.0, %v1120
  %1122 = vmatmul.f32.gmra.mxu0 %v1057
  %v1123 = vpop.f32.mrf.mxu0
  %v1124 = vadd.f32 0.0, %v1123
  %1125 = vmatmul.f32.gmra.mxu0 %v1059
  %v1126 = vpop.f32.mrf.mxu0
  %v1127 = vadd.f32 0.0, %v1126
  %1128 = vmatmul.f32.gmra.mxu0 %v1061
  %v1129 = vpop.f32.mrf.mxu0
  %v1130 = vadd.f32 0.0, %v1129
  %1131 = vmatmul.f32.gmra.mxu0 %v1063
  %v1132 = vpop.f32.mrf.mxu0
  %v1133 = vadd.f32 0.0, %v1132
  %1134 = vmatmul.f32.gmra.mxu0 %v1065
  %v1135 = vpop.f32.mrf.mxu0
  %v1136 = vadd.f32 0.0, %v1135
  %1137 = vdwg.mxu0
  %1138 = vmatpush.msra.mxu0 0.0
  %1139 = vmatpush.msra.mxu0 0.0
  %1140 = vmatpush.msra.mxu0 0.0
  %1141 = vmatpush.msra.mxu0 0.0
  %1142 = vmatpush.msra.mxu0 0.0
  %1143 = vmatpush.msra.mxu0 0.0
  %1144 = vmatpush.msra.mxu0 0.0
  %1145 = vmatpush.msra.mxu0 0.0
  %1146 = vmatpush.msra.mxu0 0.0
  %1147 = vmatpush.msra.mxu0 0.0
  %1148 = vmatpush.msra.mxu0 0.0
  %1149 = vmatpush.msra.mxu0 0.0
  %1150 = vmatpush.msra.mxu0 %v1071
  %1151 = vmatpush.msra.mxu0 %v1032
  %1152 = vmatpush.msra.mxu0 %v1030
  %1153 = vmatpush.msra.mxu0 %v1028
  %1154 = vmatmul.f32.gmra.mxu0 %v1035
  %v1155 = vpop.f32.mrf.mxu0
  %v1156 = vadd.f32 0.0, %v1155
  %1157 = vmatmul.f32.gmra.mxu0 %v1037
  %v1158 = vpop.f32.mrf.mxu0
  %v1159 = vadd.f32 0.0, %v1158
  %1160 = vmatmul.f32.gmra.mxu0 %v1039
  %v1161 = vpop.f32.mrf.mxu0
  %v1162 = vadd.f32 0.0, %v1161
  %1163 = vmatmul.f32.gmra.mxu0 %v1041
  %v1164 = vpop.f32.mrf.mxu0
  %v1165 = vadd.f32 0.0, %v1164
  %1166 = vmatmul.f32.gmra.mxu0 %v1043
  %v1167 = vpop.f32.mrf.mxu0
  %v1168 = vadd.f32 0.0, %v1167
  %1169 = vmatmul.f32.gmra.mxu0 %v1045
  %v1170 = vpop.f32.mrf.mxu0
  %v1171 = vadd.f32 0.0, %v1170
  %1172 = vmatmul.f32.gmra.mxu0 %v1047
  %v1173 = vpop.f32.mrf.mxu0
  %v1174 = vadd.f32 0.0, %v1173
  %1175 = vmatmul.f32.gmra.mxu0 %v1049
  %v1176 = vpop.f32.mrf.mxu0
  %v1177 = vadd.f32 0.0, %v1176
  %1178 = vmatmul.f32.gmra.mxu0 %v1051
  %v1179 = vpop.f32.mrf.mxu0
  %v1180 = vadd.f32 0.0, %v1179
  %1181 = vmatmul.f32.gmra.mxu0 %v1053
  %v1182 = vpop.f32.mrf.mxu0
  %v1183 = vadd.f32 0.0, %v1182
  %1184 = vmatmul.f32.gmra.mxu0 %v1055
  %v1185 = vpop.f32.mrf.mxu0
  %v1186 = vadd.f32 0.0, %v1185
  %1187 = vmatmul.f32.gmra.mxu0 %v1057
  %v1188 = vpop.f32.mrf.mxu0
  %v1189 = vadd.f32 0.0, %v1188
  %1190 = vmatmul.f32.gmra.mxu0 %v1059
  %v1191 = vpop.f32.mrf.mxu0
  %v1192 = vadd.f32 0.0, %v1191
  %1193 = vmatmul.f32.gmra.mxu0 %v1061
  %v1194 = vpop.f32.mrf.mxu0
  %v1195 = vadd.f32 0.0, %v1194
  %1196 = vmatmul.f32.gmra.mxu0 %v1063
  %v1197 = vpop.f32.mrf.mxu0
  %v1198 = vadd.f32 0.0, %v1197
  %1199 = vmatmul.f32.gmra.mxu0 %v1065
  %v1200 = vpop.f32.mrf.mxu0
  %v1201 = vadd.f32 0.0, %v1200
  %1202 = vdwg.mxu0
  %v1203 = vadd.f32 %v953, %v1091
  %v1204 = vadd.f32 %v954, %v1156
  %v1205 = vadd.f32 %v955, %v1094
  %v1206 = vadd.f32 %v956, %v1159
  %v1207 = vadd.f32 %v957, %v1097
  %v1208 = vadd.f32 %v958, %v1162
  %v1209 = vadd.f32 %v959, %v1100
  %v1210 = vadd.f32 %v960, %v1165
  %v1211 = vadd.f32 %v961, %v1103
  %v1212 = vadd.f32 %v962, %v1168
  %v1213 = vadd.f32 %v963, %v1106
  %v1214 = vadd.f32 %v964, %v1171
  %v1215 = vadd.f32 %v965, %v1109
  %v1216 = vadd.f32 %v966, %v1174
  %v1217 = vadd.f32 %v967, %v1112
  %v1218 = vadd.f32 %v968, %v1177
  %v1219 = vadd.f32 %v969, %v1115
  %v1220 = vadd.f32 %v970, %v1180
  %v1221 = vadd.f32 %v971, %v1118
  %v1222 = vadd.f32 %v972, %v1183
  %v1223 = vadd.f32 %v973, %v1121
  %v1224 = vadd.f32 %v974, %v1186
  %v1225 = vadd.f32 %v975, %v1124
  %v1226 = vadd.f32 %v976, %v1189
  %v1227 = vadd.f32 %v977, %v1127
  %v1228 = vadd.f32 %v978, %v1192
  %v1229 = vadd.f32 %v979, %v1130
  %v1230 = vadd.f32 %v980, %v1195
  %v1231 = vadd.f32 %v981, %v1133
  %v1232 = vadd.f32 %v982, %v1198
  %v1233 = vadd.f32 %v983, %v1136
  %v1234 = vadd.f32 %v984, %v1201
  %v1235 = vld [vmem:[%s3] sm:$0x3]
  %v1237 = vperm.slane %v1235, 0
  %v1238 = vperm.slane %v1235, 1
  %v1241 = vadd.f32 %v1203, %v1237
  %v1242 = vadd.f32 %v1204, %v1238
  %v1243 = vadd.f32 %v1205, %v1237
  %v1244 = vadd.f32 %v1206, %v1238
  %v1245 = vadd.f32 %v1207, %v1237
  %v1246 = vadd.f32 %v1208, %v1238
  %v1247 = vadd.f32 %v1209, %v1237
  %v1248 = vadd.f32 %v1210, %v1238
  %v1249 = vadd.f32 %v1211, %v1237
  %v1250 = vadd.f32 %v1212, %v1238
  %v1251 = vadd.f32 %v1213, %v1237
  %v1252 = vadd.f32 %v1214, %v1238
  %v1253 = vadd.f32 %v1215, %v1237
  %v1254 = vadd.f32 %v1216, %v1238
  %v1255 = vadd.f32 %v1217, %v1237
  %v1256 = vadd.f32 %v1218, %v1238
  %v1257 = vadd.f32 %v1219, %v1237
  %v1258 = vadd.f32 %v1220, %v1238
  %v1259 = vadd.f32 %v1221, %v1237
  %v1260 = vadd.f32 %v1222, %v1238
  %v1261 = vadd.f32 %v1223, %v1237
  %v1262 = vadd.f32 %v1224, %v1238
  %v1263 = vadd.f32 %v1225, %v1237
  %v1264 = vadd.f32 %v1226, %v1238
  %v1265 = vadd.f32 %v1227, %v1237
  %v1266 = vadd.f32 %v1228, %v1238
  %v1267 = vadd.f32 %v1229, %v1237
  %v1268 = vadd.f32 %v1230, %v1238
  %v1269 = vadd.f32 %v1231, %v1237
  %v1270 = vadd.f32 %v1232, %v1238
  %v1271 = vadd.f32 %v1233, %v1237
  %v1272 = vadd.f32 %v1234, %v1238
  %v1273 = vmax.f32 %v1241, 0.0
  %v1274 = vmax.f32 %v1242, 0.0
  %v1275 = vmax.f32 %v1243, 0.0
  %v1276 = vmax.f32 %v1244, 0.0
  %v1277 = vmax.f32 %v1245, 0.0
  %v1278 = vmax.f32 %v1246, 0.0
  %v1279 = vmax.f32 %v1247, 0.0
  %v1280 = vmax.f32 %v1248, 0.0
  %v1281 = vmax.f32 %v1249, 0.0
  %v1282 = vmax.f32 %v1250, 0.0
  %v1283 = vmax.f32 %v1251, 0.0
  %v1284 = vmax.f32 %v1252, 0.0
  %v1285 = vmax.f32 %v1253, 0.0
  %v1286 = vmax.f32 %v1254, 0.0
  %v1287 = vmax.f32 %v1255, 0.0
  %v1288 = vmax.f32 %v1256, 0.0
  %v1289 = vmax.f32 %v1257, 0.0
  %v1290 = vmax.f32 %v1258, 0.0
  %v1291 = vmax.f32 %v1259, 0.0
  %v1292 = vmax.f32 %v1260, 0.0
  %v1293 = vmax.f32 %v1261, 0.0
  %v1294 = vmax.f32 %v1262, 0.0
  %v1295 = vmax.f32 %v1263, 0.0
  %v1296 = vmax.f32 %v1264, 0.0
  %v1297 = vmax.f32 %v1265, 0.0
  %v1298 = vmax.f32 %v1266, 0.0
  %v1299 = vmax.f32 %v1267, 0.0
  %v1300 = vmax.f32 %v1268, 0.0
  %v1301 = vmax.f32 %v1269, 0.0
  %v1302 = vmax.f32 %v1270, 0.0
  %v1303 = vmax.f32 %v1271, 0.0
  %v1304 = vmax.f32 %v1272, 0.0
  %v1305 = vmax.f32 %v1273, %v1274
  %v1306 = vmax.f32 %v1275, %v1276
  %v1307 = vmax.f32 %v1277, %v1278
  %v1308 = vmax.f32 %v1279, %v1280
  %v1309 = vmax.f32 %v1281, %v1282
  %v1310 = vmax.f32 %v1283, %v1284
  %v1311 = vmax.f32 %v1285, %v1286
  %v1312 = vmax.f32 %v1287, %v1288
  %v1313 = vmax.f32 %v1289, %v1290
  %v1314 = vmax.f32 %v1291, %v1292
  %v1315 = vmax.f32 %v1293, %v1294
  %v1316 = vmax.f32 %v1295, %v1296
  %v1317 = vmax.f32 %v1297, %v1298
  %v1318 = vmax.f32 %v1299, %v1300
  %v1319 = vmax.f32 %v1301, %v1302
  %v1320 = vmax.f32 %v1303, %v1304
  %1321 = vmatpush.msra.mxu0 0.0
  %1322 = vmatpush.msra.mxu0 0.0
  %1323 = vmatpush.msra.mxu0 0.0
  %1324 = vmatpush.msra.mxu0 0.0
  %1325 = vmatpush.msra.mxu0 0.0
  %1326 = vmatpush.msra.mxu0 0.0
  %1327 = vmatpush.msra.mxu0 0.0
  %1328 = vmatpush.msra.mxu0 0.0
  %1329 = vmatpush.msra.mxu0 0.0
  %1330 = vmatpush.msra.mxu0 0.0
  %1331 = vmatpush.msra.mxu0 0.0
  %1332 = vmatpush.msra.mxu0 0.0
  %1333 = vmatpush.msra.mxu0 %v151
  %1334 = vmatpush.msra.mxu0 %v96
  %1335 = vmatpush.msra.mxu0 %v94
  %1336 = vmatpush.msra.mxu0 %v92
  %1337 = vmatmul.f32.gmra.mxu0 %v528
  %v1338 = vpop.f32.mrf.mxu0
  %v1339 = vadd.f32 0.0, %v1338
  %1340 = vmatmul.f32.gmra.mxu0 %v530
  %v1341 = vpop.f32.mrf.mxu0
  %v1342 = vadd.f32 0.0, %v1341
  %1343 = vmatmul.f32.gmra.mxu0 %v532
  %v1344 = vpop.f32.mrf.mxu0
  %v1345 = vadd.f32 0.0, %v1344
  %1346 = vmatmul.f32.gmra.mxu0 %v534
  %v1347 = vpop.f32.mrf.mxu0
  %v1348 = vadd.f32 0.0, %v1347
  %1349 = vmatmul.f32.gmra.mxu0 %v536
  %v1350 = vpop.f32.mrf.mxu0
  %v1351 = vadd.f32 0.0, %v1350
  %1352 = vmatmul.f32.gmra.mxu0 %v538
  %v1353 = vpop.f32.mrf.mxu0
  %v1354 = vadd.f32 0.0, %v1353
  %1355 = vmatmul.f32.gmra.mxu0 %v540
  %v1356 = vpop.f32.mrf.mxu0
  %v1357 = vadd.f32 0.0, %v1356
  %1358 = vmatmul.f32.gmra.mxu0 %v542
  %v1359 = vpop.f32.mrf.mxu0
  %v1360 = vadd.f32 0.0, %v1359
  %1361 = vmatmul.f32.gmra.mxu0 %v544
  %v1362 = vpop.f32.mrf.mxu0
  %v1363 = vadd.f32 0.0, %v1362
  %1364 = vmatmul.f32.gmra.mxu0 %v546
  %v1365 = vpop.f32.mrf.mxu0
  %v1366 = vadd.f32 0.0, %v1365
  %1367 = vmatmul.f32.gmra.mxu0 %v548
  %v1368 = vpop.f32.mrf.mxu0
  %v1369 = vadd.f32 0.0, %v1368
  %1370 = vmatmul.f32.gmra.mxu0 %v550
  %v1371 = vpop.f32.mrf.mxu0
  %v1372 = vadd.f32 0.0, %v1371
  %1373 = vmatmul.f32.gmra.mxu0 %v552
  %v1374 = vpop.f32.mrf.mxu0
  %v1375 = vadd.f32 0.0, %v1374
  %1376 = vmatmul.f32.gmra.mxu0 %v554
  %v1377 = vpop.f32.mrf.mxu0
  %v1378 = vadd.f32 0.0, %v1377
  %1379 = vmatmul.f32.gmra.mxu0 %v556
  %v1380 = vpop.f32.mrf.mxu0
  %v1381 = vadd.f32 0.0, %v1380
  %1382 = vmatmul.f32.gmra.mxu0 %v558
  %v1383 = vpop.f32.mrf.mxu0
  %v1384 = vadd.f32 0.0, %v1383
  %1385 = vdwg.mxu0
  %1386 = vmatpush.msra.mxu0 0.0
  %1387 = vmatpush.msra.mxu0 0.0
  %1388 = vmatpush.msra.mxu0 0.0
  %1389 = vmatpush.msra.mxu0 0.0
  %1390 = vmatpush.msra.mxu0 0.0
  %1391 = vmatpush.msra.mxu0 0.0
  %1392 = vmatpush.msra.mxu0 0.0
  %1393 = vmatpush.msra.mxu0 0.0
  %1394 = vmatpush.msra.mxu0 0.0
  %1395 = vmatpush.msra.mxu0 0.0
  %1396 = vmatpush.msra.mxu0 0.0
  %1397 = vmatpush.msra.mxu0 0.0
  %1398 = vmatpush.msra.mxu0 %v154
  %1399 = vmatpush.msra.mxu0 %v97
  %1400 = vmatpush.msra.mxu0 %v95
  %1401 = vmatpush.msra.mxu0 %v93
  %1402 = vmatmul.f32.gmra.mxu0 %v528
  %v1403 = vpop.f32.mrf.mxu0
  %v1404 = vadd.f32 0.0, %v1403
  %1405 = vmatmul.f32.gmra.mxu0 %v530
  %v1406 = vpop.f32.mrf.mxu0
  %v1407 = vadd.f32 0.0, %v1406
  %1408 = vmatmul.f32.gmra.mxu0 %v532
  %v1409 = vpop.f32.mrf.mxu0
  %v1410 = vadd.f32 0.0, %v1409
  %1411 = vmatmul.f32.gmra.mxu0 %v534
  %v1412 = vpop.f32.mrf.mxu0
  %v1413 = vadd.f32 0.0, %v1412
  %1414 = vmatmul.f32.gmra.mxu0 %v536
  %v1415 = vpop.f32.mrf.mxu0
  %v1416 = vadd.f32 0.0, %v1415
  %1417 = vmatmul.f32.gmra.mxu0 %v538
  %v1418 = vpop.f32.mrf.mxu0
  %v1419 = vadd.f32 0.0, %v1418
  %1420 = vmatmul.f32.gmra.mxu0 %v540
  %v1421 = vpop.f32.mrf.mxu0
  %v1422 = vadd.f32 0.0, %v1421
  %1423 = vmatmul.f32.gmra.mxu0 %v542
  %v1424 = vpop.f32.mrf.mxu0
  %v1425 = vadd.f32 0.0, %v1424
  %1426 = vmatmul.f32.gmra.mxu0 %v544
  %v1427 = vpop.f32.mrf.mxu0
  %v1428 = vadd.f32 0.0, %v1427
  %1429 = vmatmul.f32.gmra.mxu0 %v546
  %v1430 = vpop.f32.mrf.mxu0
  %v1431 = vadd.f32 0.0, %v1430
  %1432 = vmatmul.f32.gmra.mxu0 %v548
  %v1433 = vpop.f32.mrf.mxu0
  %v1434 = vadd.f32 0.0, %v1433
  %1435 = vmatmul.f32.gmra.mxu0 %v550
  %v1436 = vpop.f32.mrf.mxu0
  %v1437 = vadd.f32 0.0, %v1436
  %1438 = vmatmul.f32.gmra.mxu0 %v552
  %v1439 = vpop.f32.mrf.mxu0
  %v1440 = vadd.f32 0.0, %v1439
  %1441 = vmatmul.f32.gmra.mxu0 %v554
  %v1442 = vpop.f32.mrf.mxu0
  %v1443 = vadd.f32 0.0, %v1442
  %1444 = vmatmul.f32.gmra.mxu0 %v556
  %v1445 = vpop.f32.mrf.mxu0
  %v1446 = vadd.f32 0.0, %v1445
  %1447 = vmatmul.f32.gmra.mxu0 %v558
  %v1448 = vpop.f32.mrf.mxu0
  %v1449 = vadd.f32 0.0, %v1448
  %1450 = vdwg.mxu0
  %1451 = vmatpush.msra.mxu0 0.0
  %1452 = vmatpush.msra.mxu0 0.0
  %1453 = vmatpush.msra.mxu0 0.0
  %1454 = vmatpush.msra.mxu0 0.0
  %1455 = vmatpush.msra.mxu0 0.0
  %1456 = vmatpush.msra.mxu0 0.0
  %1457 = vmatpush.msra.mxu0 0.0
  %1458 = vmatpush.msra.mxu0 0.0
  %1459 = vmatpush.msra.mxu0 0.0
  %1460 = vmatpush.msra.mxu0 0.0
  %1461 = vmatpush.msra.mxu0 0.0
  %1462 = vmatpush.msra.mxu0 0.0
  %1463 = vmatpush.msra.mxu0 %v335
  %1464 = vmatpush.msra.mxu0 %v87
  %1465 = vmatpush.msra.mxu0 %v85
  %1466 = vmatpush.msra.mxu0 %v83
  %1467 = vmatmul.f32.gmra.mxu0 %v102
  %v1468 = vpop.f32.mrf.mxu0
  %v1469 = vadd.f32 %v1339, %v1468
  %1470 = vmatmul.f32.gmra.mxu0 %v105
  %v1471 = vpop.f32.mrf.mxu0
  %v1472 = vadd.f32 %v1342, %v1471
  %1473 = vmatmul.f32.gmra.mxu0 %v108
  %v1474 = vpop.f32.mrf.mxu0
  %v1475 = vadd.f32 %v1345, %v1474
  %1476 = vmatmul.f32.gmra.mxu0 %v111
  %v1477 = vpop.f32.mrf.mxu0
  %v1478 = vadd.f32 %v1348, %v1477
  %1479 = vmatmul.f32.gmra.mxu0 %v114
  %v1480 = vpop.f32.mrf.mxu0
  %v1481 = vadd.f32 %v1351, %v1480
  %1482 = vmatmul.f32.gmra.mxu0 %v117
  %v1483 = vpop.f32.mrf.mxu0
  %v1484 = vadd.f32 %v1354, %v1483
  %1485 = vmatmul.f32.gmra.mxu0 %v120
  %v1486 = vpop.f32.mrf.mxu0
  %v1487 = vadd.f32 %v1357, %v1486
  %1488 = vmatmul.f32.gmra.mxu0 %v123
  %v1489 = vpop.f32.mrf.mxu0
  %v1490 = vadd.f32 %v1360, %v1489
  %1491 = vmatmul.f32.gmra.mxu0 %v126
  %v1492 = vpop.f32.mrf.mxu0
  %v1493 = vadd.f32 %v1363, %v1492
  %1494 = vmatmul.f32.gmra.mxu0 %v129
  %v1495 = vpop.f32.mrf.mxu0
  %v1496 = vadd.f32 %v1366, %v1495
  %1497 = vmatmul.f32.gmra.mxu0 %v132
  %v1498 = vpop.f32.mrf.mxu0
  %v1499 = vadd.f32 %v1369, %v1498
  %1500 = vmatmul.f32.gmra.mxu0 %v135
  %v1501 = vpop.f32.mrf.mxu0
  %v1502 = vadd.f32 %v1372, %v1501
  %1503 = vmatmul.f32.gmra.mxu0 %v138
  %v1504 = vpop.f32.mrf.mxu0
  %v1505 = vadd.f32 %v1375, %v1504
  %1506 = vmatmul.f32.gmra.mxu0 %v141
  %v1507 = vpop.f32.mrf.mxu0
  %v1508 = vadd.f32 %v1378, %v1507
  %1509 = vmatmul.f32.gmra.mxu0 %v144
  %v1510 = vpop.f32.mrf.mxu0
  %v1511 = vadd.f32 %v1381, %v1510
  %1512 = vmatmul.f32.gmra.mxu0 %v147
  %v1513 = vpop.f32.mrf.mxu0
  %v1514 = vadd.f32 %v1384, %v1513
  %1515 = vdwg.mxu0
  %1516 = vmatpush.msra.mxu0 0.0
  %1517 = vmatpush.msra.mxu0 0.0
  %1518 = vmatpush.msra.mxu0 0.0
  %1519 = vmatpush.msra.mxu0 0.0
  %1520 = vmatpush.msra.mxu0 0.0
  %1521 = vmatpush.msra.mxu0 0.0
  %1522 = vmatpush.msra.mxu0 0.0
  %1523 = vmatpush.msra.mxu0 0.0
  %1524 = vmatpush.msra.mxu0 0.0
  %1525 = vmatpush.msra.mxu0 0.0
  %1526 = vmatpush.msra.mxu0 0.0
  %1527 = vmatpush.msra.mxu0 0.0
  %1528 = vmatpush.msra.mxu0 %v338
  %1529 = vmatpush.msra.mxu0 %v88
  %1530 = vmatpush.msra.mxu0 %v86
  %1531 = vmatpush.msra.mxu0 %v84
  %1532 = vmatmul.f32.gmra.mxu0 %v102
  %v1533 = vpop.f32.mrf.mxu0
  %v1534 = vadd.f32 %v1404, %v1533
  %1535 = vmatmul.f32.gmra.mxu0 %v105
  %v1536 = vpop.f32.mrf.mxu0
  %v1537 = vadd.f32 %v1407, %v1536
  %1538 = vmatmul.f32.gmra.mxu0 %v108
  %v1539 = vpop.f32.mrf.mxu0
  %v1540 = vadd.f32 %v1410, %v1539
  %1541 = vmatmul.f32.gmra.mxu0 %v111
  %v1542 = vpop.f32.mrf.mxu0
  %v1543 = vadd.f32 %v1413, %v1542
  %1544 = vmatmul.f32.gmra.mxu0 %v114
  %v1545 = vpop.f32.mrf.mxu0
  %v1546 = vadd.f32 %v1416, %v1545
  %1547 = vmatmul.f32.gmra.mxu0 %v117
  %v1548 = vpop.f32.mrf.mxu0
  %v1549 = vadd.f32 %v1419, %v1548
  %1550 = vmatmul.f32.gmra.mxu0 %v120
  %v1551 = vpop.f32.mrf.mxu0
  %v1552 = vadd.f32 %v1422, %v1551
  %1553 = vmatmul.f32.gmra.mxu0 %v123
  %v1554 = vpop.f32.mrf.mxu0
  %v1555 = vadd.f32 %v1425, %v1554
  %1556 = vmatmul.f32.gmra.mxu0 %v126
  %v1557 = vpop.f32.mrf.mxu0
  %v1558 = vadd.f32 %v1428, %v1557
  %1559 = vmatmul.f32.gmra.mxu0 %v129
  %v1560 = vpop.f32.mrf.mxu0
  %v1561 = vadd.f32 %v1431, %v1560
  %1562 = vmatmul.f32.gmra.mxu0 %v132
  %v1563 = vpop.f32.mrf.mxu0
  %v1564 = vadd.f32 %v1434, %v1563
  %1565 = vmatmul.f32.gmra.mxu0 %v135
  %v1566 = vpop.f32.mrf.mxu0
  %v1567 = vadd.f32 %v1437, %v1566
  %1568 = vmatmul.f32.gmra.mxu0 %v138
  %v1569 = vpop.f32.mrf.mxu0
  %v1570 = vadd.f32 %v1440, %v1569
  %1571 = vmatmul.f32.gmra.mxu0 %v141
  %v1572 = vpop.f32.mrf.mxu0
  %v1573 = vadd.f32 %v1443, %v1572
  %1574 = vmatmul.f32.gmra.mxu0 %v144
  %v1575 = vpop.f32.mrf.mxu0
  %v1576 = vadd.f32 %v1446, %v1575
  %1577 = vmatmul.f32.gmra.mxu0 %v147
  %v1578 = vpop.f32.mrf.mxu0
  %v1579 = vadd.f32 %v1449, %v1578
  %1580 = vdwg.mxu0
  %1581 = vmatpush.msra.mxu0 0.0
  %1582 = vmatpush.msra.mxu0 0.0
  %1583 = vmatpush.msra.mxu0 0.0
  %1584 = vmatpush.msra.mxu0 0.0
  %1585 = vmatpush.msra.mxu0 0.0
  %1586 = vmatpush.msra.mxu0 0.0
  %1587 = vmatpush.msra.mxu0 0.0
  %1588 = vmatpush.msra.mxu0 0.0
  %1589 = vmatpush.msra.mxu0 0.0
  %1590 = vmatpush.msra.mxu0 0.0
  %1591 = vmatpush.msra.mxu0 0.0
  %1592 = vmatpush.msra.mxu0 0.0
  %1593 = vmatpush.msra.mxu0 %v561
  %1594 = vmatpush.msra.mxu0 %v524
  %1595 = vmatpush.msra.mxu0 %v522
  %1596 = vmatpush.msra.mxu0 %v520
  %1597 = vmatmul.f32.gmra.mxu0 %v785
  %v1598 = vpop.f32.mrf.mxu0
  %v1599 = vadd.f32 0.0, %v1598
  %1600 = vmatmul.f32.gmra.mxu0 %v787
  %v1601 = vpop.f32.mrf.mxu0
  %v1602 = vadd.f32 0.0, %v1601
  %1603 = vmatmul.f32.gmra.mxu0 %v789
  %v1604 = vpop.f32.mrf.mxu0
  %v1605 = vadd.f32 0.0, %v1604
  %1606 = vmatmul.f32.gmra.mxu0 %v791
  %v1607 = vpop.f32.mrf.mxu0
  %v1608 = vadd.f32 0.0, %v1607
  %1609 = vmatmul.f32.gmra.mxu0 %v793
  %v1610 = vpop.f32.mrf.mxu0
  %v1611 = vadd.f32 0.0, %v1610
  %1612 = vmatmul.f32.gmra.mxu0 %v795
  %v1613 = vpop.f32.mrf.mxu0
  %v1614 = vadd.f32 0.0, %v1613
  %1615 = vmatmul.f32.gmra.mxu0 %v797
  %v1616 = vpop.f32.mrf.mxu0
  %v1617 = vadd.f32 0.0, %v1616
  %1618 = vmatmul.f32.gmra.mxu0 %v799
  %v1619 = vpop.f32.mrf.mxu0
  %v1620 = vadd.f32 0.0, %v1619
  %1621 = vmatmul.f32.gmra.mxu0 %v801
  %v1622 = vpop.f32.mrf.mxu0
  %v1623 = vadd.f32 0.0, %v1622
  %1624 = vmatmul.f32.gmra.mxu0 %v803
  %v1625 = vpop.f32.mrf.mxu0
  %v1626 = vadd.f32 0.0, %v1625
  %1627 = vmatmul.f32.gmra.mxu0 %v805
  %v1628 = vpop.f32.mrf.mxu0
  %v1629 = vadd.f32 0.0, %v1628
  %1630 = vmatmul.f32.gmra.mxu0 %v807
  %v1631 = vpop.f32.mrf.mxu0
  %v1632 = vadd.f32 0.0, %v1631
  %1633 = vmatmul.f32.gmra.mxu0 %v809
  %v1634 = vpop.f32.mrf.mxu0
  %v1635 = vadd.f32 0.0, %v1634
  %1636 = vmatmul.f32.gmra.mxu0 %v811
  %v1637 = vpop.f32.mrf.mxu0
  %v1638 = vadd.f32 0.0, %v1637
  %1639 = vmatmul.f32.gmra.mxu0 %v813
  %v1640 = vpop.f32.mrf.mxu0
  %v1641 = vadd.f32 0.0, %v1640
  %1642 = vmatmul.f32.gmra.mxu0 %v815
  %v1643 = vpop.f32.mrf.mxu0
  %v1644 = vadd.f32 0.0, %v1643
  %1645 = vdwg.mxu0
  %1646 = vmatpush.msra.mxu0 0.0
  %1647 = vmatpush.msra.mxu0 0.0
  %1648 = vmatpush.msra.mxu0 0.0
  %1649 = vmatpush.msra.mxu0 0.0
  %1650 = vmatpush.msra.mxu0 0.0
  %1651 = vmatpush.msra.mxu0 0.0
  %1652 = vmatpush.msra.mxu0 0.0
  %1653 = vmatpush.msra.mxu0 0.0
  %1654 = vmatpush.msra.mxu0 0.0
  %1655 = vmatpush.msra.mxu0 0.0
  %1656 = vmatpush.msra.mxu0 0.0
  %1657 = vmatpush.msra.mxu0 0.0
  %1658 = vmatpush.msra.mxu0 %v564
  %1659 = vmatpush.msra.mxu0 %v525
  %1660 = vmatpush.msra.mxu0 %v523
  %1661 = vmatpush.msra.mxu0 %v521
  %1662 = vmatmul.f32.gmra.mxu0 %v785
  %v1663 = vpop.f32.mrf.mxu0
  %v1664 = vadd.f32 0.0, %v1663
  %1665 = vmatmul.f32.gmra.mxu0 %v787
  %v1666 = vpop.f32.mrf.mxu0
  %v1667 = vadd.f32 0.0, %v1666
  %1668 = vmatmul.f32.gmra.mxu0 %v789
  %v1669 = vpop.f32.mrf.mxu0
  %v1670 = vadd.f32 0.0, %v1669
  %1671 = vmatmul.f32.gmra.mxu0 %v791
  %v1672 = vpop.f32.mrf.mxu0
  %v1673 = vadd.f32 0.0, %v1672
  %1674 = vmatmul.f32.gmra.mxu0 %v793
  %v1675 = vpop.f32.mrf.mxu0
  %v1676 = vadd.f32 0.0, %v1675
  %1677 = vmatmul.f32.gmra.mxu0 %v795
  %v1678 = vpop.f32.mrf.mxu0
  %v1679 = vadd.f32 0.0, %v1678
  %1680 = vmatmul.f32.gmra.mxu0 %v797
  %v1681 = vpop.f32.mrf.mxu0
  %v1682 = vadd.f32 0.0, %v1681
  %1683 = vmatmul.f32.gmra.mxu0 %v799
  %v1684 = vpop.f32.mrf.mxu0
  %v1685 = vadd.f32 0.0, %v1684
  %1686 = vmatmul.f32.gmra.mxu0 %v801
  %v1687 = vpop.f32.mrf.mxu0
  %v1688 = vadd.f32 0.0, %v1687
  %1689 = vmatmul.f32.gmra.mxu0 %v803
  %v1690 = vpop.f32.mrf.mxu0
  %v1691 = vadd.f32 0.0, %v1690
  %1692 = vmatmul.f32.gmra.mxu0 %v805
  %v1693 = vpop.f32.mrf.mxu0
  %v1694 = vadd.f32 0.0, %v1693
  %1695 = vmatmul.f32.gmra.mxu0 %v807
  %v1696 = vpop.f32.mrf.mxu0
  %v1697 = vadd.f32 0.0, %v1696
  %1698 = vmatmul.f32.gmra.mxu0 %v809
  %v1699 = vpop.f32.mrf.mxu0
  %v1700 = vadd.f32 0.0, %v1699
  %1701 = vmatmul.f32.gmra.mxu0 %v811
  %v1702 = vpop.f32.mrf.mxu0
  %v1703 = vadd.f32 0.0, %v1702
  %1704 = vmatmul.f32.gmra.mxu0 %v813
  %v1705 = vpop.f32.mrf.mxu0
  %v1706 = vadd.f32 0.0, %v1705
  %1707 = vmatmul.f32.gmra.mxu0 %v815
  %v1708 = vpop.f32.mrf.mxu0
  %v1709 = vadd.f32 0.0, %v1708
  %1710 = vdwg.mxu0
  %v1711 = vadd.f32 %v1469, %v1599
  %v1712 = vadd.f32 %v1534, %v1664
  %v1713 = vadd.f32 %v1472, %v1602
  %v1714 = vadd.f32 %v1537, %v1667
  %v1715 = vadd.f32 %v1475, %v1605
  %v1716 = vadd.f32 %v1540, %v1670
  %v1717 = vadd.f32 %v1478, %v1608
  %v1718 = vadd.f32 %v1543, %v1673
  %v1719 = vadd.f32 %v1481, %v1611
  %v1720 = vadd.f32 %v1546, %v1676
  %v1721 = vadd.f32 %v1484, %v1614
  %v1722 = vadd.f32 %v1549, %v1679
  %v1723 = vadd.f32 %v1487, %v1617
  %v1724 = vadd.f32 %v1552, %v1682
  %v1725 = vadd.f32 %v1490, %v1620
  %v1726 = vadd.f32 %v1555, %v1685
  %v1727 = vadd.f32 %v1493, %v1623
  %v1728 = vadd.f32 %v1558, %v1688
  %v1729 = vadd.f32 %v1496, %v1626
  %v1730 = vadd.f32 %v1561, %v1691
  %v1731 = vadd.f32 %v1499, %v1629
  %v1732 = vadd.f32 %v1564, %v1694
  %v1733 = vadd.f32 %v1502, %v1632
  %v1734 = vadd.f32 %v1567, %v1697
  %v1735 = vadd.f32 %v1505, %v1635
  %v1736 = vadd.f32 %v1570, %v1700
  %v1737 = vadd.f32 %v1508, %v1638
  %v1738 = vadd.f32 %v1573, %v1703
  %v1739 = vadd.f32 %v1511, %v1641
  %v1740 = vadd.f32 %v1576, %v1706
  %v1741 = vadd.f32 %v1514, %v1644
  %v1742 = vadd.f32 %v1579, %v1709
  %1743 = vmatpush.msra.mxu0 0.0
  %1744 = vmatpush.msra.mxu0 0.0
  %1745 = vmatpush.msra.mxu0 0.0
  %1746 = vmatpush.msra.mxu0 0.0
  %1747 = vmatpush.msra.mxu0 0.0
  %1748 = vmatpush.msra.mxu0 0.0
  %1749 = vmatpush.msra.mxu0 0.0
  %1750 = vmatpush.msra.mxu0 0.0
  %1751 = vmatpush.msra.mxu0 0.0
  %1752 = vmatpush.msra.mxu0 0.0
  %1753 = vmatpush.msra.mxu0 0.0
  %1754 = vmatpush.msra.mxu0 0.0
  %1755 = vmatpush.msra.mxu0 %v818
  %1756 = vmatpush.msra.mxu0 %v781
  %1757 = vmatpush.msra.mxu0 %v779
  %1758 = vmatpush.msra.mxu0 %v777
  %1759 = vmatmul.f32.gmra.mxu0 %v1035
  %v1760 = vpop.f32.mrf.mxu0
  %v1761 = vadd.f32 0.0, %v1760
  %1762 = vmatmul.f32.gmra.mxu0 %v1037
  %v1763 = vpop.f32.mrf.mxu0
  %v1764 = vadd.f32 0.0, %v1763
  %1765 = vmatmul.f32.gmra.mxu0 %v1039
  %v1766 = vpop.f32.mrf.mxu0
  %v1767 = vadd.f32 0.0, %v1766
  %1768 = vmatmul.f32.gmra.mxu0 %v1041
  %v1769 = vpop.f32.mrf.mxu0
  %v1770 = vadd.f32 0.0, %v1769
  %1771 = vmatmul.f32.gmra.mxu0 %v1043
  %v1772 = vpop.f32.mrf.mxu0
  %v1773 = vadd.f32 0.0, %v1772
  %1774 = vmatmul.f32.gmra.mxu0 %v1045
  %v1775 = vpop.f32.mrf.mxu0
  %v1776 = vadd.f32 0.0, %v1775
  %1777 = vmatmul.f32.gmra.mxu0 %v1047
  %v1778 = vpop.f32.mrf.mxu0
  %v1779 = vadd.f32 0.0, %v1778
  %1780 = vmatmul.f32.gmra.mxu0 %v1049
  %v1781 = vpop.f32.mrf.mxu0
  %v1782 = vadd.f32 0.0, %v1781
  %1783 = vmatmul.f32.gmra.mxu0 %v1051
  %v1784 = vpop.f32.mrf.mxu0
  %v1785 = vadd.f32 0.0, %v1784
  %1786 = vmatmul.f32.gmra.mxu0 %v1053
  %v1787 = vpop.f32.mrf.mxu0
  %v1788 = vadd.f32 0.0, %v1787
  %1789 = vmatmul.f32.gmra.mxu0 %v1055
  %v1790 = vpop.f32.mrf.mxu0
  %v1791 = vadd.f32 0.0, %v1790
  %1792 = vmatmul.f32.gmra.mxu0 %v1057
  %v1793 = vpop.f32.mrf.mxu0
  %v1794 = vadd.f32 0.0, %v1793
  %1795 = vmatmul.f32.gmra.mxu0 %v1059
  %v1796 = vpop.f32.mrf.mxu0
  %v1797 = vadd.f32 0.0, %v1796
  %1798 = vmatmul.f32.gmra.mxu0 %v1061
  %v1799 = vpop.f32.mrf.mxu0
  %v1800 = vadd.f32 0.0, %v1799
  %1801 = vmatmul.f32.gmra.mxu0 %v1063
  %v1802 = vpop.f32.mrf.mxu0
  %v1803 = vadd.f32 0.0, %v1802
  %1804 = vmatmul.f32.gmra.mxu0 %v1065
  %v1805 = vpop.f32.mrf.mxu0
  %v1806 = vadd.f32 0.0, %v1805
  %1807 = vdwg.mxu0
  %1808 = vmatpush.msra.mxu0 0.0
  %1809 = vmatpush.msra.mxu0 0.0
  %1810 = vmatpush.msra.mxu0 0.0
  %1811 = vmatpush.msra.mxu0 0.0
  %1812 = vmatpush.msra.mxu0 0.0
  %1813 = vmatpush.msra.mxu0 0.0
  %1814 = vmatpush.msra.mxu0 0.0
  %1815 = vmatpush.msra.mxu0 0.0
  %1816 = vmatpush.msra.mxu0 0.0
  %1817 = vmatpush.msra.mxu0 0.0
  %1818 = vmatpush.msra.mxu0 0.0
  %1819 = vmatpush.msra.mxu0 0.0
  %1820 = vmatpush.msra.mxu0 %v821
  %1821 = vmatpush.msra.mxu0 %v782
  %1822 = vmatpush.msra.mxu0 %v780
  %1823 = vmatpush.msra.mxu0 %v778
  %1824 = vmatmul.f32.gmra.mxu0 %v1035
  %v1825 = vpop.f32.mrf.mxu0
  %v1826 = vadd.f32 0.0, %v1825
  %1827 = vmatmul.f32.gmra.mxu0 %v1037
  %v1828 = vpop.f32.mrf.mxu0
  %v1829 = vadd.f32 0.0, %v1828
  %1830 = vmatmul.f32.gmra.mxu0 %v1039
  %v1831 = vpop.f32.mrf.mxu0
  %v1832 = vadd.f32 0.0, %v1831
  %1833 = vmatmul.f32.gmra.mxu0 %v1041
  %v1834 = vpop.f32.mrf.mxu0
  %v1835 = vadd.f32 0.0, %v1834
  %1836 = vmatmul.f32.gmra.mxu0 %v1043
  %v1837 = vpop.f32.mrf.mxu0
  %v1838 = vadd.f32 0.0, %v1837
  %1839 = vmatmul.f32.gmra.mxu0 %v1045
  %v1840 = vpop.f32.mrf.mxu0
  %v1841 = vadd.f32 0.0, %v1840
  %1842 = vmatmul.f32.gmra.mxu0 %v1047
  %v1843 = vpop.f32.mrf.mxu0
  %v1844 = vadd.f32 0.0, %v1843
  %1845 = vmatmul.f32.gmra.mxu0 %v1049
  %v1846 = vpop.f32.mrf.mxu0
  %v1847 = vadd.f32 0.0, %v1846
  %1848 = vmatmul.f32.gmra.mxu0 %v1051
  %v1849 = vpop.f32.mrf.mxu0
  %v1850 = vadd.f32 0.0, %v1849
  %1851 = vmatmul.f32.gmra.mxu0 %v1053
  %v1852 = vpop.f32.mrf.mxu0
  %v1853 = vadd.f32 0.0, %v1852
  %1854 = vmatmul.f32.gmra.mxu0 %v1055
  %v1855 = vpop.f32.mrf.mxu0
  %v1856 = vadd.f32 0.0, %v1855
  %1857 = vmatmul.f32.gmra.mxu0 %v1057
  %v1858 = vpop.f32.mrf.mxu0
  %v1859 = vadd.f32 0.0, %v1858
  %1860 = vmatmul.f32.gmra.mxu0 %v1059
  %v1861 = vpop.f32.mrf.mxu0
  %v1862 = vadd.f32 0.0, %v1861
  %1863 = vmatmul.f32.gmra.mxu0 %v1061
  %v1864 = vpop.f32.mrf.mxu0
  %v1865 = vadd.f32 0.0, %v1864
  %1866 = vmatmul.f32.gmra.mxu0 %v1063
  %v1867 = vpop.f32.mrf.mxu0
  %v1868 = vadd.f32 0.0, %v1867
  %1869 = vmatmul.f32.gmra.mxu0 %v1065
  %v1870 = vpop.f32.mrf.mxu0
  %v1871 = vadd.f32 0.0, %v1870
  %1872 = vdwg.mxu0
  %v1873 = vadd.f32 %v1711, %v1761
  %v1874 = vadd.f32 %v1712, %v1826
  %v1875 = vadd.f32 %v1713, %v1764
  %v1876 = vadd.f32 %v1714, %v1829
  %v1877 = vadd.f32 %v1715, %v1767
  %v1878 = vadd.f32 %v1716, %v1832
  %v1879 = vadd.f32 %v1717, %v1770
  %v1880 = vadd.f32 %v1718, %v1835
  %v1881 = vadd.f32 %v1719, %v1773
  %v1882 = vadd.f32 %v1720, %v1838
  %v1883 = vadd.f32 %v1721, %v1776
  %v1884 = vadd.f32 %v1722, %v1841
  %v1885 = vadd.f32 %v1723, %v1779
  %v1886 = vadd.f32 %v1724, %v1844
  %v1887 = vadd.f32 %v1725, %v1782
  %v1888 = vadd.f32 %v1726, %v1847
  %v1889 = vadd.f32 %v1727, %v1785
  %v1890 = vadd.f32 %v1728, %v1850
  %v1891 = vadd.f32 %v1729, %v1788
  %v1892 = vadd.f32 %v1730, %v1853
  %v1893 = vadd.f32 %v1731, %v1791
  %v1894 = vadd.f32 %v1732, %v1856
  %v1895 = vadd.f32 %v1733, %v1794
  %v1896 = vadd.f32 %v1734, %v1859
  %v1897 = vadd.f32 %v1735, %v1797
  %v1898 = vadd.f32 %v1736, %v1862
  %v1899 = vadd.f32 %v1737, %v1800
  %v1900 = vadd.f32 %v1738, %v1865
  %v1901 = vadd.f32 %v1739, %v1803
  %v1902 = vadd.f32 %v1740, %v1868
  %v1903 = vadd.f32 %v1741, %v1806
  %v1904 = vadd.f32 %v1742, %v1871
  %v1905 = vrot.slane %v59, 2
  %v1906 = vrot.slane %v60, 2
  %v1907 = vsel %vm985, %v1905, %v1906
  %v1908 = vrot.slane %v61, 2
  %v1909 = vsel %vm985, %v1906, %v1908
  %v1910 = vrot.slane %v62, 2
  %v1911 = vrot.slane %v63, 2
  %v1912 = vsel %vm985, %v1910, %v1911
  %v1913 = vrot.slane %v64, 2
  %v1914 = vsel %vm985, %v1911, %v1913
  %v1915 = vrot.slane %v65, 2
  %v1916 = vrot.slane %v66, 2
  %v1917 = vsel %vm985, %v1915, %v1916
  %v1918 = vrot.slane %v67, 2
  %v1919 = vsel %vm985, %v1916, %v1918
  %v1920 = vrot.slane %v68, 2
  %v1921 = vrot.slane %v69, 2
  %v1922 = vsel %vm985, %v1920, %v1921
  %v1923 = vrot.slane %v70, 2
  %v1924 = vsel %vm985, %v1921, %v1923
  %v1925 = vrot.slane %v71, 2
  %v1926 = vrot.slane %v72, 2
  %v1927 = vsel %vm985, %v1925, %v1926
  %v1928 = vrot.slane %v73, 2
  %v1929 = vsel %vm985, %v1926, %v1928
  %v1930 = vrot.slane %v74, 2
  %v1931 = vrot.slane %v75, 2
  %v1932 = vsel %vm985, %v1930, %v1931
  %v1933 = vrot.slane %v76, 2
  %v1934 = vsel %vm985, %v1931, %v1933
  %v1935 = vrot.slane %v77, 2
  %v1936 = vrot.slane %v78, 2
  %v1937 = vsel %vm985, %v1935, %v1936
  %v1938 = vrot.slane %v79, 2
  %v1939 = vsel %vm985, %v1936, %v1938
  %v1940 = vrot.slane %v80, 2
  %v1941 = vrot.slane %v81, 2
  %v1942 = vsel %vm985, %v1940, %v1941
  %v1943 = vrot.slane %v82, 2
  %v1944 = vsel %vm985, %v1941, %v1943
  %v1945 = vsel %vm100, %v1907, 0
  %v1947 = vsel %vm100, %v1909, 0
  %v1949 = vsel %vm100, %v1912, 0
  %v1951 = vsel %vm100, %v1914, 0
  %v1953 = vsel %vm100, %v1917, 0
  %v1955 = vsel %vm100, %v1919, 0
  %v1957 = vsel %vm100, %v1922, 0
  %v1959 = vsel %vm100, %v1924, 0
  %v1961 = vsel %vm100, %v1927, 0
  %v1963 = vsel %vm100, %v1929, 0
  %v1965 = vsel %vm100, %v1932, 0
  %v1967 = vsel %vm100, %v1934, 0
  %v1969 = vsel %vm100, %v1937, 0
  %v1971 = vsel %vm100, %v1939, 0
  %v1973 = vsel %vm100, %v1942, 0
  %v1975 = vsel %vm100, %v1944, 0
  %1977 = vmatpush.msra.mxu0 0.0
  %1978 = vmatpush.msra.mxu0 0.0
  %1979 = vmatpush.msra.mxu0 0.0
  %1980 = vmatpush.msra.mxu0 0.0
  %1981 = vmatpush.msra.mxu0 0.0
  %1982 = vmatpush.msra.mxu0 0.0
  %1983 = vmatpush.msra.mxu0 0.0
  %1984 = vmatpush.msra.mxu0 0.0
  %1985 = vmatpush.msra.mxu0 0.0
  %1986 = vmatpush.msra.mxu0 0.0
  %1987 = vmatpush.msra.mxu0 0.0
  %1988 = vmatpush.msra.mxu0 0.0
  %1989 = vmatpush.msra.mxu0 %v1068
  %1990 = vmatpush.msra.mxu0 %v1031
  %1991 = vmatpush.msra.mxu0 %v1029
  %1992 = vmatpush.msra.mxu0 %v1027
  %1993 = vmatmul.f32.gmra.mxu0 %v1945
  %v1994 = vpop.f32.mrf.mxu0
  %v1995 = vadd.f32 0.0, %v1994
  %1996 = vmatmul.f32.gmra.mxu0 %v1947
  %v1997 = vpop.f32.mrf.mxu0
  %v1998 = vadd.f32 0.0, %v1997
  %1999 = vmatmul.f32.gmra.mxu0 %v1949
  %v2000 = vpop.f32.mrf.mxu0
  %v2001 = vadd.f32 0.0, %v2000
  %2002 = vmatmul.f32.gmra.mxu0 %v1951
  %v2003 = vpop.f32.mrf.mxu0
  %v2004 = vadd.f32 0.0, %v2003
  %2005 = vmatmul.f32.gmra.mxu0 %v1953
  %v2006 = vpop.f32.mrf.mxu0
  %v2007 = vadd.f32 0.0, %v2006
  %2008 = vmatmul.f32.gmra.mxu0 %v1955
  %v2009 = vpop.f32.mrf.mxu0
  %v2010 = vadd.f32 0.0, %v2009
  %2011 = vmatmul.f32.gmra.mxu0 %v1957
  %v2012 = vpop.f32.mrf.mxu0
  %v2013 = vadd.f32 0.0, %v2012
  %2014 = vmatmul.f32.gmra.mxu0 %v1959
  %v2015 = vpop.f32.mrf.mxu0
  %v2016 = vadd.f32 0.0, %v2015
  %2017 = vmatmul.f32.gmra.mxu0 %v1961
  %v2018 = vpop.f32.mrf.mxu0
  %v2019 = vadd.f32 0.0, %v2018
  %2020 = vmatmul.f32.gmra.mxu0 %v1963
  %v2021 = vpop.f32.mrf.mxu0
  %v2022 = vadd.f32 0.0, %v2021
  %2023 = vmatmul.f32.gmra.mxu0 %v1965
  %v2024 = vpop.f32.mrf.mxu0
  %v2025 = vadd.f32 0.0, %v2024
  %2026 = vmatmul.f32.gmra.mxu0 %v1967
  %v2027 = vpop.f32.mrf.mxu0
  %v2028 = vadd.f32 0.0, %v2027
  %2029 = vmatmul.f32.gmra.mxu0 %v1969
  %v2030 = vpop.f32.mrf.mxu0
  %v2031 = vadd.f32 0.0, %v2030
  %2032 = vmatmul.f32.gmra.mxu0 %v1971
  %v2033 = vpop.f32.mrf.mxu0
  %v2034 = vadd.f32 0.0, %v2033
  %2035 = vmatmul.f32.gmra.mxu0 %v1973
  %v2036 = vpop.f32.mrf.mxu0
  %v2037 = vadd.f32 0.0, %v2036
  %2038 = vmatmul.f32.gmra.mxu0 %v1975
  %v2039 = vpop.f32.mrf.mxu0
  %v2040 = vadd.f32 0.0, %v2039
  %2041 = vdwg.mxu0
  %2042 = vmatpush.msra.mxu0 0.0
  %2043 = vmatpush.msra.mxu0 0.0
  %2044 = vmatpush.msra.mxu0 0.0
  %2045 = vmatpush.msra.mxu0 0.0
  %2046 = vmatpush.msra.mxu0 0.0
  %2047 = vmatpush.msra.mxu0 0.0
  %2048 = vmatpush.msra.mxu0 0.0
  %2049 = vmatpush.msra.mxu0 0.0
  %2050 = vmatpush.msra.mxu0 0.0
  %2051 = vmatpush.msra.mxu0 0.0
  %2052 = vmatpush.msra.mxu0 0.0
  %2053 = vmatpush.msra.mxu0 0.0
  %2054 = vmatpush.msra.mxu0 %v1071
  %2055 = vmatpush.msra.mxu0 %v1032
  %2056 = vmatpush.msra.mxu0 %v1030
  %2057 = vmatpush.msra.mxu0 %v1028
  %2058 = vmatmul.f32.gmra.mxu0 %v1945
  %v2059 = vpop.f32.mrf.mxu0
  %v2060 = vadd.f32 0.0, %v2059
  %2061 = vmatmul.f32.gmra.mxu0 %v1947
  %v2062 = vpop.f32.mrf.mxu0
  %v2063 = vadd.f32 0.0, %v2062
  %2064 = vmatmul.f32.gmra.mxu0 %v1949
  %v2065 = vpop.f32.mrf.mxu0
  %v2066 = vadd.f32 0.0, %v2065
  %2067 = vmatmul.f32.gmra.mxu0 %v1951
  %v2068 = vpop.f32.mrf.mxu0
  %v2069 = vadd.f32 0.0, %v2068
  %2070 = vmatmul.f32.gmra.mxu0 %v1953
  %v2071 = vpop.f32.mrf.mxu0
  %v2072 = vadd.f32 0.0, %v2071
  %2073 = vmatmul.f32.gmra.mxu0 %v1955
  %v2074 = vpop.f32.mrf.mxu0
  %v2075 = vadd.f32 0.0, %v2074
  %2076 = vmatmul.f32.gmra.mxu0 %v1957
  %v2077 = vpop.f32.mrf.mxu0
  %v2078 = vadd.f32 0.0, %v2077
  %2079 = vmatmul.f32.gmra.mxu0 %v1959
  %v2080 = vpop.f32.mrf.mxu0
  %v2081 = vadd.f32 0.0, %v2080
  %2082 = vmatmul.f32.gmra.mxu0 %v1961
  %v2083 = vpop.f32.mrf.mxu0
  %v2084 = vadd.f32 0.0, %v2083
  %2085 = vmatmul.f32.gmra.mxu0 %v1963
  %v2086 = vpop.f32.mrf.mxu0
  %v2087 = vadd.f32 0.0, %v2086
  %2088 = vmatmul.f32.gmra.mxu0 %v1965
  %v2089 = vpop.f32.mrf.mxu0
  %v2090 = vadd.f32 0.0, %v2089
  %2091 = vmatmul.f32.gmra.mxu0 %v1967
  %v2092 = vpop.f32.mrf.mxu0
  %v2093 = vadd.f32 0.0, %v2092
  %2094 = vmatmul.f32.gmra.mxu0 %v1969
  %v2095 = vpop.f32.mrf.mxu0
  %v2096 = vadd.f32 0.0, %v2095
  %2097 = vmatmul.f32.gmra.mxu0 %v1971
  %v2098 = vpop.f32.mrf.mxu0
  %v2099 = vadd.f32 0.0, %v2098
  %2100 = vmatmul.f32.gmra.mxu0 %v1973
  %v2101 = vpop.f32.mrf.mxu0
  %v2102 = vadd.f32 0.0, %v2101
  %2103 = vmatmul.f32.gmra.mxu0 %v1975
  %v2104 = vpop.f32.mrf.mxu0
  %v2105 = vadd.f32 0.0, %v2104
  %2106 = vdwg.mxu0
  %v2107 = vadd.f32 %v1873, %v1995
  %v2108 = vadd.f32 %v1874, %v2060
  %v2109 = vadd.f32 %v1875, %v1998
  %v2110 = vadd.f32 %v1876, %v2063
  %v2111 = vadd.f32 %v1877, %v2001
  %v2112 = vadd.f32 %v1878, %v2066
  %v2113 = vadd.f32 %v1879, %v2004
  %v2114 = vadd.f32 %v1880, %v2069
  %v2115 = vadd.f32 %v1881, %v2007
  %v2116 = vadd.f32 %v1882, %v2072
  %v2117 = vadd.f32 %v1883, %v2010
  %v2118 = vadd.f32 %v1884, %v2075
  %v2119 = vadd.f32 %v1885, %v2013
  %v2120 = vadd.f32 %v1886, %v2078
  %v2121 = vadd.f32 %v1887, %v2016
  %v2122 = vadd.f32 %v1888, %v2081
  %v2123 = vadd.f32 %v1889, %v2019
  %v2124 = vadd.f32 %v1890, %v2084
  %v2125 = vadd.f32 %v1891, %v2022
  %v2126 = vadd.f32 %v1892, %v2087
  %v2127 = vadd.f32 %v1893, %v2025
  %v2128 = vadd.f32 %v1894, %v2090
  %v2129 = vadd.f32 %v1895, %v2028
  %v2130 = vadd.f32 %v1896, %v2093
  %v2131 = vadd.f32 %v1897, %v2031
  %v2132 = vadd.f32 %v1898, %v2096
  %v2133 = vadd.f32 %v1899, %v2034
  %v2134 = vadd.f32 %v1900, %v2099
  %v2135 = vadd.f32 %v1901, %v2037
  %v2136 = vadd.f32 %v1902, %v2102
  %v2137 = vadd.f32 %v1903, %v2040
  %v2138 = vadd.f32 %v1904, %v2105
  %v2139 = vadd.f32 %v2107, %v1237
  %v2140 = vadd.f32 %v2108, %v1238
  %v2141 = vadd.f32 %v2109, %v1237
  %v2142 = vadd.f32 %v2110, %v1238
  %v2143 = vadd.f32 %v2111, %v1237
  %v2144 = vadd.f32 %v2112, %v1238
  %v2145 = vadd.f32 %v2113, %v1237
  %v2146 = vadd.f32 %v2114, %v1238
  %v2147 = vadd.f32 %v2115, %v1237
  %v2148 = vadd.f32 %v2116, %v1238
  %v2149 = vadd.f32 %v2117, %v1237
  %v2150 = vadd.f32 %v2118, %v1238
  %v2151 = vadd.f32 %v2119, %v1237
  %v2152 = vadd.f32 %v2120, %v1238
  %v2153 = vadd.f32 %v2121, %v1237
  %v2154 = vadd.f32 %v2122, %v1238
  %v2155 = vadd.f32 %v2123, %v1237
  %v2156 = vadd.f32 %v2124, %v1238
  %v2157 = vadd.f32 %v2125, %v1237
  %v2158 = vadd.f32 %v2126, %v1238
  %v2159 = vadd.f32 %v2127, %v1237
  %v2160 = vadd.f32 %v2128, %v1238
  %v2161 = vadd.f32 %v2129, %v1237
  %v2162 = vadd.f32 %v2130, %v1238
  %v2163 = vadd.f32 %v2131, %v1237
  %v2164 = vadd.f32 %v2132, %v1238
  %v2165 = vadd.f32 %v2133, %v1237
  %v2166 = vadd.f32 %v2134, %v1238
  %v2167 = vadd.f32 %v2135, %v1237
  %v2168 = vadd.f32 %v2136, %v1238
  %v2169 = vadd.f32 %v2137, %v1237
  %v2170 = vadd.f32 %v2138, %v1238
  %v2171 = vmax.f32 %v2139, 0.0
  %v2172 = vmax.f32 %v2140, 0.0
  %v2173 = vmax.f32 %v2141, 0.0
  %v2174 = vmax.f32 %v2142, 0.0
  %v2175 = vmax.f32 %v2143, 0.0
  %v2176 = vmax.f32 %v2144, 0.0
  %v2177 = vmax.f32 %v2145, 0.0
  %v2178 = vmax.f32 %v2146, 0.0
  %v2179 = vmax.f32 %v2147, 0.0
  %v2180 = vmax.f32 %v2148, 0.0
  %v2181 = vmax.f32 %v2149, 0.0
  %v2182 = vmax.f32 %v2150, 0.0
  %v2183 = vmax.f32 %v2151, 0.0
  %v2184 = vmax.f32 %v2152, 0.0
  %v2185 = vmax.f32 %v2153, 0.0
  %v2186 = vmax.f32 %v2154, 0.0
  %v2187 = vmax.f32 %v2155, 0.0
  %v2188 = vmax.f32 %v2156, 0.0
  %v2189 = vmax.f32 %v2157, 0.0
  %v2190 = vmax.f32 %v2158, 0.0
  %v2191 = vmax.f32 %v2159, 0.0
  %v2192 = vmax.f32 %v2160, 0.0
  %v2193 = vmax.f32 %v2161, 0.0
  %v2194 = vmax.f32 %v2162, 0.0
  %v2195 = vmax.f32 %v2163, 0.0
  %v2196 = vmax.f32 %v2164, 0.0
  %v2197 = vmax.f32 %v2165, 0.0
  %v2198 = vmax.f32 %v2166, 0.0
  %v2199 = vmax.f32 %v2167, 0.0
  %v2200 = vmax.f32 %v2168, 0.0
  %v2201 = vmax.f32 %v2169, 0.0
  %v2202 = vmax.f32 %v2170, 0.0
  %v2203 = vmax.f32 %v2171, %v2172
  %v2204 = vmax.f32 %v2173, %v2174
  %v2205 = vmax.f32 %v2175, %v2176
  %v2206 = vmax.f32 %v2177, %v2178
  %v2207 = vmax.f32 %v2179, %v2180
  %v2208 = vmax.f32 %v2181, %v2182
  %v2209 = vmax.f32 %v2183, %v2184
  %v2210 = vmax.f32 %v2185, %v2186
  %v2211 = vmax.f32 %v2187, %v2188
  %v2212 = vmax.f32 %v2189, %v2190
  %v2213 = vmax.f32 %v2191, %v2192
  %v2214 = vmax.f32 %v2193, %v2194
  %v2215 = vmax.f32 %v2195, %v2196
  %v2216 = vmax.f32 %v2197, %v2198
  %v2217 = vmax.f32 %v2199, %v2200
  %v2218 = vmax.f32 %v2201, %v2202
  %v2219 = vmax.f32 %v1305, %v2203
  %v2220 = vmax.f32 %v1306, %v2204
  %v2221 = vmax.f32 %v1307, %v2205
  %v2222 = vmax.f32 %v1308, %v2206
  %v2223 = vmax.f32 %v1309, %v2207
  %v2224 = vmax.f32 %v1310, %v2208
  %v2225 = vmax.f32 %v1311, %v2209
  %v2226 = vmax.f32 %v1312, %v2210
  %v2227 = vmax.f32 %v1313, %v2211
  %v2228 = vmax.f32 %v1314, %v2212
  %v2229 = vmax.f32 %v1315, %v2213
  %v2230 = vmax.f32 %v1316, %v2214
  %v2231 = vmax.f32 %v1317, %v2215
  %v2232 = vmax.f32 %v1318, %v2216
  %v2233 = vmax.f32 %v1319, %v2217
  %v2234 = vmax.f32 %v1320, %v2218
  %v2235 = vld [vmem:[%s4] sm:$0xff]
  %v2236 = vld [vmem:[%s4 + $0x8] sm:$0xff]
  %v2237 = vld [vmem:[%s4 + $0x10] sm:$0xff]
  %v2238 = vld [vmem:[%s4 + $0x18] sm:$0xff]
  %v2239 = vld [vmem:[%s4 + $0x20] sm:$0xff]
  %v2240 = vld [vmem:[%s4 + $0x28] sm:$0xff]
  %v2241 = vld [vmem:[%s4 + $0x30] sm:$0xff]
  %v2242 = vld [vmem:[%s4 + $0x38] sm:$0xff]
  %v2243 = vld [vmem:[%s4 + $0x40] sm:$0xff]
  %v2244 = vld [vmem:[%s4 + $0x48] sm:$0xff]
  %v2245 = vld [vmem:[%s4 + $0x50] sm:$0xff]
  %v2246 = vld [vmem:[%s4 + $0x58] sm:$0xff]
  %v2247 = vld [vmem:[%s4 + $0x60] sm:$0xff]
  %v2248 = vld [vmem:[%s4 + $0x68] sm:$0xff]
  %v2249 = vld [vmem:[%s4 + $0x70] sm:$0xff]
  %v2250 = vld [vmem:[%s4 + $0x78] sm:$0xff]
  %v2251 = vld [vmem:[%s4 + $0x80] sm:$0xff]
  %v2252 = vld [vmem:[%s4 + $0x88] sm:$0xff]
  %v2253 = vld [vmem:[%s4 + $0x90] sm:$0xff]
  %v2254 = vld [vmem:[%s4 + $0x98] sm:$0xff]
  %v2255 = vld [vmem:[%s4 + $0xa0] sm:$0xff]
  %v2256 = vld [vmem:[%s4 + $0xa8] sm:$0xff]
  %v2257 = vld [vmem:[%s4 + $0xb0] sm:$0xff]
  %v2258 = vld [vmem:[%s4 + $0xb8] sm:$0xff]
  %v2259 = vld [vmem:[%s4 + $0xc0] sm:$0xff]
  %v2260 = vld [vmem:[%s4 + $0xc8] sm:$0xff]
  %v2261 = vld [vmem:[%s4 + $0xd0] sm:$0xff]
  %v2262 = vld [vmem:[%s4 + $0xd8] sm:$0xff]
  %v2263 = vld [vmem:[%s4 + $0xe0] sm:$0xff]
  %v2264 = vld [vmem:[%s4 + $0xe8] sm:$0xff]
  %v2265 = vld [vmem:[%s4 + $0xf0] sm:$0xff]
  %v2266 = vld [vmem:[%s4 + $0xf8] sm:$0xff]
  %v2283 = vrot.slane %v2219, 1
  %v2284 = vrot.slane %v2220, 1
  %v2285 = vsel %vm478, %v2283, %v2284
  %v2286 = vrot.slane %v2221, 1
  %v2287 = vrot.slane %v2222, 1
  %v2288 = vsel %vm478, %v2286, %v2287
  %v2289 = vrot.slane %v2223, 1
  %v2290 = vrot.slane %v2224, 1
  %v2291 = vsel %vm478, %v2289, %v2290
  %v2292 = vrot.slane %v2225, 1
  %v2293 = vrot.slane %v2226, 1
  %v2294 = vsel %vm478, %v2292, %v2293
  %v2295 = vrot.slane %v2227, 1
  %v2296 = vrot.slane %v2228, 1
  %v2297 = vsel %vm478, %v2295, %v2296
  %v2298 = vrot.slane %v2229, 1
  %v2299 = vrot.slane %v2230, 1
  %v2300 = vsel %vm478, %v2298, %v2299
  %v2301 = vrot.slane %v2231, 1
  %v2302 = vrot.slane %v2232, 1
  %v2303 = vsel %vm478, %v2301, %v2302
  %v2304 = vrot.slane %v2233, 1
  %v2305 = vrot.slane %v2234, 1
  %v2306 = vsel %vm478, %v2304, %v2305
  %s2315 = scalar_lea.vmem %s4, 256
  %v2316 = vld [vmem:[%s2315] sm:$0xff]
  %v2317 = vld [vmem:[%s2315 + $0x8] sm:$0xff]
  %v2318 = vld [vmem:[%s2315 + $0x10] sm:$0xff]
  %v2319 = vld [vmem:[%s2315 + $0x18] sm:$0xff]
  %v2320 = vld [vmem:[%s2315 + $0x20] sm:$0xff]
  %v2321 = vld [vmem:[%s2315 + $0x28] sm:$0xff]
  %v2322 = vld [vmem:[%s2315 + $0x30] sm:$0xff]
  %v2323 = vld [vmem:[%s2315 + $0x38] sm:$0xff]
  %v2324 = vld [vmem:[%s2315 + $0x40] sm:$0xff]
  %v2325 = vld [vmem:[%s2315 + $0x48] sm:$0xff]
  %v2326 = vld [vmem:[%s2315 + $0x50] sm:$0xff]
  %v2327 = vld [vmem:[%s2315 + $0x58] sm:$0xff]
  %v2328 = vld [vmem:[%s2315 + $0x60] sm:$0xff]
  %v2329 = vld [vmem:[%s2315 + $0x68] sm:$0xff]
  %v2330 = vld [vmem:[%s2315 + $0x70] sm:$0xff]
  %v2331 = vld [vmem:[%s2315 + $0x78] sm:$0xff]
  %v2332 = vld [vmem:[%s2315 + $0x80] sm:$0xff]
  %v2333 = vld [vmem:[%s2315 + $0x88] sm:$0xff]
  %v2334 = vld [vmem:[%s2315 + $0x90] sm:$0xff]
  %v2335 = vld [vmem:[%s2315 + $0x98] sm:$0xff]
  %v2336 = vld [vmem:[%s2315 + $0xa0] sm:$0xff]
  %v2337 = vld [vmem:[%s2315 + $0xa8] sm:$0xff]
  %v2338 = vld [vmem:[%s2315 + $0xb0] sm:$0xff]
  %v2339 = vld [vmem:[%s2315 + $0xb8] sm:$0xff]
  %v2340 = vld [vmem:[%s2315 + $0xc0] sm:$0xff]
  %v2341 = vld [vmem:[%s2315 + $0xc8] sm:$0xff]
  %v2342 = vld [vmem:[%s2315 + $0xd0] sm:$0xff]
  %v2343 = vld [vmem:[%s2315 + $0xd8] sm:$0xff]
  %v2344 = vld [vmem:[%s2315 + $0xe0] sm:$0xff]
  %v2345 = vld [vmem:[%s2315 + $0xe8] sm:$0xff]
  %v2346 = vld [vmem:[%s2315 + $0xf0] sm:$0xff]
  %v2347 = vld [vmem:[%s2315 + $0xf8] sm:$0xff]
  %2348 = vmatpush.msra.mxu0 %v2346
  %2349 = vmatpush.msra.mxu0 %v2344
  %2350 = vmatpush.msra.mxu0 %v2342
  %2351 = vmatpush.msra.mxu0 %v2340
  %2352 = vmatpush.msra.mxu0 %v2338
  %2353 = vmatpush.msra.mxu0 %v2336
  %2354 = vmatpush.msra.mxu0 %v2334
  %2355 = vmatpush.msra.mxu0 %v2332
  %2356 = vmatpush.msra.mxu0 %v2330
  %2357 = vmatpush.msra.mxu0 %v2328
  %2358 = vmatpush.msra.mxu0 %v2326
  %2359 = vmatpush.msra.mxu0 %v2324
  %2360 = vmatpush.msra.mxu0 %v2322
  %2361 = vmatpush.msra.mxu0 %v2320
  %2362 = vmatpush.msra.mxu0 %v2318
  %2363 = vmatpush.msra.mxu0 %v2316
  %2364 = vmatmul.f32.gmra.mxu0 %v2285
  %v2365 = vpop.f32.mrf.mxu0
  %v2366 = vadd.f32 0.0, %v2365
  %2367 = vmatmul.f32.gmra.mxu0 %v2288
  %v2368 = vpop.f32.mrf.mxu0
  %v2369 = vadd.f32 0.0, %v2368
  %2370 = vmatmul.f32.gmra.mxu0 %v2291
  %v2371 = vpop.f32.mrf.mxu0
  %v2372 = vadd.f32 0.0, %v2371
  %2373 = vmatmul.f32.gmra.mxu0 %v2294
  %v2374 = vpop.f32.mrf.mxu0
  %v2375 = vadd.f32 0.0, %v2374
  %2376 = vmatmul.f32.gmra.mxu0 %v2297
  %v2377 = vpop.f32.mrf.mxu0
  %v2378 = vadd.f32 0.0, %v2377
  %2379 = vmatmul.f32.gmra.mxu0 %v2300
  %v2380 = vpop.f32.mrf.mxu0
  %v2381 = vadd.f32 0.0, %v2380
  %2382 = vmatmul.f32.gmra.mxu0 %v2303
  %v2383 = vpop.f32.mrf.mxu0
  %v2384 = vadd.f32 0.0, %v2383
  %2385 = vmatmul.f32.gmra.mxu0 %v2306
  %v2386 = vpop.f32.mrf.mxu0
  %v2387 = vadd.f32 0.0, %v2386
  %2388 = vdwg.mxu0
  %2389 = vmatpush.msra.mxu0 %v2347
  %2390 = vmatpush.msra.mxu0 %v2345
  %2391 = vmatpush.msra.mxu0 %v2343
  %2392 = vmatpush.msra.mxu0 %v2341
  %2393 = vmatpush.msra.mxu0 %v2339
  %2394 = vmatpush.msra.mxu0 %v2337
  %2395 = vmatpush.msra.mxu0 %v2335
  %2396 = vmatpush.msra.mxu0 %v2333
  %2397 = vmatpush.msra.mxu0 %v2331
  %2398 = vmatpush.msra.mxu0 %v2329
  %2399 = vmatpush.msra.mxu0 %v2327
  %2400 = vmatpush.msra.mxu0 %v2325
  %2401 = vmatpush.msra.mxu0 %v2323
  %2402 = vmatpush.msra.mxu0 %v2321
  %2403 = vmatpush.msra.mxu0 %v2319
  %2404 = vmatpush.msra.mxu0 %v2317
  %2405 = vmatmul.f32.gmra.mxu0 %v2285
  %v2406 = vpop.f32.mrf.mxu0
  %v2407 = vadd.f32 0.0, %v2406
  %2408 = vmatmul.f32.gmra.mxu0 %v2288
  %v2409 = vpop.f32.mrf.mxu0
  %v2410 = vadd.f32 0.0, %v2409
  %2411 = vmatmul.f32.gmra.mxu0 %v2291
  %v2412 = vpop.f32.mrf.mxu0
  %v2413 = vadd.f32 0.0, %v2412
  %2414 = vmatmul.f32.gmra.mxu0 %v2294
  %v2415 = vpop.f32.mrf.mxu0
  %v2416 = vadd.f32 0.0, %v2415
  %2417 = vmatmul.f32.gmra.mxu0 %v2297
  %v2418 = vpop.f32.mrf.mxu0
  %v2419 = vadd.f32 0.0, %v2418
  %2420 = vmatmul.f32.gmra.mxu0 %v2300
  %v2421 = vpop.f32.mrf.mxu0
  %v2422 = vadd.f32 0.0, %v2421
  %2423 = vmatmul.f32.gmra.mxu0 %v2303
  %v2424 = vpop.f32.mrf.mxu0
  %v2425 = vadd.f32 0.0, %v2424
  %2426 = vmatmul.f32.gmra.mxu0 %v2306
  %v2427 = vpop.f32.mrf.mxu0
  %v2428 = vadd.f32 0.0, %v2427
  %2429 = vdwg.mxu0
  %2430 = vmatpush.msra.mxu0 %v2265
  %2431 = vmatpush.msra.mxu0 %v2263
  %2432 = vmatpush.msra.mxu0 %v2261
  %2433 = vmatpush.msra.mxu0 %v2259
  %2434 = vmatpush.msra.mxu0 %v2257
  %2435 = vmatpush.msra.mxu0 %v2255
  %2436 = vmatpush.msra.mxu0 %v2253
  %2437 = vmatpush.msra.mxu0 %v2251
  %2438 = vmatpush.msra.mxu0 %v2249
  %2439 = vmatpush.msra.mxu0 %v2247
  %2440 = vmatpush.msra.mxu0 %v2245
  %2441 = vmatpush.msra.mxu0 %v2243
  %2442 = vmatpush.msra.mxu0 %v2241
  %2443 = vmatpush.msra.mxu0 %v2239
  %2444 = vmatpush.msra.mxu0 %v2237
  %2445 = vmatpush.msra.mxu0 %v2235
  %2446 = vmatmul.f32.gmra.mxu0 %v2219
  %v2447 = vpop.f32.mrf.mxu0
  %v2448 = vadd.f32 %v2366, %v2447
  %2449 = vmatmul.f32.gmra.mxu0 %v2221
  %v2450 = vpop.f32.mrf.mxu0
  %v2451 = vadd.f32 %v2369, %v2450
  %2452 = vmatmul.f32.gmra.mxu0 %v2223
  %v2453 = vpop.f32.mrf.mxu0
  %v2454 = vadd.f32 %v2372, %v2453
  %2455 = vmatmul.f32.gmra.mxu0 %v2225
  %v2456 = vpop.f32.mrf.mxu0
  %v2457 = vadd.f32 %v2375, %v2456
  %2458 = vmatmul.f32.gmra.mxu0 %v2227
  %v2459 = vpop.f32.mrf.mxu0
  %v2460 = vadd.f32 %v2378, %v2459
  %2461 = vmatmul.f32.gmra.mxu0 %v2229
  %v2462 = vpop.f32.mrf.mxu0
  %v2463 = vadd.f32 %v2381, %v2462
  %2464 = vmatmul.f32.gmra.mxu0 %v2231
  %v2465 = vpop.f32.mrf.mxu0
  %v2466 = vadd.f32 %v2384, %v2465
  %2467 = vmatmul.f32.gmra.mxu0 %v2233
  %v2468 = vpop.f32.mrf.mxu0
  %v2469 = vadd.f32 %v2387, %v2468
  %2470 = vdwg.mxu0
  %2471 = vmatpush.msra.mxu0 %v2266
  %2472 = vmatpush.msra.mxu0 %v2264
  %2473 = vmatpush.msra.mxu0 %v2262
  %2474 = vmatpush.msra.mxu0 %v2260
  %2475 = vmatpush.msra.mxu0 %v2258
  %2476 = vmatpush.msra.mxu0 %v2256
  %2477 = vmatpush.msra.mxu0 %v2254
  %2478 = vmatpush.msra.mxu0 %v2252
  %2479 = vmatpush.msra.mxu0 %v2250
  %2480 = vmatpush.msra.mxu0 %v2248
  %2481 = vmatpush.msra.mxu0 %v2246
  %2482 = vmatpush.msra.mxu0 %v2244
  %2483 = vmatpush.msra.mxu0 %v2242
  %2484 = vmatpush.msra.mxu0 %v2240
  %2485 = vmatpush.msra.mxu0 %v2238
  %2486 = vmatpush.msra.mxu0 %v2236
  %2487 = vmatmul.f32.gmra.mxu0 %v2219
  %v2488 = vpop.f32.mrf.mxu0
  %v2489 = vadd.f32 %v2407, %v2488
  %2490 = vmatmul.f32.gmra.mxu0 %v2221
  %v2491 = vpop.f32.mrf.mxu0
  %v2492 = vadd.f32 %v2410, %v2491
  %2493 = vmatmul.f32.gmra.mxu0 %v2223
  %v2494 = vpop.f32.mrf.mxu0
  %v2495 = vadd.f32 %v2413, %v2494
  %2496 = vmatmul.f32.gmra.mxu0 %v2225
  %v2497 = vpop.f32.mrf.mxu0
  %v2498 = vadd.f32 %v2416, %v2497
  %2499 = vmatmul.f32.gmra.mxu0 %v2227
  %v2500 = vpop.f32.mrf.mxu0
  %v2501 = vadd.f32 %v2419, %v2500
  %2502 = vmatmul.f32.gmra.mxu0 %v2229
  %v2503 = vpop.f32.mrf.mxu0
  %v2504 = vadd.f32 %v2422, %v2503
  %2505 = vmatmul.f32.gmra.mxu0 %v2231
  %v2506 = vpop.f32.mrf.mxu0
  %v2507 = vadd.f32 %v2425, %v2506
  %2508 = vmatmul.f32.gmra.mxu0 %v2233
  %v2509 = vpop.f32.mrf.mxu0
  %v2510 = vadd.f32 %v2428, %v2509
  %2511 = vdwg.mxu0
  %v2512 = vrot.slane %v2219, 2
  %v2513 = vrot.slane %v2220, 2
  %v2514 = vsel %vm985, %v2512, %v2513
  %v2515 = vrot.slane %v2221, 2
  %v2516 = vrot.slane %v2222, 2
  %v2517 = vsel %vm985, %v2515, %v2516
  %v2518 = vrot.slane %v2223, 2
  %v2519 = vrot.slane %v2224, 2
  %v2520 = vsel %vm985, %v2518, %v2519
  %v2521 = vrot.slane %v2225, 2
  %v2522 = vrot.slane %v2226, 2
  %v2523 = vsel %vm985, %v2521, %v2522
  %v2524 = vrot.slane %v2227, 2
  %v2525 = vrot.slane %v2228, 2
  %v2526 = vsel %vm985, %v2524, %v2525
  %v2527 = vrot.slane %v2229, 2
  %v2528 = vrot.slane %v2230, 2
  %v2529 = vsel %vm985, %v2527, %v2528
  %v2530 = vrot.slane %v2231, 2
  %v2531 = vrot.slane %v2232, 2
  %v2532 = vsel %vm985, %v2530, %v2531
  %v2533 = vrot.slane %v2233, 2
  %v2534 = vrot.slane %v2234, 2
  %v2535 = vsel %vm985, %v2533, %v2534
  %s2544 = scalar_lea.vmem %s4, 512
  %v2545 = vld [vmem:[%s2544] sm:$0xff]
  %v2546 = vld [vmem:[%s2544 + $0x8] sm:$0xff]
  %v2547 = vld [vmem:[%s2544 + $0x10] sm:$0xff]
  %v2548 = vld [vmem:[%s2544 + $0x18] sm:$0xff]
  %v2549 = vld [vmem:[%s2544 + $0x20] sm:$0xff]
  %v2550 = vld [vmem:[%s2544 + $0x28] sm:$0xff]
  %v2551 = vld [vmem:[%s2544 + $0x30] sm:$0xff]
  %v2552 = vld [vmem:[%s2544 + $0x38] sm:$0xff]
  %v2553 = vld [vmem:[%s2544 + $0x40] sm:$0xff]
  %v2554 = vld [vmem:[%s2544 + $0x48] sm:$0xff]
  %v2555 = vld [vmem:[%s2544 + $0x50] sm:$0xff]
  %v2556 = vld [vmem:[%s2544 + $0x58] sm:$0xff]
  %v2557 = vld [vmem:[%s2544 + $0x60] sm:$0xff]
  %v2558 = vld [vmem:[%s2544 + $0x68] sm:$0xff]
  %v2559 = vld [vmem:[%s2544 + $0x70] sm:$0xff]
  %v2560 = vld [vmem:[%s2544 + $0x78] sm:$0xff]
  %v2561 = vld [vmem:[%s2544 + $0x80] sm:$0xff]
  %v2562 = vld [vmem:[%s2544 + $0x88] sm:$0xff]
  %v2563 = vld [vmem:[%s2544 + $0x90] sm:$0xff]
  %v2564 = vld [vmem:[%s2544 + $0x98] sm:$0xff]
  %v2565 = vld [vmem:[%s2544 + $0xa0] sm:$0xff]
  %v2566 = vld [vmem:[%s2544 + $0xa8] sm:$0xff]
  %v2567 = vld [vmem:[%s2544 + $0xb0] sm:$0xff]
  %v2568 = vld [vmem:[%s2544 + $0xb8] sm:$0xff]
  %v2569 = vld [vmem:[%s2544 + $0xc0] sm:$0xff]
  %v2570 = vld [vmem:[%s2544 + $0xc8] sm:$0xff]
  %v2571 = vld [vmem:[%s2544 + $0xd0] sm:$0xff]
  %v2572 = vld [vmem:[%s2544 + $0xd8] sm:$0xff]
  %v2573 = vld [vmem:[%s2544 + $0xe0] sm:$0xff]
  %v2574 = vld [vmem:[%s2544 + $0xe8] sm:$0xff]
  %v2575 = vld [vmem:[%s2544 + $0xf0] sm:$0xff]
  %v2576 = vld [vmem:[%s2544 + $0xf8] sm:$0xff]
  %2577 = vmatpush.msra.mxu0 %v2575
  %2578 = vmatpush.msra.mxu0 %v2573
  %2579 = vmatpush.msra.mxu0 %v2571
  %2580 = vmatpush.msra.mxu0 %v2569
  %2581 = vmatpush.msra.mxu0 %v2567
  %2582 = vmatpush.msra.mxu0 %v2565
  %2583 = vmatpush.msra.mxu0 %v2563
  %2584 = vmatpush.msra.mxu0 %v2561
  %2585 = vmatpush.msra.mxu0 %v2559
  %2586 = vmatpush.msra.mxu0 %v2557
  %2587 = vmatpush.msra.mxu0 %v2555
  %2588 = vmatpush.msra.mxu0 %v2553
  %2589 = vmatpush.msra.mxu0 %v2551
  %2590 = vmatpush.msra.mxu0 %v2549
  %2591 = vmatpush.msra.mxu0 %v2547
  %2592 = vmatpush.msra.mxu0 %v2545
  %2593 = vmatmul.f32.gmra.mxu0 %v2514
  %v2594 = vpop.f32.mrf.mxu0
  %v2595 = vadd.f32 0.0, %v2594
  %2596 = vmatmul.f32.gmra.mxu0 %v2517
  %v2597 = vpop.f32.mrf.mxu0
  %v2598 = vadd.f32 0.0, %v2597
  %2599 = vmatmul.f32.gmra.mxu0 %v2520
  %v2600 = vpop.f32.mrf.mxu0
  %v2601 = vadd.f32 0.0, %v2600
  %2602 = vmatmul.f32.gmra.mxu0 %v2523
  %v2603 = vpop.f32.mrf.mxu0
  %v2604 = vadd.f32 0.0, %v2603
  %2605 = vmatmul.f32.gmra.mxu0 %v2526
  %v2606 = vpop.f32.mrf.mxu0
  %v2607 = vadd.f32 0.0, %v2606
  %2608 = vmatmul.f32.gmra.mxu0 %v2529
  %v2609 = vpop.f32.mrf.mxu0
  %v2610 = vadd.f32 0.0, %v2609
  %2611 = vmatmul.f32.gmra.mxu0 %v2532
  %v2612 = vpop.f32.mrf.mxu0
  %v2613 = vadd.f32 0.0, %v2612
  %2614 = vmatmul.f32.gmra.mxu0 %v2535
  %v2615 = vpop.f32.mrf.mxu0
  %v2616 = vadd.f32 0.0, %v2615
  %2617 = vdwg.mxu0
  %2618 = vmatpush.msra.mxu0 %v2576
  %2619 = vmatpush.msra.mxu0 %v2574
  %2620 = vmatpush.msra.mxu0 %v2572
  %2621 = vmatpush.msra.mxu0 %v2570
  %2622 = vmatpush.msra.mxu0 %v2568
  %2623 = vmatpush.msra.mxu0 %v2566
  %2624 = vmatpush.msra.mxu0 %v2564
  %2625 = vmatpush.msra.mxu0 %v2562
  %2626 = vmatpush.msra.mxu0 %v2560
  %2627 = vmatpush.msra.mxu0 %v2558
  %2628 = vmatpush.msra.mxu0 %v2556
  %2629 = vmatpush.msra.mxu0 %v2554
  %2630 = vmatpush.msra.mxu0 %v2552
  %2631 = vmatpush.msra.mxu0 %v2550
  %2632 = vmatpush.msra.mxu0 %v2548
  %2633 = vmatpush.msra.mxu0 %v2546
  %2634 = vmatmul.f32.gmra.mxu0 %v2514
  %v2635 = vpop.f32.mrf.mxu0
  %v2636 = vadd.f32 0.0, %v2635
  %2637 = vmatmul.f32.gmra.mxu0 %v2517
  %v2638 = vpop.f32.mrf.mxu0
  %v2639 = vadd.f32 0.0, %v2638
  %2640 = vmatmul.f32.gmra.mxu0 %v2520
  %v2641 = vpop.f32.mrf.mxu0
  %v2642 = vadd.f32 0.0, %v2641
  %2643 = vmatmul.f32.gmra.mxu0 %v2523
  %v2644 = vpop.f32.mrf.mxu0
  %v2645 = vadd.f32 0.0, %v2644
  %2646 = vmatmul.f32.gmra.mxu0 %v2526
  %v2647 = vpop.f32.mrf.mxu0
  %v2648 = vadd.f32 0.0, %v2647
  %2649 = vmatmul.f32.gmra.mxu0 %v2529
  %v2650 = vpop.f32.mrf.mxu0
  %v2651 = vadd.f32 0.0, %v2650
  %2652 = vmatmul.f32.gmra.mxu0 %v2532
  %v2653 = vpop.f32.mrf.mxu0
  %v2654 = vadd.f32 0.0, %v2653
  %2655 = vmatmul.f32.gmra.mxu0 %v2535
  %v2656 = vpop.f32.mrf.mxu0
  %v2657 = vadd.f32 0.0, %v2656
  %2658 = vdwg.mxu0
  %v2659 = vadd.f32 %v2448, %v2595
  %v2660 = vadd.f32 %v2489, %v2636
  %v2661 = vadd.f32 %v2451, %v2598
  %v2662 = vadd.f32 %v2492, %v2639
  %v2663 = vadd.f32 %v2454, %v2601
  %v2664 = vadd.f32 %v2495, %v2642
  %v2665 = vadd.f32 %v2457, %v2604
  %v2666 = vadd.f32 %v2498, %v2645
  %v2667 = vadd.f32 %v2460, %v2607
  %v2668 = vadd.f32 %v2501, %v2648
  %v2669 = vadd.f32 %v2463, %v2610
  %v2670 = vadd.f32 %v2504, %v2651
  %v2671 = vadd.f32 %v2466, %v2613
  %v2672 = vadd.f32 %v2507, %v2654
  %v2673 = vadd.f32 %v2469, %v2616
  %v2674 = vadd.f32 %v2510, %v2657
  %vm2675 = vcmask 1044480
  %v2676 = vrot.slane %v2219, 3
  %v2677 = vrot.slane %v2220, 3
  %v2678 = vsel %vm2675, %v2676, %v2677
  %v2679 = vrot.slane %v2221, 3
  %v2680 = vrot.slane %v2222, 3
  %v2681 = vsel %vm2675, %v2679, %v2680
  %v2682 = vrot.slane %v2223, 3
  %v2683 = vrot.slane %v2224, 3
  %v2684 = vsel %vm2675, %v2682, %v2683
  %v2685 = vrot.slane %v2225, 3
  %v2686 = vrot.slane %v2226, 3
  %v2687 = vsel %vm2675, %v2685, %v2686
  %v2688 = vrot.slane %v2227, 3
  %v2689 = vrot.slane %v2228, 3
  %v2690 = vsel %vm2675, %v2688, %v2689
  %v2691 = vrot.slane %v2229, 3
  %v2692 = vrot.slane %v2230, 3
  %v2693 = vsel %vm2675, %v2691, %v2692
  %v2694 = vrot.slane %v2231, 3
  %v2695 = vrot.slane %v2232, 3
  %v2696 = vsel %vm2675, %v2694, %v2695
  %v2697 = vrot.slane %v2233, 3
  %v2698 = vrot.slane %v2234, 3
  %v2699 = vsel %vm2675, %v2697, %v2698
  %s2708 = scalar_lea.vmem %s4, 768
  %v2709 = vld [vmem:[%s2708] sm:$0xff]
  %v2710 = vld [vmem:[%s2708 + $0x8] sm:$0xff]
  %v2711 = vld [vmem:[%s2708 + $0x10] sm:$0xff]
  %v2712 = vld [vmem:[%s2708 + $0x18] sm:$0xff]
  %v2713 = vld [vmem:[%s2708 + $0x20] sm:$0xff]
  %v2714 = vld [vmem:[%s2708 + $0x28] sm:$0xff]
  %v2715 = vld [vmem:[%s2708 + $0x30] sm:$0xff]
  %v2716 = vld [vmem:[%s2708 + $0x38] sm:$0xff]
  %v2717 = vld [vmem:[%s2708 + $0x40] sm:$0xff]
  %v2718 = vld [vmem:[%s2708 + $0x48] sm:$0xff]
  %v2719 = vld [vmem:[%s2708 + $0x50] sm:$0xff]
  %v2720 = vld [vmem:[%s2708 + $0x58] sm:$0xff]
  %v2721 = vld [vmem:[%s2708 + $0x60] sm:$0xff]
  %v2722 = vld [vmem:[%s2708 + $0x68] sm:$0xff]
  %v2723 = vld [vmem:[%s2708 + $0x70] sm:$0xff]
  %v2724 = vld [vmem:[%s2708 + $0x78] sm:$0xff]
  %v2725 = vld [vmem:[%s2708 + $0x80] sm:$0xff]
  %v2726 = vld [vmem:[%s2708 + $0x88] sm:$0xff]
  %v2727 = vld [vmem:[%s2708 + $0x90] sm:$0xff]
  %v2728 = vld [vmem:[%s2708 + $0x98] sm:$0xff]
  %v2729 = vld [vmem:[%s2708 + $0xa0] sm:$0xff]
  %v2730 = vld [vmem:[%s2708 + $0xa8] sm:$0xff]
  %v2731 = vld [vmem:[%s2708 + $0xb0] sm:$0xff]
  %v2732 = vld [vmem:[%s2708 + $0xb8] sm:$0xff]
  %v2733 = vld [vmem:[%s2708 + $0xc0] sm:$0xff]
  %v2734 = vld [vmem:[%s2708 + $0xc8] sm:$0xff]
  %v2735 = vld [vmem:[%s2708 + $0xd0] sm:$0xff]
  %v2736 = vld [vmem:[%s2708 + $0xd8] sm:$0xff]
  %v2737 = vld [vmem:[%s2708 + $0xe0] sm:$0xff]
  %v2738 = vld [vmem:[%s2708 + $0xe8] sm:$0xff]
  %v2739 = vld [vmem:[%s2708 + $0xf0] sm:$0xff]
  %v2740 = vld [vmem:[%s2708 + $0xf8] sm:$0xff]
  %2741 = vmatpush.msra.mxu0 %v2739
  %2742 = vmatpush.msra.mxu0 %v2737
  %2743 = vmatpush.msra.mxu0 %v2735
  %2744 = vmatpush.msra.mxu0 %v2733
  %2745 = vmatpush.msra.mxu0 %v2731
  %2746 = vmatpush.msra.mxu0 %v2729
  %2747 = vmatpush.msra.mxu0 %v2727
  %2748 = vmatpush.msra.mxu0 %v2725
  %2749 = vmatpush.msra.mxu0 %v2723
  %2750 = vmatpush.msra.mxu0 %v2721
  %2751 = vmatpush.msra.mxu0 %v2719
  %2752 = vmatpush.msra.mxu0 %v2717
  %2753 = vmatpush.msra.mxu0 %v2715
  %2754 = vmatpush.msra.mxu0 %v2713
  %2755 = vmatpush.msra.mxu0 %v2711
  %2756 = vmatpush.msra.mxu0 %v2709
  %2757 = vmatmul.f32.gmra.mxu0 %v2678
  %v2758 = vpop.f32.mrf.mxu0
  %v2759 = vadd.f32 0.0, %v2758
  %2760 = vmatmul.f32.gmra.mxu0 %v2681
  %v2761 = vpop.f32.mrf.mxu0
  %v2762 = vadd.f32 0.0, %v2761
  %2763 = vmatmul.f32.gmra.mxu0 %v2684
  %v2764 = vpop.f32.mrf.mxu0
  %v2765 = vadd.f32 0.0, %v2764
  %2766 = vmatmul.f32.gmra.mxu0 %v2687
  %v2767 = vpop.f32.mrf.mxu0
  %v2768 = vadd.f32 0.0, %v2767
  %2769 = vmatmul.f32.gmra.mxu0 %v2690
  %v2770 = vpop.f32.mrf.mxu0
  %v2771 = vadd.f32 0.0, %v2770
  %2772 = vmatmul.f32.gmra.mxu0 %v2693
  %v2773 = vpop.f32.mrf.mxu0
  %v2774 = vadd.f32 0.0, %v2773
  %2775 = vmatmul.f32.gmra.mxu0 %v2696
  %v2776 = vpop.f32.mrf.mxu0
  %v2777 = vadd.f32 0.0, %v2776
  %2778 = vmatmul.f32.gmra.mxu0 %v2699
  %v2779 = vpop.f32.mrf.mxu0
  %v2780 = vadd.f32 0.0, %v2779
  %2781 = vdwg.mxu0
  %2782 = vmatpush.msra.mxu0 %v2740
  %2783 = vmatpush.msra.mxu0 %v2738
  %2784 = vmatpush.msra.mxu0 %v2736
  %2785 = vmatpush.msra.mxu0 %v2734
  %2786 = vmatpush.msra.mxu0 %v2732
  %2787 = vmatpush.msra.mxu0 %v2730
  %2788 = vmatpush.msra.mxu0 %v2728
  %2789 = vmatpush.msra.mxu0 %v2726
  %2790 = vmatpush.msra.mxu0 %v2724
  %2791 = vmatpush.msra.mxu0 %v2722
  %2792 = vmatpush.msra.mxu0 %v2720
  %2793 = vmatpush.msra.mxu0 %v2718
  %2794 = vmatpush.msra.mxu0 %v2716
  %2795 = vmatpush.msra.mxu0 %v2714
  %2796 = vmatpush.msra.mxu0 %v2712
  %2797 = vmatpush.msra.mxu0 %v2710
  %2798 = vmatmul.f32.gmra.mxu0 %v2678
  %v2799 = vpop.f32.mrf.mxu0
  %v2800 = vadd.f32 0.0, %v2799
  %2801 = vmatmul.f32.gmra.mxu0 %v2681
  %v2802 = vpop.f32.mrf.mxu0
  %v2803 = vadd.f32 0.0, %v2802
  %2804 = vmatmul.f32.gmra.mxu0 %v2684
  %v2805 = vpop.f32.mrf.mxu0
  %v2806 = vadd.f32 0.0, %v2805
  %2807 = vmatmul.f32.gmra.mxu0 %v2687
  %v2808 = vpop.f32.mrf.mxu0
  %v2809 = vadd.f32 0.0, %v2808
  %2810 = vmatmul.f32.gmra.mxu0 %v2690
  %v2811 = vpop.f32.mrf.mxu0
  %v2812 = vadd.f32 0.0, %v2811
  %2813 = vmatmul.f32.gmra.mxu0 %v2693
  %v2814 = vpop.f32.mrf.mxu0
  %v2815 = vadd.f32 0.0, %v2814
  %2816 = vmatmul.f32.gmra.mxu0 %v2696
  %v2817 = vpop.f32.mrf.mxu0
  %v2818 = vadd.f32 0.0, %v2817
  %2819 = vmatmul.f32.gmra.mxu0 %v2699
  %v2820 = vpop.f32.mrf.mxu0
  %v2821 = vadd.f32 0.0, %v2820
  %2822 = vdwg.mxu0
  %v2823 = vadd.f32 %v2659, %v2759
  %v2824 = vadd.f32 %v2660, %v2800
  %v2825 = vadd.f32 %v2661, %v2762
  %v2826 = vadd.f32 %v2662, %v2803
  %v2827 = vadd.f32 %v2663, %v2765
  %v2828 = vadd.f32 %v2664, %v2806
  %v2829 = vadd.f32 %v2665, %v2768
  %v2830 = vadd.f32 %v2666, %v2809
  %v2831 = vadd.f32 %v2667, %v2771
  %v2832 = vadd.f32 %v2668, %v2812
  %v2833 = vadd.f32 %v2669, %v2774
  %v2834 = vadd.f32 %v2670, %v2815
  %v2835 = vadd.f32 %v2671, %v2777
  %v2836 = vadd.f32 %v2672, %v2818
  %v2837 = vadd.f32 %v2673, %v2780
  %v2838 = vadd.f32 %v2674, %v2821
  %v2839 = vrot.slane %v2219, 4
  %v2840 = vrot.slane %v2220, 4
  %v2841 = vsel %vm149, %v2839, %v2840
  %v2842 = vrot.slane %v2221, 4
  %v2843 = vrot.slane %v2222, 4
  %v2844 = vsel %vm149, %v2842, %v2843
  %v2845 = vrot.slane %v2223, 4
  %v2846 = vrot.slane %v2224, 4
  %v2847 = vsel %vm149, %v2845, %v2846
  %v2848 = vrot.slane %v2225, 4
  %v2849 = vrot.slane %v2226, 4
  %v2850 = vsel %vm149, %v2848, %v2849
  %v2851 = vrot.slane %v2227, 4
  %v2852 = vrot.slane %v2228, 4
  %v2853 = vsel %vm149, %v2851, %v2852
  %v2854 = vrot.slane %v2229, 4
  %v2855 = vrot.slane %v2230, 4
  %v2856 = vsel %vm149, %v2854, %v2855
  %v2857 = vrot.slane %v2231, 4
  %v2858 = vrot.slane %v2232, 4
  %v2859 = vsel %vm149, %v2857, %v2858
  %v2860 = vrot.slane %v2233, 4
  %v2861 = vrot.slane %v2234, 4
  %v2862 = vsel %vm149, %v2860, %v2861
  %s2871 = scalar_lea.vmem %s4, 1024
  %v2872 = vld [vmem:[%s2871] sm:$0xff]
  %v2873 = vld [vmem:[%s2871 + $0x8] sm:$0xff]
  %v2874 = vld [vmem:[%s2871 + $0x10] sm:$0xff]
  %v2875 = vld [vmem:[%s2871 + $0x18] sm:$0xff]
  %v2876 = vld [vmem:[%s2871 + $0x20] sm:$0xff]
  %v2877 = vld [vmem:[%s2871 + $0x28] sm:$0xff]
  %v2878 = vld [vmem:[%s2871 + $0x30] sm:$0xff]
  %v2879 = vld [vmem:[%s2871 + $0x38] sm:$0xff]
  %v2880 = vld [vmem:[%s2871 + $0x40] sm:$0xff]
  %v2881 = vld [vmem:[%s2871 + $0x48] sm:$0xff]
  %v2882 = vld [vmem:[%s2871 + $0x50] sm:$0xff]
  %v2883 = vld [vmem:[%s2871 + $0x58] sm:$0xff]
  %v2884 = vld [vmem:[%s2871 + $0x60] sm:$0xff]
  %v2885 = vld [vmem:[%s2871 + $0x68] sm:$0xff]
  %v2886 = vld [vmem:[%s2871 + $0x70] sm:$0xff]
  %v2887 = vld [vmem:[%s2871 + $0x78] sm:$0xff]
  %v2888 = vld [vmem:[%s2871 + $0x80] sm:$0xff]
  %v2889 = vld [vmem:[%s2871 + $0x88] sm:$0xff]
  %v2890 = vld [vmem:[%s2871 + $0x90] sm:$0xff]
  %v2891 = vld [vmem:[%s2871 + $0x98] sm:$0xff]
  %v2892 = vld [vmem:[%s2871 + $0xa0] sm:$0xff]
  %v2893 = vld [vmem:[%s2871 + $0xa8] sm:$0xff]
  %v2894 = vld [vmem:[%s2871 + $0xb0] sm:$0xff]
  %v2895 = vld [vmem:[%s2871 + $0xb8] sm:$0xff]
  %v2896 = vld [vmem:[%s2871 + $0xc0] sm:$0xff]
  %v2897 = vld [vmem:[%s2871 + $0xc8] sm:$0xff]
  %v2898 = vld [vmem:[%s2871 + $0xd0] sm:$0xff]
  %v2899 = vld [vmem:[%s2871 + $0xd8] sm:$0xff]
  %v2900 = vld [vmem:[%s2871 + $0xe0] sm:$0xff]
  %v2901 = vld [vmem:[%s2871 + $0xe8] sm:$0xff]
  %v2902 = vld [vmem:[%s2871 + $0xf0] sm:$0xff]
  %v2903 = vld [vmem:[%s2871 + $0xf8] sm:$0xff]
  %2904 = vmatpush.msra.mxu0 %v2902
  %2905 = vmatpush.msra.mxu0 %v2900
  %2906 = vmatpush.msra.mxu0 %v2898
  %2907 = vmatpush.msra.mxu0 %v2896
  %2908 = vmatpush.msra.mxu0 %v2894
  %2909 = vmatpush.msra.mxu0 %v2892
  %2910 = vmatpush.msra.mxu0 %v2890
  %2911 = vmatpush.msra.mxu0 %v2888
  %2912 = vmatpush.msra.mxu0 %v2886
  %2913 = vmatpush.msra.mxu0 %v2884
  %2914 = vmatpush.msra.mxu0 %v2882
  %2915 = vmatpush.msra.mxu0 %v2880
  %2916 = vmatpush.msra.mxu0 %v2878
  %2917 = vmatpush.msra.mxu0 %v2876
  %2918 = vmatpush.msra.mxu0 %v2874
  %2919 = vmatpush.msra.mxu0 %v2872
  %2920 = vmatmul.f32.gmra.mxu0 %v2841
  %v2921 = vpop.f32.mrf.mxu0
  %v2922 = vadd.f32 0.0, %v2921
  %2923 = vmatmul.f32.gmra.mxu0 %v2844
  %v2924 = vpop.f32.mrf.mxu0
  %v2925 = vadd.f32 0.0, %v2924
  %2926 = vmatmul.f32.gmra.mxu0 %v2847
  %v2927 = vpop.f32.mrf.mxu0
  %v2928 = vadd.f32 0.0, %v2927
  %2929 = vmatmul.f32.gmra.mxu0 %v2850
  %v2930 = vpop.f32.mrf.mxu0
  %v2931 = vadd.f32 0.0, %v2930
  %2932 = vmatmul.f32.gmra.mxu0 %v2853
  %v2933 = vpop.f32.mrf.mxu0
  %v2934 = vadd.f32 0.0, %v2933
  %2935 = vmatmul.f32.gmra.mxu0 %v2856
  %v2936 = vpop.f32.mrf.mxu0
  %v2937 = vadd.f32 0.0, %v2936
  %2938 = vmatmul.f32.gmra.mxu0 %v2859
  %v2939 = vpop.f32.mrf.mxu0
  %v2940 = vadd.f32 0.0, %v2939
  %2941 = vmatmul.f32.gmra.mxu0 %v2862
  %v2942 = vpop.f32.mrf.mxu0
  %v2943 = vadd.f32 0.0, %v2942
  %2944 = vdwg.mxu0
  %2945 = vmatpush.msra.mxu0 %v2903
  %2946 = vmatpush.msra.mxu0 %v2901
  %2947 = vmatpush.msra.mxu0 %v2899
  %2948 = vmatpush.msra.mxu0 %v2897
  %2949 = vmatpush.msra.mxu0 %v2895
  %2950 = vmatpush.msra.mxu0 %v2893
  %2951 = vmatpush.msra.mxu0 %v2891
  %2952 = vmatpush.msra.mxu0 %v2889
  %2953 = vmatpush.msra.mxu0 %v2887
  %2954 = vmatpush.msra.mxu0 %v2885
  %2955 = vmatpush.msra.mxu0 %v2883
  %2956 = vmatpush.msra.mxu0 %v2881
  %2957 = vmatpush.msra.mxu0 %v2879
  %2958 = vmatpush.msra.mxu0 %v2877
  %2959 = vmatpush.msra.mxu0 %v2875
  %2960 = vmatpush.msra.mxu0 %v2873
  %2961 = vmatmul.f32.gmra.mxu0 %v2841
  %v2962 = vpop.f32.mrf.mxu0
  %v2963 = vadd.f32 0.0, %v2962
  %2964 = vmatmul.f32.gmra.mxu0 %v2844
  %v2965 = vpop.f32.mrf.mxu0
  %v2966 = vadd.f32 0.0, %v2965
  %2967 = vmatmul.f32.gmra.mxu0 %v2847
  %v2968 = vpop.f32.mrf.mxu0
  %v2969 = vadd.f32 0.0, %v2968
  %2970 = vmatmul.f32.gmra.mxu0 %v2850
  %v2971 = vpop.f32.mrf.mxu0
  %v2972 = vadd.f32 0.0, %v2971
  %2973 = vmatmul.f32.gmra.mxu0 %v2853
  %v2974 = vpop.f32.mrf.mxu0
  %v2975 = vadd.f32 0.0, %v2974
  %2976 = vmatmul.f32.gmra.mxu0 %v2856
  %v2977 = vpop.f32.mrf.mxu0
  %v2978 = vadd.f32 0.0, %v2977
  %2979 = vmatmul.f32.gmra.mxu0 %v2859
  %v2980 = vpop.f32.mrf.mxu0
  %v2981 = vadd.f32 0.0, %v2980
  %2982 = vmatmul.f32.gmra.mxu0 %v2862
  %v2983 = vpop.f32.mrf.mxu0
  %v2984 = vadd.f32 0.0, %v2983
  %2985 = vdwg.mxu0
  %v2986 = vadd.f32 %v2823, %v2922
  %v2987 = vadd.f32 %v2824, %v2963
  %v2988 = vadd.f32 %v2825, %v2925
  %v2989 = vadd.f32 %v2826, %v2966
  %v2990 = vadd.f32 %v2827, %v2928
  %v2991 = vadd.f32 %v2828, %v2969
  %v2992 = vadd.f32 %v2829, %v2931
  %v2993 = vadd.f32 %v2830, %v2972
  %v2994 = vadd.f32 %v2831, %v2934
  %v2995 = vadd.f32 %v2832, %v2975
  %v2996 = vadd.f32 %v2833, %v2937
  %v2997 = vadd.f32 %v2834, %v2978
  %v2998 = vadd.f32 %v2835, %v2940
  %v2999 = vadd.f32 %v2836, %v2981
  %v3000 = vadd.f32 %v2837, %v2943
  %v3001 = vadd.f32 %v2838, %v2984
  %v3002 = vld [vmem:[%s5] sm:$0x3]
  %v3004 = vperm.slane %v3002, 0
  %v3005 = vperm.slane %v3002, 1
  %v3008 = vadd.f32 %v2986, %v3004
  %v3009 = vadd.f32 %v2987, %v3005
  %v3010 = vadd.f32 %v2988, %v3004
  %v3011 = vadd.f32 %v2989, %v3005
  %v3012 = vadd.f32 %v2990, %v3004
  %v3013 = vadd.f32 %v2991, %v3005
  %v3014 = vadd.f32 %v2992, %v3004
  %v3015 = vadd.f32 %v2993, %v3005
  %v3016 = vadd.f32 %v2994, %v3004
  %v3017 = vadd.f32 %v2995, %v3005
  %v3018 = vadd.f32 %v2996, %v3004
  %v3019 = vadd.f32 %v2997, %v3005
  %v3020 = vadd.f32 %v2998, %v3004
  %v3021 = vadd.f32 %v2999, %v3005
  %v3022 = vadd.f32 %v3000, %v3004
  %v3023 = vadd.f32 %v3001, %v3005
  %v3024 = vmax.f32 %v3008, 0.0
  %v3025 = vmax.f32 %v3009, 0.0
  %v3026 = vmax.f32 %v3010, 0.0
  %v3027 = vmax.f32 %v3011, 0.0
  %v3028 = vmax.f32 %v3012, 0.0
  %v3029 = vmax.f32 %v3013, 0.0
  %v3030 = vmax.f32 %v3014, 0.0
  %v3031 = vmax.f32 %v3015, 0.0
  %v3032 = vmax.f32 %v3016, 0.0
  %v3033 = vmax.f32 %v3017, 0.0
  %v3034 = vmax.f32 %v3018, 0.0
  %v3035 = vmax.f32 %v3019, 0.0
  %v3036 = vmax.f32 %v3020, 0.0
  %v3037 = vmax.f32 %v3021, 0.0
  %v3038 = vmax.f32 %v3022, 0.0
  %v3039 = vmax.f32 %v3023, 0.0
  %v3040 = vmax.f32 %v3024, %v3025
  %v3041 = vmax.f32 %v3026, %v3027
  %v3042 = vmax.f32 %v3028, %v3029
  %v3043 = vmax.f32 %v3030, %v3031
  %v3044 = vmax.f32 %v3032, %v3033
  %v3045 = vmax.f32 %v3034, %v3035
  %v3046 = vmax.f32 %v3036, %v3037
  %v3047 = vmax.f32 %v3038, %v3039
  %v3056 = vrot.slane %v3040, 1
  %v3057 = vrot.slane %v3041, 1
  %v3058 = vrot.slane %v3042, 1
  %v3059 = vrot.slane %v3043, 1
  %v3060 = vrot.slane %v3044, 1
  %v3061 = vrot.slane %v3045, 1
  %v3062 = vrot.slane %v3046, 1
  %v3063 = vrot.slane %v3047, 1
  %v3072 = vmax.f32 %v3040, %v3056
  %v3073 = vmax.f32 %v3041, %v3057
  %v3074 = vmax.f32 %v3042, %v3058
  %v3075 = vmax.f32 %v3043, %v3059
  %v3076 = vmax.f32 %v3044, %v3060
  %v3077 = vmax.f32 %v3045, %v3061
  %v3078 = vmax.f32 %v3046, %v3062
  %v3079 = vmax.f32 %v3047, %v3063
  %v3088 = vrot.slane %v3073, 7
  %vm3089 = vcmask 1041409
  %v3090 = vsel %vm3089, %v3088, %v3072
  %v3091 = vrot.slane %v3074, 6
  %vm3092 = vcmask 1042434
  %v3093 = vsel %vm3092, %v3091, %v3090
  %v3094 = vrot.slane %v3075, 5
  %vm3095 = vcmask 1043459
  %v3096 = vsel %vm3095, %v3094, %v3093
  %v3097 = vrot.slane %v3076, 4
  %vm3098 = vcmask 1044484
  %v3099 = vsel %vm3098, %v3097, %v3096
  %v3100 = vrot.slane %v3077, 3
  %vm3101 = vcmask 1045509
  %v3102 = vsel %vm3101, %v3100, %v3099
  %v3103 = vrot.slane %v3078, 2
  %vm3104 = vcmask 1046534
  %v3105 = vsel %vm3104, %v3103, %v3102
  %v3106 = vrot.slane %v3079, 1
  %vm3107 = vcmask 1047559
  %v3108 = vsel %vm3107, %v3106, %v3105
  %v3110 = vrot.slane %v3072, 2
  %v3111 = vrot.slane %v3073, 1
  %v3112 = vsel %vm3089, %v3111, %v3110
  %v3113 = vsel %vm3092, %v3074, %v3112
  %v3114 = vrot.slane %v3075, 7
  %v3115 = vsel %vm3095, %v3114, %v3113
  %v3116 = vrot.slane %v3076, 6
  %v3117 = vsel %vm3098, %v3116, %v3115
  %v3118 = vrot.slane %v3077, 5
  %v3119 = vsel %vm3101, %v3118, %v3117
  %v3120 = vrot.slane %v3078, 4
  %v3121 = vsel %vm3104, %v3120, %v3119
  %v3122 = vrot.slane %v3079, 3
  %v3123 = vsel %vm3107, %v3122, %v3121
  %v3125 = vrot.slane %v3072, 4
  %v3126 = vrot.slane %v3073, 3
  %v3127 = vsel %vm3089, %v3126, %v3125
  %v3128 = vrot.slane %v3074, 2
  %v3129 = vsel %vm3092, %v3128, %v3127
  %v3130 = vrot.slane %v3075, 1
  %v3131 = vsel %vm3095, %v3130, %v3129
  %v3132 = vsel %vm3098, %v3076, %v3131
  %v3133 = vrot.slane %v3077, 7
  %v3134 = vsel %vm3101, %v3133, %v3132
  %v3135 = vrot.slane %v3078, 6
  %v3136 = vsel %vm3104, %v3135, %v3134
  %v3137 = vrot.slane %v3079, 5
  %v3138 = vsel %vm3107, %v3137, %v3136
  %v3140 = vrot.slane %v3072, 6
  %v3141 = vrot.slane %v3073, 5
  %v3142 = vsel %vm3089, %v3141, %v3140
  %v3143 = vrot.slane %v3074, 4
  %v3144 = vsel %vm3092, %v3143, %v3142
  %v3145 = vrot.slane %v3075, 3
  %v3146 = vsel %vm3095, %v3145, %v3144
  %v3147 = vrot.slane %v3076, 2
  %v3148 = vsel %vm3098, %v3147, %v3146
  %v3149 = vrot.slane %v3077, 1
  %v3150 = vsel %vm3101, %v3149, %v3148
  %v3151 = vsel %vm3104, %v3078, %v3150
  %v3152 = vrot.slane %v3079, 7
  %v3153 = vsel %vm3107, %v3152, %v3151
  %v3155 = vld [vmem:[%s6] sm:$0xff]
  %v3156 = vld [vmem:[%s6 + $0x8] sm:$0xff]
  %v3157 = vld [vmem:[%s6 + $0x10] sm:$0xff]
  %v3158 = vld [vmem:[%s6 + $0x18] sm:$0xff]
  %v3159 = vld [vmem:[%s6 + $0x20] sm:$0xff]
  %v3160 = vld [vmem:[%s6 + $0x28] sm:$0xff]
  %v3161 = vld [vmem:[%s6 + $0x30] sm:$0xff]
  %v3162 = vld [vmem:[%s6 + $0x38] sm:$0xff]
  %v3163 = vld [vmem:[%s6 + $0x40] sm:$0xff]
  %v3164 = vld [vmem:[%s6 + $0x48] sm:$0xff]
  %v3165 = vld [vmem:[%s6 + $0x50] sm:$0xff]
  %v3166 = vld [vmem:[%s6 + $0x58] sm:$0xff]
  %v3167 = vld [vmem:[%s6 + $0x60] sm:$0xff]
  %v3168 = vld [vmem:[%s6 + $0x68] sm:$0xff]
  %v3169 = vld [vmem:[%s6 + $0x70] sm:$0xff]
  %v3170 = vld [vmem:[%s6 + $0x78] sm:$0xff]
  %v3171 = vld [vmem:[%s6 + $0x80] sm:$0xff]
  %v3172 = vld [vmem:[%s6 + $0x88] sm:$0xff]
  %v3173 = vld [vmem:[%s6 + $0x90] sm:$0xff]
  %v3174 = vld [vmem:[%s6 + $0x98] sm:$0xff]
  %v3175 = vld [vmem:[%s6 + $0xa0] sm:$0xff]
  %v3176 = vld [vmem:[%s6 + $0xa8] sm:$0xff]
  %v3177 = vld [vmem:[%s6 + $0xb0] sm:$0xff]
  %v3178 = vld [vmem:[%s6 + $0xb8] sm:$0xff]
  %v3179 = vld [vmem:[%s6 + $0xc0] sm:$0xff]
  %v3180 = vld [vmem:[%s6 + $0xc8] sm:$0xff]
  %v3181 = vld [vmem:[%s6 + $0xd0] sm:$0xff]
  %v3182 = vld [vmem:[%s6 + $0xd8] sm:$0xff]
  %v3183 = vld [vmem:[%s6 + $0xe0] sm:$0xff]
  %v3184 = vld [vmem:[%s6 + $0xe8] sm:$0xff]
  %v3185 = vld [vmem:[%s6 + $0xf0] sm:$0xff]
  %v3186 = vld [vmem:[%s6 + $0xf8] sm:$0xff]
  %v3187 = vld [vmem:[%s6 + $0x100] sm:$0xff]
  %v3188 = vld [vmem:[%s6 + $0x108] sm:$0xff]
  %v3189 = vld [vmem:[%s6 + $0x110] sm:$0xff]
  %v3190 = vld [vmem:[%s6 + $0x118] sm:$0xff]
  %v3191 = vld [vmem:[%s6 + $0x120] sm:$0xff]
  %v3192 = vld [vmem:[%s6 + $0x128] sm:$0xff]
  %v3193 = vld [vmem:[%s6 + $0x130] sm:$0xff]
  %v3194 = vld [vmem:[%s6 + $0x138] sm:$0xff]
  %v3195 = vld [vmem:[%s6 + $0x140] sm:$0xff]
  %v3196 = vld [vmem:[%s6 + $0x148] sm:$0xff]
  %v3197 = vld [vmem:[%s6 + $0x150] sm:$0xff]
  %v3198 = vld [vmem:[%s6 + $0x158] sm:$0xff]
  %v3199 = vld [vmem:[%s6 + $0x160] sm:$0xff]
  %v3200 = vld [vmem:[%s6 + $0x168] sm:$0xff]
  %v3201 = vld [vmem:[%s6 + $0x170] sm:$0xff]
  %v3202 = vld [vmem:[%s6 + $0x178] sm:$0xff]
  %v3203 = vld [vmem:[%s6 + $0x180] sm:$0xff]
  %v3204 = vld [vmem:[%s6 + $0x188] sm:$0xff]
  %v3205 = vld [vmem:[%s6 + $0x190] sm:$0xff]
  %v3206 = vld [vmem:[%s6 + $0x198] sm:$0xff]
  %v3207 = vld [vmem:[%s6 + $0x1a0] sm:$0xff]
  %v3208 = vld [vmem:[%s6 + $0x1a8] sm:$0xff]
  %v3209 = vld [vmem:[%s6 + $0x1b0] sm:$0xff]
  %v3210 = vld [vmem:[%s6 + $0x1b8] sm:$0xff]
  %v3211 = vld [vmem:[%s6 + $0x1c0] sm:$0xff]
  %v3212 = vld [vmem:[%s6 + $0x1c8] sm:$0xff]
  %v3213 = vld [vmem:[%s6 + $0x1d0] sm:$0xff]
  %v3214 = vld [vmem:[%s6 + $0x1d8] sm:$0xff]
  %v3215 = vld [vmem:[%s6 + $0x1e0] sm:$0xff]
  %v3216 = vld [vmem:[%s6 + $0x1e8] sm:$0xff]
  %v3217 = vld [vmem:[%s6 + $0x1f0] sm:$0xff]
  %v3218 = vld [vmem:[%s6 + $0x1f8] sm:$0xff]
  %v3219 = vld [vmem:[%s9] sm:$0x1]
  %v3220 = vperm.slane %v3219, 0
  %3221 = vmatpush.msra.mxu0 %v3170
  %3222 = vmatpush.msra.mxu0 %v3169
  %3223 = vmatpush.msra.mxu0 %v3168
  %3224 = vmatpush.msra.mxu0 %v3167
  %3225 = vmatpush.msra.mxu0 %v3166
  %3226 = vmatpush.msra.mxu0 %v3165
  %3227 = vmatpush.msra.mxu0 %v3164
  %3228 = vmatpush.msra.mxu0 %v3163
  %3229 = vmatpush.msra.mxu0 %v3162
  %3230 = vmatpush.msra.mxu0 %v3161
  %3231 = vmatpush.msra.mxu0 %v3160
  %3232 = vmatpush.msra.mxu0 %v3159
  %3233 = vmatpush.msra.mxu0 %v3158
  %3234 = vmatpush.msra.mxu0 %v3157
  %3235 = vmatpush.msra.mxu0 %v3156
  %3236 = vmatpush.msra.mxu0 %v3155
  %3237 = vmatmul.f32.gmra.mxu0 %v3108
  %v3238 = vpop.f32.mrf.mxu0
  %v3239 = vadd.f32 %v3220, %v3238
  %3240 = vdwg.mxu0
  %3241 = vmatpush.msra.mxu0 %v3186
  %3242 = vmatpush.msra.mxu0 %v3185
  %3243 = vmatpush.msra.mxu0 %v3184
  %3244 = vmatpush.msra.mxu0 %v3183
  %3245 = vmatpush.msra.mxu0 %v3182
  %3246 = vmatpush.msra.mxu0 %v3181
  %3247 = vmatpush.msra.mxu0 %v3180
  %3248 = vmatpush.msra.mxu0 %v3179
  %3249 = vmatpush.msra.mxu0 %v3178
  %3250 = vmatpush.msra.mxu0 %v3177
  %3251 = vmatpush.msra.mxu0 %v3176
  %3252 = vmatpush.msra.mxu0 %v3175
  %3253 = vmatpush.msra.mxu0 %v3174
  %3254 = vmatpush.msra.mxu0 %v3173
  %3255 = vmatpush.msra.mxu0 %v3172
  %3256 = vmatpush.msra.mxu0 %v3171
  %3257 = vmatmul.f32.gmra.mxu0 %v3123
  %v3258 = vpop.f32.mrf.mxu0
  %v3259 = vadd.f32 %v3239, %v3258
  %3260 = vdwg.mxu0
  %3261 = vmatpush.msra.mxu0 %v3202
  %3262 = vmatpush.msra.mxu0 %v3201
  %3263 = vmatpush.msra.mxu0 %v3200
  %3264 = vmatpush.msra.mxu0 %v3199
  %3265 = vmatpush.msra.mxu0 %v3198
  %3266 = vmatpush.msra.mxu0 %v3197
  %3267 = vmatpush.msra.mxu0 %v3196
  %3268 = vmatpush.msra.mxu0 %v3195
  %3269 = vmatpush.msra.mxu0 %v3194
  %3270 = vmatpush.msra.mxu0 %v3193
  %3271 = vmatpush.msra.mxu0 %v3192
  %3272 = vmatpush.msra.mxu0 %v3191
  %3273 = vmatpush.msra.mxu0 %v3190
  %3274 = vmatpush.msra.mxu0 %v3189
  %3275 = vmatpush.msra.mxu0 %v3188
  %3276 = vmatpush.msra.mxu0 %v3187
  %3277 = vmatmul.f32.gmra.mxu0 %v3138
  %v3278 = vpop.f32.mrf.mxu0
  %v3279 = vadd.f32 %v3259, %v3278
  %3280 = vdwg.mxu0
  %3281 = vmatpush.msra.mxu0 %v3218
  %3282 = vmatpush.msra.mxu0 %v3217
  %3283 = vmatpush.msra.mxu0 %v3216
  %3284 = vmatpush.msra.mxu0 %v3215
  %3285 = vmatpush.msra.mxu0 %v3214
  %3286 = vmatpush.msra.mxu0 %v3213
  %3287 = vmatpush.msra.mxu0 %v3212
  %3288 = vmatpush.msra.mxu0 %v3211
  %3289 = vmatpush.msra.mxu0 %v3210
  %3290 = vmatpush.msra.mxu0 %v3209
  %3291 = vmatpush.msra.mxu0 %v3208
  %3292 = vmatpush.msra.mxu0 %v3207
  %3293 = vmatpush.msra.mxu0 %v3206
  %3294 = vmatpush.msra.mxu0 %v3205
  %3295 = vmatpush.msra.mxu0 %v3204
  %3296 = vmatpush.msra.mxu0 %v3203
  %3297 = vmatmul.f32.gmra.mxu0 %v3153
  %v3298 = vpop.f32.mrf.mxu0
  %v3299 = vadd.f32 %v3279, %v3298
  %3300 = vdwg.mxu0
  %v3301 = vtanh.pop %v3299
  %v3302 = vmul.f32 %v3301, 1.6
  %v3303 = vld [vmem:[%s7] sm:$0xff]
  %v3304 = vld [vmem:[%s7 + $0x8] sm:$0xff]
  %v3305 = vld [vmem:[%s7 + $0x10] sm:$0xff]
  %v3306 = vld [vmem:[%s7 + $0x18] sm:$0xff]
  %v3307 = vld [vmem:[%s7 + $0x20] sm:$0xff]
  %v3308 = vld [vmem:[%s7 + $0x28] sm:$0xff]
  %v3309 = vld [vmem:[%s7 + $0x30] sm:$0xff]
  %v3310 = vld [vmem:[%s7 + $0x38] sm:$0xff]
  %v3311 = vld [vmem:[%s7 + $0x40] sm:$0xff]
  %v3312 = vld [vmem:[%s7 + $0x48] sm:$0xff]
  %v3313 = vld [vmem:[%s7 + $0x50] sm:$0xff]
  %v3314 = vld [vmem:[%s7 + $0x58] sm:$0xff]
  %v3315 = vld [vmem:[%s7 + $0x60] sm:$0xff]
  %v3316 = vld [vmem:[%s7 + $0x68] sm:$0xff]
  %v3317 = vld [vmem:[%s7 + $0x70] sm:$0xff]
  %v3318 = vld [vmem:[%s7 + $0x78] sm:$0xff]
  %v3319 = vld [vmem:[%s9 + $0x1] sm:$0x1]
  %v3320 = vperm.slane %v3319, 0
  %3321 = vmatpush.msra.mxu0 %v3318
  %3322 = vmatpush.msra.mxu0 %v3317
  %3323 = vmatpush.msra.mxu0 %v3316
  %3324 = vmatpush.msra.mxu0 %v3315
  %3325 = vmatpush.msra.mxu0 %v3314
  %3326 = vmatpush.msra.mxu0 %v3313
  %3327 = vmatpush.msra.mxu0 %v3312
  %3328 = vmatpush.msra.mxu0 %v3311
  %3329 = vmatpush.msra.mxu0 %v3310
  %3330 = vmatpush.msra.mxu0 %v3309
  %3331 = vmatpush.msra.mxu0 %v3308
  %3332 = vmatpush.msra.mxu0 %v3307
  %3333 = vmatpush.msra.mxu0 %v3306
  %3334 = vmatpush.msra.mxu0 %v3305
  %3335 = vmatpush.msra.mxu0 %v3304
  %3336 = vmatpush.msra.mxu0 %v3303
  %3337 = vmatmul.f32.gmra.mxu0 %v3302
  %v3338 = vpop.f32.mrf.mxu0
  %v3339 = vadd.f32 %v3320, %v3338
  %3340 = vdwg.mxu0
  %v3341 = vtanh.pop %v3339
  %v3342 = vmul.f32 %v3341, 1.6
  %s3343 = scalar_lea.vmem %s7, 128
  %v3344 = vld [vmem:[%s3343] sm:$0xff]
  %v3345 = vld [vmem:[%s3343 + $0x8] sm:$0xff]
  %v3346 = vld [vmem:[%s3343 + $0x10] sm:$0xff]
  %v3347 = vld [vmem:[%s3343 + $0x18] sm:$0xff]
  %v3348 = vld [vmem:[%s3343 + $0x20] sm:$0xff]
  %v3349 = vld [vmem:[%s3343 + $0x28] sm:$0xff]
  %v3350 = vld [vmem:[%s3343 + $0x30] sm:$0xff]
  %v3351 = vld [vmem:[%s3343 + $0x38] sm:$0xff]
  %v3352 = vld [vmem:[%s3343 + $0x40] sm:$0xff]
  %v3353 = vld [vmem:[%s3343 + $0x48] sm:$0xff]
  %v3354 = vld [vmem:[%s3343 + $0x50] sm:$0xff]
  %v3355 = vld [vmem:[%s3343 + $0x58] sm:$0xff]
  %v3356 = vld [vmem:[%s3343 + $0x60] sm:$0xff]
  %v3357 = vld [vmem:[%s3343 + $0x68] sm:$0xff]
  %v3358 = vld [vmem:[%s3343 + $0x70] sm:$0xff]
  %v3359 = vld [vmem:[%s3343 + $0x78] sm:$0xff]
  %v3360 = vld [vmem:[%s9 + $0x2] sm:$0x1]
  %v3361 = vperm.slane %v3360, 0
  %3362 = vmatpush.msra.mxu0 %v3359
  %3363 = vmatpush.msra.mxu0 %v3358
  %3364 = vmatpush.msra.mxu0 %v3357
  %3365 = vmatpush.msra.mxu0 %v3356
  %3366 = vmatpush.msra.mxu0 %v3355
  %3367 = vmatpush.msra.mxu0 %v3354
  %3368 = vmatpush.msra.mxu0 %v3353
  %3369 = vmatpush.msra.mxu0 %v3352
  %3370 = vmatpush.msra.mxu0 %v3351
  %3371 = vmatpush.msra.mxu0 %v3350
  %3372 = vmatpush.msra.mxu0 %v3349
  %3373 = vmatpush.msra.mxu0 %v3348
  %3374 = vmatpush.msra.mxu0 %v3347
  %3375 = vmatpush.msra.mxu0 %v3346
  %3376 = vmatpush.msra.mxu0 %v3345
  %3377 = vmatpush.msra.mxu0 %v3344
  %3378 = vmatmul.f32.gmra.mxu0 %v3342
  %v3379 = vpop.f32.mrf.mxu0
  %v3380 = vadd.f32 %v3361, %v3379
  %3381 = vdwg.mxu0
  %v3382 = vtanh.pop %v3380
  %v3383 = vmul.f32 %v3382, 1.6
  %s3384 = scalar_lea.vmem %s7, 256
  %v3385 = vld [vmem:[%s3384] sm:$0xff]
  %v3386 = vld [vmem:[%s3384 + $0x8] sm:$0xff]
  %v3387 = vld [vmem:[%s3384 + $0x10] sm:$0xff]
  %v3388 = vld [vmem:[%s3384 + $0x18] sm:$0xff]
  %v3389 = vld [vmem:[%s3384 + $0x20] sm:$0xff]
  %v3390 = vld [vmem:[%s3384 + $0x28] sm:$0xff]
  %v3391 = vld [vmem:[%s3384 + $0x30] sm:$0xff]
  %v3392 = vld [vmem:[%s3384 + $0x38] sm:$0xff]
  %v3393 = vld [vmem:[%s3384 + $0x40] sm:$0xff]
  %v3394 = vld [vmem:[%s3384 + $0x48] sm:$0xff]
  %v3395 = vld [vmem:[%s3384 + $0x50] sm:$0xff]
  %v3396 = vld [vmem:[%s3384 + $0x58] sm:$0xff]
  %v3397 = vld [vmem:[%s3384 + $0x60] sm:$0xff]
  %v3398 = vld [vmem:[%s3384 + $0x68] sm:$0xff]
  %v3399 = vld [vmem:[%s3384 + $0x70] sm:$0xff]
  %v3400 = vld [vmem:[%s3384 + $0x78] sm:$0xff]
  %v3401 = vld [vmem:[%s9 + $0x3] sm:$0x1]
  %v3402 = vperm.slane %v3401, 0
  %3403 = vmatpush.msra.mxu0 %v3400
  %3404 = vmatpush.msra.mxu0 %v3399
  %3405 = vmatpush.msra.mxu0 %v3398
  %3406 = vmatpush.msra.mxu0 %v3397
  %3407 = vmatpush.msra.mxu0 %v3396
  %3408 = vmatpush.msra.mxu0 %v3395
  %3409 = vmatpush.msra.mxu0 %v3394
  %3410 = vmatpush.msra.mxu0 %v3393
  %3411 = vmatpush.msra.mxu0 %v3392
  %3412 = vmatpush.msra.mxu0 %v3391
  %3413 = vmatpush.msra.mxu0 %v3390
  %3414 = vmatpush.msra.mxu0 %v3389
  %3415 = vmatpush.msra.mxu0 %v3388
  %3416 = vmatpush.msra.mxu0 %v3387
  %3417 = vmatpush.msra.mxu0 %v3386
  %3418 = vmatpush.msra.mxu0 %v3385
  %3419 = vmatmul.f32.gmra.mxu0 %v3383
  %v3420 = vpop.f32.mrf.mxu0
  %v3421 = vadd.f32 %v3402, %v3420
  %3422 = vdwg.mxu0
  %v3423 = vtanh.pop %v3421
  %v3424 = vmul.f32 %v3423, 1.6
  %s3425 = scalar_lea.vmem %s7, 384
  %v3426 = vld [vmem:[%s3425] sm:$0xff]
  %v3427 = vld [vmem:[%s3425 + $0x8] sm:$0xff]
  %v3428 = vld [vmem:[%s3425 + $0x10] sm:$0xff]
  %v3429 = vld [vmem:[%s3425 + $0x18] sm:$0xff]
  %v3430 = vld [vmem:[%s3425 + $0x20] sm:$0xff]
  %v3431 = vld [vmem:[%s3425 + $0x28] sm:$0xff]
  %v3432 = vld [vmem:[%s3425 + $0x30] sm:$0xff]
  %v3433 = vld [vmem:[%s3425 + $0x38] sm:$0xff]
  %v3434 = vld [vmem:[%s3425 + $0x40] sm:$0xff]
  %v3435 = vld [vmem:[%s3425 + $0x48] sm:$0xff]
  %v3436 = vld [vmem:[%s3425 + $0x50] sm:$0xff]
  %v3437 = vld [vmem:[%s3425 + $0x58] sm:$0xff]
  %v3438 = vld [vmem:[%s3425 + $0x60] sm:$0xff]
  %v3439 = vld [vmem:[%s3425 + $0x68] sm:$0xff]
  %v3440 = vld [vmem:[%s3425 + $0x70] sm:$0xff]
  %v3441 = vld [vmem:[%s3425 + $0x78] sm:$0xff]
  %v3442 = vld [vmem:[%s9 + $0x4] sm:$0x1]
  %v3443 = vperm.slane %v3442, 0
  %3444 = vmatpush.msra.mxu0 %v3441
  %3445 = vmatpush.msra.mxu0 %v3440
  %3446 = vmatpush.msra.mxu0 %v3439
  %3447 = vmatpush.msra.mxu0 %v3438
  %3448 = vmatpush.msra.mxu0 %v3437
  %3449 = vmatpush.msra.mxu0 %v3436
  %3450 = vmatpush.msra.mxu0 %v3435
  %3451 = vmatpush.msra.mxu0 %v3434
  %3452 = vmatpush.msra.mxu0 %v3433
  %3453 = vmatpush.msra.mxu0 %v3432
  %3454 = vmatpush.msra.mxu0 %v3431
  %3455 = vmatpush.msra.mxu0 %v3430
  %3456 = vmatpush.msra.mxu0 %v3429
  %3457 = vmatpush.msra.mxu0 %v3428
  %3458 = vmatpush.msra.mxu0 %v3427
  %3459 = vmatpush.msra.mxu0 %v3426
  %3460 = vmatmul.f32.gmra.mxu0 %v3424
  %v3461 = vpop.f32.mrf.mxu0
  %v3462 = vadd.f32 %v3443, %v3461
  %3463 = vdwg.mxu0
  %v3464 = vtanh.pop %v3462
  %v3465 = vmul.f32 %v3464, 1.6
  %s3466 = scalar_lea.vmem %s7, 512
  %v3467 = vld [vmem:[%s3466] sm:$0xff]
  %v3468 = vld [vmem:[%s3466 + $0x8] sm:$0xff]
  %v3469 = vld [vmem:[%s3466 + $0x10] sm:$0xff]
  %v3470 = vld [vmem:[%s3466 + $0x18] sm:$0xff]
  %v3471 = vld [vmem:[%s3466 + $0x20] sm:$0xff]
  %v3472 = vld [vmem:[%s3466 + $0x28] sm:$0xff]
  %v3473 = vld [vmem:[%s3466 + $0x30] sm:$0xff]
  %v3474 = vld [vmem:[%s3466 + $0x38] sm:$0xff]
  %v3475 = vld [vmem:[%s3466 + $0x40] sm:$0xff]
  %v3476 = vld [vmem:[%s3466 + $0x48] sm:$0xff]
  %v3477 = vld [vmem:[%s3466 + $0x50] sm:$0xff]
  %v3478 = vld [vmem:[%s3466 + $0x58] sm:$0xff]
  %v3479 = vld [vmem:[%s3466 + $0x60] sm:$0xff]
  %v3480 = vld [vmem:[%s3466 + $0x68] sm:$0xff]
  %v3481 = vld [vmem:[%s3466 + $0x70] sm:$0xff]
  %v3482 = vld [vmem:[%s3466 + $0x78] sm:$0xff]
  %v3483 = vld [vmem:[%s9 + $0x5] sm:$0x1]
  %v3484 = vperm.slane %v3483, 0
  %3485 = vmatpush.msra.mxu0 %v3482
  %3486 = vmatpush.msra.mxu0 %v3481
  %3487 = vmatpush.msra.mxu0 %v3480
  %3488 = vmatpush.msra.mxu0 %v3479
  %3489 = vmatpush.msra.mxu0 %v3478
  %3490 = vmatpush.msra.mxu0 %v3477
  %3491 = vmatpush.msra.mxu0 %v3476
  %3492 = vmatpush.msra.mxu0 %v3475
  %3493 = vmatpush.msra.mxu0 %v3474
  %3494 = vmatpush.msra.mxu0 %v3473
  %3495 = vmatpush.msra.mxu0 %v3472
  %3496 = vmatpush.msra.mxu0 %v3471
  %3497 = vmatpush.msra.mxu0 %v3470
  %3498 = vmatpush.msra.mxu0 %v3469
  %3499 = vmatpush.msra.mxu0 %v3468
  %3500 = vmatpush.msra.mxu0 %v3467
  %3501 = vmatmul.f32.gmra.mxu0 %v3465
  %v3502 = vpop.f32.mrf.mxu0
  %v3503 = vadd.f32 %v3484, %v3502
  %3504 = vdwg.mxu0
  %v3505 = vtanh.pop %v3503
  %v3506 = vmul.f32 %v3505, 1.6
  %s3507 = scalar_lea.vmem %s7, 640
  %v3508 = vld [vmem:[%s3507] sm:$0xff]
  %v3509 = vld [vmem:[%s3507 + $0x8] sm:$0xff]
  %v3510 = vld [vmem:[%s3507 + $0x10] sm:$0xff]
  %v3511 = vld [vmem:[%s3507 + $0x18] sm:$0xff]
  %v3512 = vld [vmem:[%s3507 + $0x20] sm:$0xff]
  %v3513 = vld [vmem:[%s3507 + $0x28] sm:$0xff]
  %v3514 = vld [vmem:[%s3507 + $0x30] sm:$0xff]
  %v3515 = vld [vmem:[%s3507 + $0x38] sm:$0xff]
  %v3516 = vld [vmem:[%s3507 + $0x40] sm:$0xff]
  %v3517 = vld [vmem:[%s3507 + $0x48] sm:$0xff]
  %v3518 = vld [vmem:[%s3507 + $0x50] sm:$0xff]
  %v3519 = vld [vmem:[%s3507 + $0x58] sm:$0xff]
  %v3520 = vld [vmem:[%s3507 + $0x60] sm:$0xff]
  %v3521 = vld [vmem:[%s3507 + $0x68] sm:$0xff]
  %v3522 = vld [vmem:[%s3507 + $0x70] sm:$0xff]
  %v3523 = vld [vmem:[%s3507 + $0x78] sm:$0xff]
  %v3524 = vld [vmem:[%s9 + $0x6] sm:$0x1]
  %v3525 = vperm.slane %v3524, 0
  %3526 = vmatpush.msra.mxu0 %v3523
  %3527 = vmatpush.msra.mxu0 %v3522
  %3528 = vmatpush.msra.mxu0 %v3521
  %3529 = vmatpush.msra.mxu0 %v3520
  %3530 = vmatpush.msra.mxu0 %v3519
  %3531 = vmatpush.msra.mxu0 %v3518
  %3532 = vmatpush.msra.mxu0 %v3517
  %3533 = vmatpush.msra.mxu0 %v3516
  %3534 = vmatpush.msra.mxu0 %v3515
  %3535 = vmatpush.msra.mxu0 %v3514
  %3536 = vmatpush.msra.mxu0 %v3513
  %3537 = vmatpush.msra.mxu0 %v3512
  %3538 = vmatpush.msra.mxu0 %v3511
  %3539 = vmatpush.msra.mxu0 %v3510
  %3540 = vmatpush.msra.mxu0 %v3509
  %3541 = vmatpush.msra.mxu0 %v3508
  %3542 = vmatmul.f32.gmra.mxu0 %v3506
  %v3543 = vpop.f32.mrf.mxu0
  %v3544 = vadd.f32 %v3525, %v3543
  %3545 = vdwg.mxu0
  %v3546 = vtanh.pop %v3544
  %v3547 = vmul.f32 %v3546, 1.6
  %s3548 = scalar_lea.vmem %s7, 768
  %v3549 = vld [vmem:[%s3548] sm:$0xff]
  %v3550 = vld [vmem:[%s3548 + $0x8] sm:$0xff]
  %v3551 = vld [vmem:[%s3548 + $0x10] sm:$0xff]
  %v3552 = vld [vmem:[%s3548 + $0x18] sm:$0xff]
  %v3553 = vld [vmem:[%s3548 + $0x20] sm:$0xff]
  %v3554 = vld [vmem:[%s3548 + $0x28] sm:$0xff]
  %v3555 = vld [vmem:[%s3548 + $0x30] sm:$0xff]
  %v3556 = vld [vmem:[%s3548 + $0x38] sm:$0xff]
  %v3557 = vld [vmem:[%s3548 + $0x40] sm:$0xff]
  %v3558 = vld [vmem:[%s3548 + $0x48] sm:$0xff]
  %v3559 = vld [vmem:[%s3548 + $0x50] sm:$0xff]
  %v3560 = vld [vmem:[%s3548 + $0x58] sm:$0xff]
  %v3561 = vld [vmem:[%s3548 + $0x60] sm:$0xff]
  %v3562 = vld [vmem:[%s3548 + $0x68] sm:$0xff]
  %v3563 = vld [vmem:[%s3548 + $0x70] sm:$0xff]
  %v3564 = vld [vmem:[%s3548 + $0x78] sm:$0xff]
  %v3565 = vld [vmem:[%s9 + $0x7] sm:$0x1]
  %v3566 = vperm.slane %v3565, 0
  %3567 = vmatpush.msra.mxu0 %v3564
  %3568 = vmatpush.msra.mxu0 %v3563
  %3569 = vmatpush.msra.mxu0 %v3562
  %3570 = vmatpush.msra.mxu0 %v3561
  %3571 = vmatpush.msra.mxu0 %v3560
  %3572 = vmatpush.msra.mxu0 %v3559
  %3573 = vmatpush.msra.mxu0 %v3558
  %3574 = vmatpush.msra.mxu0 %v3557
  %3575 = vmatpush.msra.mxu0 %v3556
  %3576 = vmatpush.msra.mxu0 %v3555
  %3577 = vmatpush.msra.mxu0 %v3554
  %3578 = vmatpush.msra.mxu0 %v3553
  %3579 = vmatpush.msra.mxu0 %v3552
  %3580 = vmatpush.msra.mxu0 %v3551
  %3581 = vmatpush.msra.mxu0 %v3550
  %3582 = vmatpush.msra.mxu0 %v3549
  %3583 = vmatmul.f32.gmra.mxu0 %v3547
  %v3584 = vpop.f32.mrf.mxu0
  %v3585 = vadd.f32 %v3566, %v3584
  %3586 = vdwg.mxu0
  %v3587 = vtanh.pop %v3585
  %v3588 = vmul.f32 %v3587, 1.6
  %v3589 = vld [vmem:[%s8] sm:$0xff]
  %v3590 = vld [vmem:[%s8 + $0x8] sm:$0xff]
  %v3591 = vld [vmem:[%s8 + $0x10] sm:$0xff]
  %v3592 = vld [vmem:[%s8 + $0x18] sm:$0xff]
  %v3593 = vld [vmem:[%s8 + $0x20] sm:$0xff]
  %v3594 = vld [vmem:[%s8 + $0x28] sm:$0xff]
  %v3595 = vld [vmem:[%s8 + $0x30] sm:$0xff]
  %v3596 = vld [vmem:[%s8 + $0x38] sm:$0xff]
  %v3597 = vld [vmem:[%s8 + $0x40] sm:$0xff]
  %v3598 = vld [vmem:[%s8 + $0x48] sm:$0xff]
  %v3599 = vld [vmem:[%s8 + $0x50] sm:$0xff]
  %v3600 = vld [vmem:[%s8 + $0x58] sm:$0xff]
  %v3601 = vld [vmem:[%s8 + $0x60] sm:$0xff]
  %v3602 = vld [vmem:[%s8 + $0x68] sm:$0xff]
  %v3603 = vld [vmem:[%s8 + $0x70] sm:$0xff]
  %v3604 = vld [vmem:[%s8 + $0x78] sm:$0xff]
  %v3605 = vld [vmem:[%s9 + $0x8] sm:$0x1]
  %v3606 = vperm.slane %v3605, 0
  %3607 = vmatpush.msra.mxu0 %v3604
  %3608 = vmatpush.msra.mxu0 %v3603
  %3609 = vmatpush.msra.mxu0 %v3602
  %3610 = vmatpush.msra.mxu0 %v3601
  %3611 = vmatpush.msra.mxu0 %v3600
  %3612 = vmatpush.msra.mxu0 %v3599
  %3613 = vmatpush.msra.mxu0 %v3598
  %3614 = vmatpush.msra.mxu0 %v3597
  %3615 = vmatpush.msra.mxu0 %v3596
  %3616 = vmatpush.msra.mxu0 %v3595
  %3617 = vmatpush.msra.mxu0 %v3594
  %3618 = vmatpush.msra.mxu0 %v3593
  %3619 = vmatpush.msra.mxu0 %v3592
  %3620 = vmatpush.msra.mxu0 %v3591
  %3621 = vmatpush.msra.mxu0 %v3590
  %3622 = vmatpush.msra.mxu0 %v3589
  %3623 = vmatmul.f32.gmra.mxu0 %v3588
  %v3624 = vpop.f32.mrf.mxu0
  %v3625 = vadd.f32 %v3606, %v3624
  %3626 = vdwg.mxu0
  %v3627 = vlaneseq
  %v3628 = vand.u32 %v3627, 127
  %vm3629 = vcmp.lt.s32.totalorder %v3628, 10
  %v3630 = vsel %vm3629, %v3625, -1e+30
  %3631 = vmax.xlane.f32.xlu0 %v3630
  %v3632 = vpop.xlane.xlu0 %3631
  %v3633 = vsub.f32 %v3630, %v3632
  %v3634 = vmul.f32 %v3633, 1.442695
  %v3635 = vpow.pop %v3634
  %3636 = vadd.xlane.f32.xlu0 %v3635
  %v3637 = vpop.xlane.xlu0 %3636
  %v3638 = vlog2.pop %v3637
  %v3639 = vmul.f32 %v3638, 0.6931472
  %v3640 = vsub.f32 %v3633, %v3639
  %3641 = vst [vmem:[%s10] sm:$0xff] %v3640
  // Predicated region
  $region42: #{deep_sn_tanh_net_forward.1} parent=0 // pred_check
    _
  $region43: #{deep_sn_tanh_net_forward.1} parent=0 // pred_check_branch
    %3643 = sbr.rel (0) target = $region45
  $region44: #{deep_sn_tanh_net_forward.1} parent=0 // pred_region
    _
  $region45: #{deep_sn_tanh_net_forward.1} parent=0 // pred_fallthru
    _
  // Predicated region
  $region46: #{deep_sn_tanh_net_forward.1} parent=0 // pred_check
    _
  $region47: #{deep_sn_tanh_net_forward.1} parent=0 // pred_check_branch
    %3645 = sbr.rel (0) target = $region49
  $region48: #{deep_sn_tanh_net_forward.1} parent=0 // pred_region
    _
  $region49: #{deep_sn_tanh_net_forward.1} parent=0 // pred_fallthru
    _

</llo_original>
